<compile_context>
chip_gen: v7x
topology: tpu7x:2x2x1
jax: 0.10.0
libtpu: 0.0.40
codegen_flags: <defaults>
</compile_context>

<pallas_src>
import functools

import numpy as np
import jax
import jax.numpy as jnp
from jax.experimental import pallas as pl
from jax.experimental.pallas import tpu as pltpu


def _hybrid_pinn_kernel(modes, width,
                        x_ref, win_ref, bin_ref,
                        f_ref, wblk_ref, gc_ref, gs_ref,
                        w1_ref, b1_ref, w2_ref, b2_ref, w3_ref, b3_ref,
                        wout_ref, bout_ref, out_ref):
    """One grid step == one batch element's N rows (token-major layout)."""
    f32 = jnp.float32

    # fc_in : (N, D) @ (D, W) + (1, W)
    h = jnp.dot(x_ref[...], win_ref[...], preferred_element_type=f32) + bin_ref[...]

    # --- SpectralConv1d, expressed as dense real matmuls -------------------
    # Forward truncated real DFT for this batch: ONE (2M, N) @ (N, W) matmul.
    # Rows [0, M) = Re(X_m), rows [M, 2M) = Im(X_m).
    xf = jnp.dot(f_ref[...], h, preferred_element_type=f32)            # (2M, W)

    # Per-mode complex channel mixing: stack [xr | xi] against the 2x2 block
    # [[wr, wi], [-wi, wr]] so 4 matmuls/mode become 1 (1,2W)@(2W,2W) matmul.
    z = jnp.concatenate([xf[:modes, :], xf[modes:, :]], axis=-1)       # (M, 2W)
    o_rows = [jnp.dot(z[m:m + 1, :], wblk_ref[m], preferred_element_type=f32)
              for m in range(modes)]                                   # (1, 2W) each
    o_all = jnp.concatenate(o_rows, axis=0)                            # (M, 2W)

    # Truncated inverse DFT: two small dense matmuls (no serial add chain).
    y = (jnp.dot(gc_ref[...], o_all[:, :width], preferred_element_type=f32)
         + jnp.dot(gs_ref[...], o_all[:, width:], preferred_element_type=f32))

    h = jnp.tanh(y)  # dropout_rate = 0.0 -> identity (eval semantics)

    # fc_blocks (W->H, H->H, H->H, each + tanh) and fc_out (H -> out)
    h = jnp.tanh(jnp.dot(h, w1_ref[...], preferred_element_type=f32) + b1_ref[...])
    h = jnp.tanh(jnp.dot(h, w2_ref[...], preferred_element_type=f32) + b2_ref[...])
    h = jnp.tanh(jnp.dot(h, w3_ref[...], preferred_element_type=f32) + b3_ref[...])
    out_ref[...] = (jnp.dot(h, wout_ref[...], preferred_element_type=f32)
                    + bout_ref[...])


def make_spectral_operators(N, modes):
    """Per-batch truncated DFT / inverse-DFT operators (no O(B^2) block-diag)."""
    if modes > N // 2 + 1:
        raise ValueError(f"modes={modes} must be <= N//2+1={N // 2 + 1}")
    n = np.arange(N)
    m = np.arange(modes)
    ang = 2.0 * np.pi * np.outer(m, n) / N                  # (M, N)
    cos, sin = np.cos(ang), np.sin(ang)
    F = np.concatenate([cos, -sin], axis=0).astype(np.float32)          # (2M, N)
    fac = np.where(m == 0, 1.0, 2.0)
    if N % 2 == 0:
        fac = np.where(m == N // 2, 1.0, fac)
    gc = ((fac[:, None] / N) * cos).T.astype(np.float32)                # (N, M)
    gs = (-(fac[:, None] / N) * sin).T.astype(np.float32)               # (N, M)
    return jnp.asarray(F), jnp.asarray(gc), jnp.asarray(gs)


def make_mode_mix_blocks(spec):
    """spec (W, W, M, 2) -> stacked complex-mix blocks (M, 2W, 2W)."""
    wr = jnp.transpose(spec[..., 0], (2, 0, 1))   # (M, W, W) indexed [m, i, o]
    wi = jnp.transpose(spec[..., 1], (2, 0, 1))
    top = jnp.concatenate([wr, wi], axis=-1)      # (M, W, 2W)
    bot = jnp.concatenate([-wi, wr], axis=-1)     # (M, W, 2W)
    return jnp.concatenate([top, bot], axis=-2)   # (M, 2W, 2W)


def init_params(key, input_dim, width, modes, hidden_dim, output_dim):
    ks = jax.random.split(key, 11)

    def linear(kw, kb, fan_in, fan_out):
        bound = 1.0 / np.sqrt(fan_in)
        W = jax.random.uniform(kw, (fan_in, fan_out), jnp.float32, -bound, bound)
        b = jax.random.uniform(kb, (1, fan_out), jnp.float32, -bound, bound)
        return W, b

    win, bin_ = linear(ks[0], ks[1], input_dim, width)
    scale = 1.0 / (width * width)
    spec = scale * jax.random.normal(ks[2], (width, width, modes, 2), jnp.float32)
    w1, b1 = linear(ks[3], ks[4], width, hidden_dim)
    w2, b2 = linear(ks[5], ks[6], hidden_dim, hidden_dim)
    w3, b3 = linear(ks[7], ks[8], hidden_dim, hidden_dim)
    wout, bout = linear(ks[9], ks[10], hidden_dim, output_dim)
    return dict(win=win, bin=bin_, spec=spec, w1=w1, b1=b1, w2=w2, b2=b2,
                w3=w3, b3=b3, wout=wout, bout=bout)


def build_hybrid_pinn_forward(params, modes, seq_len):
    """Precompute spectral operators once and return a jitted forward(x)."""
    F, gc, gs = make_spectral_operators(seq_len, modes)
    wblk = make_mode_mix_blocks(params["spec"])
    width = params["win"].shape[1]
    hidden = params["w1"].shape[1]
    out_dim = params["wout"].shape[1]

    kernel = functools.partial(_hybrid_pinn_kernel, modes, width)

    weights = (params["win"], params["bin"], F, wblk, gc, gs,
               params["w1"], params["b1"], params["w2"], params["b2"],
               params["w3"], params["b3"], params["wout"], params["bout"])

    def _resident(a):
        # Weights / operators: full-array block, same block for every grid step.
        zeros = (0,) * a.ndim
        return pl.BlockSpec(a.shape, lambda b, z=zeros: z)

    @jax.jit
    def forward(x):
        B, D, N = x.shape
        assert N == seq_len, "sequence length must match precomputed DFT operators"
        x2d = jnp.transpose(x, (0, 2, 1)).reshape(B * N, D)   # row index = b*N + n

        macs = B * (N * D * width
                    + 2 * modes * N * width
                    + modes * (2 * width) * (2 * width)
                    + 2 * N * modes * width
                    + N * width * hidden
                    + 2 * N * hidden * hidden
                    + N * hidden * out_dim)
        bytes_accessed = 4 * (x2d.size + sum(int(w.size) for w in weights)
                              + B * N * out_dim)
        cost = pl.CostEstimate(flops=int(2 * macs),
                               transcendentals=int(B * N * (width + 3 * hidden)),
                               bytes_accessed=int(bytes_accessed))

        out2d = pl.pallas_call(
            kernel,
            out_shape=jax.ShapeDtypeStruct((B * N, out_dim), jnp.float32),
            grid=(B,),
            in_specs=[pl.BlockSpec((N, D), lambda b: (b, 0))]
                     + [_resident(w) for w in weights],
            out_specs=pl.BlockSpec((N, out_dim), lambda b: (b, 0)),
            compiler_params=pltpu.CompilerParams(
                dimension_semantics=("parallel",)),
            cost_estimate=cost,
        )(x2d, *weights)

        return jnp.transpose(out2d.reshape(B, N, out_dim), (0, 2, 1))   # (B, out, N)

    return forward


def reference_forward(x, params, modes):
    """Pure-JAX reference matching the PyTorch module semantics (FFT-based)."""
    B, D, N = x.shape
    x2d = jnp.transpose(x, (0, 2, 1)).reshape(B * N, D)
    h = x2d @ params["win"] + params["bin"]
    W = h.shape[-1]
    h = jnp.transpose(h.reshape(B, N, W), (0, 2, 1))              # (B, W, N)
    xft = jnp.fft.rfft(h, axis=-1)
    wc = params["spec"][..., 0] + 1j * params["spec"][..., 1]     # (W, W, modes)
    mixed = jnp.einsum('bix,iox->box', xft[:, :, :modes], wc)
    outft = jnp.zeros((B, W, N // 2 + 1), jnp.complex64).at[:, :, :modes].set(mixed)
    y = jnp.fft.irfft(outft, n=N, axis=-1)
    h = jnp.tanh(y)
    h = jnp.transpose(h, (0, 2, 1)).reshape(B * N, W)
    h = jnp.tanh(h @ params["w1"] + params["b1"])
    h = jnp.tanh(h @ params["w2"] + params["b2"])
    h = jnp.tanh(h @ params["w3"] + params["b3"])
    out = h @ params["wout"] + params["bout"]
    return jnp.transpose(out.reshape(B, N, -1), (0, 2, 1))


if __name__ == "__main__":
    # Small shapes consistent with the module defaults
    # (input_dim=22, width=64, modes=16, hidden_dim=128, depth=3, output_dim=9).
    B, N = 2, 32
    input_dim, width, modes, hidden_dim, output_dim = 22, 64, 16, 128, 9

    key = jax.random.PRNGKey(0)
    kx, kp = jax.random.split(key)
    x = jax.random.normal(kx, (B, input_dim, N), jnp.float32)
    params = init_params(kp, input_dim, width, modes, hidden_dim, output_dim)

    forward = build_hybrid_pinn_forward(params, modes, N)   # operators built once
    out = jax.block_until_ready(forward(x))
    assert out.shape == (B, output_dim, N)

    ref = jax.block_until_ready(reference_forward(x, params, modes))
    err = float(jnp.max(jnp.abs(out - ref)))
    assert err < 2e-3, f"max abs error too large: {err}"

    print("KERNEL_OK")
</pallas_src>

<mosaic_0001>
module attributes {stable_mosaic.version = 11 : i64} {
  func.func @_hybrid_pinn_kernel(%arg0: i32, %arg1: memref<32x22xf32, #tpu.memory_space<vmem>>, %arg2: memref<22x64xf32, #tpu.memory_space<vmem>>, %arg3: memref<1x64xf32, #tpu.memory_space<vmem>>, %arg4: memref<32x32xf32, #tpu.memory_space<vmem>>, %arg5: memref<16x128x128xf32, #tpu.memory_space<vmem>>, %arg6: memref<32x16xf32, #tpu.memory_space<vmem>>, %arg7: memref<32x16xf32, #tpu.memory_space<vmem>>, %arg8: memref<64x128xf32, #tpu.memory_space<vmem>>, %arg9: memref<1x128xf32, #tpu.memory_space<vmem>>, %arg10: memref<128x128xf32, #tpu.memory_space<vmem>>, %arg11: memref<1x128xf32, #tpu.memory_space<vmem>>, %arg12: memref<128x128xf32, #tpu.memory_space<vmem>>, %arg13: memref<1x128xf32, #tpu.memory_space<vmem>>, %arg14: memref<128x9xf32, #tpu.memory_space<vmem>>, %arg15: memref<1x9xf32, #tpu.memory_space<vmem>>, %arg16: memref<32x9xf32, #tpu.memory_space<vmem>>) attributes {dimension_semantics = [#tpu.dimension_semantics<parallel>], iteration_bounds = array<i64: 2>, scalar_prefetch = 0 : i64, scratch_operands = 0 : i64, tpu.core_type = #tpu.core_type<tc>, window_params = [{transform_indices = @transform_0, window_bounds = array<i64: 32, 22>}, {pipeline_mode = #tpu.pipeline_mode<synchronous>, transform_indices = @transform_1, window_bounds = array<i64: 22, 64>}, {pipeline_mode = #tpu.pipeline_mode<synchronous>, transform_indices = @transform_2, window_bounds = array<i64: 1, 64>}, {pipeline_mode = #tpu.pipeline_mode<synchronous>, transform_indices = @transform_3, window_bounds = array<i64: 32, 32>}, {pipeline_mode = #tpu.pipeline_mode<synchronous>, transform_indices = @transform_4, window_bounds = array<i64: 16, 128, 128>}, {pipeline_mode = #tpu.pipeline_mode<synchronous>, transform_indices = @transform_5, window_bounds = array<i64: 32, 16>}, {pipeline_mode = #tpu.pipeline_mode<synchronous>, transform_indices = @transform_6, window_bounds = array<i64: 32, 16>}, {pipeline_mode = #tpu.pipeline_mode<synchronous>, transform_indices = @transform_7, window_bounds = array<i64: 64, 128>}, {pipeline_mode = #tpu.pipeline_mode<synchronous>, transform_indices = @transform_8, window_bounds = array<i64: 1, 128>}, {pipeline_mode = #tpu.pipeline_mode<synchronous>, transform_indices = @transform_9, window_bounds = array<i64: 128, 128>}, {pipeline_mode = #tpu.pipeline_mode<synchronous>, transform_indices = @transform_10, window_bounds = array<i64: 1, 128>}, {pipeline_mode = #tpu.pipeline_mode<synchronous>, transform_indices = @transform_11, window_bounds = array<i64: 128, 128>}, {pipeline_mode = #tpu.pipeline_mode<synchronous>, transform_indices = @transform_12, window_bounds = array<i64: 1, 128>}, {pipeline_mode = #tpu.pipeline_mode<synchronous>, transform_indices = @transform_13, window_bounds = array<i64: 128, 9>}, {pipeline_mode = #tpu.pipeline_mode<synchronous>, transform_indices = @transform_14, window_bounds = array<i64: 1, 9>}, {transform_indices = @transform_15, window_bounds = array<i64: 32, 9>}]} {
    %c0 = arith.constant 0 : index
    %c0_0 = arith.constant 0 : index
    %0 = vector.load %arg1[%c0, %c0_0] : memref<32x22xf32, #tpu.memory_space<vmem>>, vector<32x22xf32>
    %c0_1 = arith.constant 0 : index
    %c0_2 = arith.constant 0 : index
    %1 = vector.load %arg2[%c0_1, %c0_2] : memref<22x64xf32, #tpu.memory_space<vmem>>, vector<22x64xf32>
    %cst = arith.constant dense<0.000000e+00> : vector<32x64xf32>
    %2 = tpu.matmul %0, %1, %cst {dimension_numbers = #tpu.dot_dimension_numbers<[1], [0], [0], [1], [0, 0, 1, 1], [], []>} : vector<32x22xf32>, vector<22x64xf32>, vector<32x64xf32> -> vector<32x64xf32>
    %c0_3 = arith.constant 0 : index
    %c0_4 = arith.constant 0 : index
    %3 = vector.load %arg3[%c0_3, %c0_4] : memref<1x64xf32, #tpu.memory_space<vmem>>, vector<1x64xf32>
    %4 = vector.broadcast %3 : vector<1x64xf32> to vector<32x64xf32>
    %5 = arith.addf %2, %4 : vector<32x64xf32>
    %c0_5 = arith.constant 0 : index
    %c0_6 = arith.constant 0 : index
    %6 = vector.load %arg4[%c0_5, %c0_6] : memref<32x32xf32, #tpu.memory_space<vmem>>, vector<32x32xf32>
    %cst_7 = arith.constant dense<0.000000e+00> : vector<32x64xf32>
    %7 = tpu.matmul %6, %5, %cst_7 {dimension_numbers = #tpu.dot_dimension_numbers<[1], [0], [0], [1], [0, 0, 1, 1], [], []>} : vector<32x32xf32>, vector<32x64xf32>, vector<32x64xf32> -> vector<32x64xf32>
    %8 = vector.extract_strided_slice %7 {offsets = [0, 0], sizes = [16, 64], strides = [1, 1]} : vector<32x64xf32> to vector<16x64xf32>
    %9 = vector.extract_strided_slice %7 {offsets = [16, 0], sizes = [16, 64], strides = [1, 1]} : vector<32x64xf32> to vector<16x64xf32>
    %10 = tpu.concatenate %8, %9 in 1 : vector<16x64xf32>, vector<16x64xf32> -> vector<16x128xf32>
    %11 = vector.extract_strided_slice %10 {offsets = [0, 0], sizes = [1, 128], strides = [1, 1]} : vector<16x128xf32> to vector<1x128xf32>
    %c0_8 = arith.constant 0 : index
    %c0_9 = arith.constant 0 : index
    %c0_10 = arith.constant 0 : index
    %12 = vector.load %arg5[%c0_8, %c0_9, %c0_10] : memref<16x128x128xf32, #tpu.memory_space<vmem>>, vector<1x128x128xf32>
    %13 = vector.shape_cast %12 : vector<1x128x128xf32> to vector<128x128xf32>
    %cst_11 = arith.constant dense<0.000000e+00> : vector<1x128xf32>
    %14 = tpu.matmul %11, %13, %cst_11 {dimension_numbers = #tpu.dot_dimension_numbers<[1], [0], [0], [1], [0, 0, 1, 1], [], []>} : vector<1x128xf32>, vector<128x128xf32>, vector<1x128xf32> -> vector<1x128xf32>
    %15 = vector.extract_strided_slice %10 {offsets = [1, 0], sizes = [1, 128], strides = [1, 1]} : vector<16x128xf32> to vector<1x128xf32>
    %c1 = arith.constant 1 : index
    %c0_12 = arith.constant 0 : index
    %c0_13 = arith.constant 0 : index
    %16 = vector.load %arg5[%c1, %c0_12, %c0_13] : memref<16x128x128xf32, #tpu.memory_space<vmem>>, vector<1x128x128xf32>
    %17 = vector.shape_cast %16 : vector<1x128x128xf32> to vector<128x128xf32>
    %cst_14 = arith.constant dense<0.000000e+00> : vector<1x128xf32>
    %18 = tpu.matmul %15, %17, %cst_14 {dimension_numbers = #tpu.dot_dimension_numbers<[1], [0], [0], [1], [0, 0, 1, 1], [], []>} : vector<1x128xf32>, vector<128x128xf32>, vector<1x128xf32> -> vector<1x128xf32>
    %19 = vector.extract_strided_slice %10 {offsets = [2, 0], sizes = [1, 128], strides = [1, 1]} : vector<16x128xf32> to vector<1x128xf32>
    %c2 = arith.constant 2 : index
    %c0_15 = arith.constant 0 : index
    %c0_16 = arith.constant 0 : index
    %20 = vector.load %arg5[%c2, %c0_15, %c0_16] : memref<16x128x128xf32, #tpu.memory_space<vmem>>, vector<1x128x128xf32>
    %21 = vector.shape_cast %20 : vector<1x128x128xf32> to vector<128x128xf32>
    %cst_17 = arith.constant dense<0.000000e+00> : vector<1x128xf32>
    %22 = tpu.matmul %19, %21, %cst_17 {dimension_numbers = #tpu.dot_dimension_numbers<[1], [0], [0], [1], [0, 0, 1, 1], [], []>} : vector<1x128xf32>, vector<128x128xf32>, vector<1x128xf32> -> vector<1x128xf32>
    %23 = vector.extract_strided_slice %10 {offsets = [3, 0], sizes = [1, 128], strides = [1, 1]} : vector<16x128xf32> to vector<1x128xf32>
    %c3 = arith.constant 3 : index
    %c0_18 = arith.constant 0 : index
    %c0_19 = arith.constant 0 : index
    %24 = vector.load %arg5[%c3, %c0_18, %c0_19] : memref<16x128x128xf32, #tpu.memory_space<vmem>>, vector<1x128x128xf32>
    %25 = vector.shape_cast %24 : vector<1x128x128xf32> to vector<128x128xf32>
    %cst_20 = arith.constant dense<0.000000e+00> : vector<1x128xf32>
    %26 = tpu.matmul %23, %25, %cst_20 {dimension_numbers = #tpu.dot_dimension_numbers<[1], [0], [0], [1], [0, 0, 1, 1], [], []>} : vector<1x128xf32>, vector<128x128xf32>, vector<1x128xf32> -> vector<1x128xf32>
    %27 = vector.extract_strided_slice %10 {offsets = [4, 0], sizes = [1, 128], strides = [1, 1]} : vector<16x128xf32> to vector<1x128xf32>
    %c4 = arith.constant 4 : index
    %c0_21 = arith.constant 0 : index
    %c0_22 = arith.constant 0 : index
    %28 = vector.load %arg5[%c4, %c0_21, %c0_22] : memref<16x128x128xf32, #tpu.memory_space<vmem>>, vector<1x128x128xf32>
    %29 = vector.shape_cast %28 : vector<1x128x128xf32> to vector<128x128xf32>
    %cst_23 = arith.constant dense<0.000000e+00> : vector<1x128xf32>
    %30 = tpu.matmul %27, %29, %cst_23 {dimension_numbers = #tpu.dot_dimension_numbers<[1], [0], [0], [1], [0, 0, 1, 1], [], []>} : vector<1x128xf32>, vector<128x128xf32>, vector<1x128xf32> -> vector<1x128xf32>
    %31 = vector.extract_strided_slice %10 {offsets = [5, 0], sizes = [1, 128], strides = [1, 1]} : vector<16x128xf32> to vector<1x128xf32>
    %c5 = arith.constant 5 : index
    %c0_24 = arith.constant 0 : index
    %c0_25 = arith.constant 0 : index
    %32 = vector.load %arg5[%c5, %c0_24, %c0_25] : memref<16x128x128xf32, #tpu.memory_space<vmem>>, vector<1x128x128xf32>
    %33 = vector.shape_cast %32 : vector<1x128x128xf32> to vector<128x128xf32>
    %cst_26 = arith.constant dense<0.000000e+00> : vector<1x128xf32>
    %34 = tpu.matmul %31, %33, %cst_26 {dimension_numbers = #tpu.dot_dimension_numbers<[1], [0], [0], [1], [0, 0, 1, 1], [], []>} : vector<1x128xf32>, vector<128x128xf32>, vector<1x128xf32> -> vector<1x128xf32>
    %35 = vector.extract_strided_slice %10 {offsets = [6, 0], sizes = [1, 128], strides = [1, 1]} : vector<16x128xf32> to vector<1x128xf32>
    %c6 = arith.constant 6 : index
    %c0_27 = arith.constant 0 : index
    %c0_28 = arith.constant 0 : index
    %36 = vector.load %arg5[%c6, %c0_27, %c0_28] : memref<16x128x128xf32, #tpu.memory_space<vmem>>, vector<1x128x128xf32>
    %37 = vector.shape_cast %36 : vector<1x128x128xf32> to vector<128x128xf32>
    %cst_29 = arith.constant dense<0.000000e+00> : vector<1x128xf32>
    %38 = tpu.matmul %35, %37, %cst_29 {dimension_numbers = #tpu.dot_dimension_numbers<[1], [0], [0], [1], [0, 0, 1, 1], [], []>} : vector<1x128xf32>, vector<128x128xf32>, vector<1x128xf32> -> vector<1x128xf32>
    %39 = vector.extract_strided_slice %10 {offsets = [7, 0], sizes = [1, 128], strides = [1, 1]} : vector<16x128xf32> to vector<1x128xf32>
    %c7 = arith.constant 7 : index
    %c0_30 = arith.constant 0 : index
    %c0_31 = arith.constant 0 : index
    %40 = vector.load %arg5[%c7, %c0_30, %c0_31] : memref<16x128x128xf32, #tpu.memory_space<vmem>>, vector<1x128x128xf32>
    %41 = vector.shape_cast %40 : vector<1x128x128xf32> to vector<128x128xf32>
    %cst_32 = arith.constant dense<0.000000e+00> : vector<1x128xf32>
    %42 = tpu.matmul %39, %41, %cst_32 {dimension_numbers = #tpu.dot_dimension_numbers<[1], [0], [0], [1], [0, 0, 1, 1], [], []>} : vector<1x128xf32>, vector<128x128xf32>, vector<1x128xf32> -> vector<1x128xf32>
    %43 = vector.extract_strided_slice %10 {offsets = [8, 0], sizes = [1, 128], strides = [1, 1]} : vector<16x128xf32> to vector<1x128xf32>
    %c8 = arith.constant 8 : index
    %c0_33 = arith.constant 0 : index
    %c0_34 = arith.constant 0 : index
    %44 = vector.load %arg5[%c8, %c0_33, %c0_34] : memref<16x128x128xf32, #tpu.memory_space<vmem>>, vector<1x128x128xf32>
    %45 = vector.shape_cast %44 : vector<1x128x128xf32> to vector<128x128xf32>
    %cst_35 = arith.constant dense<0.000000e+00> : vector<1x128xf32>
    %46 = tpu.matmul %43, %45, %cst_35 {dimension_numbers = #tpu.dot_dimension_numbers<[1], [0], [0], [1], [0, 0, 1, 1], [], []>} : vector<1x128xf32>, vector<128x128xf32>, vector<1x128xf32> -> vector<1x128xf32>
    %47 = vector.extract_strided_slice %10 {offsets = [9, 0], sizes = [1, 128], strides = [1, 1]} : vector<16x128xf32> to vector<1x128xf32>
    %c9 = arith.constant 9 : index
    %c0_36 = arith.constant 0 : index
    %c0_37 = arith.constant 0 : index
    %48 = vector.load %arg5[%c9, %c0_36, %c0_37] : memref<16x128x128xf32, #tpu.memory_space<vmem>>, vector<1x128x128xf32>
    %49 = vector.shape_cast %48 : vector<1x128x128xf32> to vector<128x128xf32>
    %cst_38 = arith.constant dense<0.000000e+00> : vector<1x128xf32>
    %50 = tpu.matmul %47, %49, %cst_38 {dimension_numbers = #tpu.dot_dimension_numbers<[1], [0], [0], [1], [0, 0, 1, 1], [], []>} : vector<1x128xf32>, vector<128x128xf32>, vector<1x128xf32> -> vector<1x128xf32>
    %51 = vector.extract_strided_slice %10 {offsets = [10, 0], sizes = [1, 128], strides = [1, 1]} : vector<16x128xf32> to vector<1x128xf32>
    %c10 = arith.constant 10 : index
    %c0_39 = arith.constant 0 : index
    %c0_40 = arith.constant 0 : index
    %52 = vector.load %arg5[%c10, %c0_39, %c0_40] : memref<16x128x128xf32, #tpu.memory_space<vmem>>, vector<1x128x128xf32>
    %53 = vector.shape_cast %52 : vector<1x128x128xf32> to vector<128x128xf32>
    %cst_41 = arith.constant dense<0.000000e+00> : vector<1x128xf32>
    %54 = tpu.matmul %51, %53, %cst_41 {dimension_numbers = #tpu.dot_dimension_numbers<[1], [0], [0], [1], [0, 0, 1, 1], [], []>} : vector<1x128xf32>, vector<128x128xf32>, vector<1x128xf32> -> vector<1x128xf32>
    %55 = vector.extract_strided_slice %10 {offsets = [11, 0], sizes = [1, 128], strides = [1, 1]} : vector<16x128xf32> to vector<1x128xf32>
    %c11 = arith.constant 11 : index
    %c0_42 = arith.constant 0 : index
    %c0_43 = arith.constant 0 : index
    %56 = vector.load %arg5[%c11, %c0_42, %c0_43] : memref<16x128x128xf32, #tpu.memory_space<vmem>>, vector<1x128x128xf32>
    %57 = vector.shape_cast %56 : vector<1x128x128xf32> to vector<128x128xf32>
    %cst_44 = arith.constant dense<0.000000e+00> : vector<1x128xf32>
    %58 = tpu.matmul %55, %57, %cst_44 {dimension_numbers = #tpu.dot_dimension_numbers<[1], [0], [0], [1], [0, 0, 1, 1], [], []>} : vector<1x128xf32>, vector<128x128xf32>, vector<1x128xf32> -> vector<1x128xf32>
    %59 = vector.extract_strided_slice %10 {offsets = [12, 0], sizes = [1, 128], strides = [1, 1]} : vector<16x128xf32> to vector<1x128xf32>
    %c12 = arith.constant 12 : index
    %c0_45 = arith.constant 0 : index
    %c0_46 = arith.constant 0 : index
    %60 = vector.load %arg5[%c12, %c0_45, %c0_46] : memref<16x128x128xf32, #tpu.memory_space<vmem>>, vector<1x128x128xf32>
    %61 = vector.shape_cast %60 : vector<1x128x128xf32> to vector<128x128xf32>
    %cst_47 = arith.constant dense<0.000000e+00> : vector<1x128xf32>
    %62 = tpu.matmul %59, %61, %cst_47 {dimension_numbers = #tpu.dot_dimension_numbers<[1], [0], [0], [1], [0, 0, 1, 1], [], []>} : vector<1x128xf32>, vector<128x128xf32>, vector<1x128xf32> -> vector<1x128xf32>
    %63 = vector.extract_strided_slice %10 {offsets = [13, 0], sizes = [1, 128], strides = [1, 1]} : vector<16x128xf32> to vector<1x128xf32>
    %c13 = arith.constant 13 : index
    %c0_48 = arith.constant 0 : index
    %c0_49 = arith.constant 0 : index
    %64 = vector.load %arg5[%c13, %c0_48, %c0_49] : memref<16x128x128xf32, #tpu.memory_space<vmem>>, vector<1x128x128xf32>
    %65 = vector.shape_cast %64 : vector<1x128x128xf32> to vector<128x128xf32>
    %cst_50 = arith.constant dense<0.000000e+00> : vector<1x128xf32>
    %66 = tpu.matmul %63, %65, %cst_50 {dimension_numbers = #tpu.dot_dimension_numbers<[1], [0], [0], [1], [0, 0, 1, 1], [], []>} : vector<1x128xf32>, vector<128x128xf32>, vector<1x128xf32> -> vector<1x128xf32>
    %67 = vector.extract_strided_slice %10 {offsets = [14, 0], sizes = [1, 128], strides = [1, 1]} : vector<16x128xf32> to vector<1x128xf32>
    %c14 = arith.constant 14 : index
    %c0_51 = arith.constant 0 : index
    %c0_52 = arith.constant 0 : index
    %68 = vector.load %arg5[%c14, %c0_51, %c0_52] : memref<16x128x128xf32, #tpu.memory_space<vmem>>, vector<1x128x128xf32>
    %69 = vector.shape_cast %68 : vector<1x128x128xf32> to vector<128x128xf32>
    %cst_53 = arith.constant dense<0.000000e+00> : vector<1x128xf32>
    %70 = tpu.matmul %67, %69, %cst_53 {dimension_numbers = #tpu.dot_dimension_numbers<[1], [0], [0], [1], [0, 0, 1, 1], [], []>} : vector<1x128xf32>, vector<128x128xf32>, vector<1x128xf32> -> vector<1x128xf32>
    %71 = vector.extract_strided_slice %10 {offsets = [15, 0], sizes = [1, 128], strides = [1, 1]} : vector<16x128xf32> to vector<1x128xf32>
    %c15 = arith.constant 15 : index
    %c0_54 = arith.constant 0 : index
    %c0_55 = arith.constant 0 : index
    %72 = vector.load %arg5[%c15, %c0_54, %c0_55] : memref<16x128x128xf32, #tpu.memory_space<vmem>>, vector<1x128x128xf32>
    %73 = vector.shape_cast %72 : vector<1x128x128xf32> to vector<128x128xf32>
    %cst_56 = arith.constant dense<0.000000e+00> : vector<1x128xf32>
    %74 = tpu.matmul %71, %73, %cst_56 {dimension_numbers = #tpu.dot_dimension_numbers<[1], [0], [0], [1], [0, 0, 1, 1], [], []>} : vector<1x128xf32>, vector<128x128xf32>, vector<1x128xf32> -> vector<1x128xf32>
    %75 = tpu.concatenate %14, %18, %22, %26, %30, %34, %38, %42, %46, %50, %54, %58, %62, %66, %70, %74 in 0 : vector<1x128xf32>, vector<1x128xf32>, vector<1x128xf32>, vector<1x128xf32>, vector<1x128xf32>, vector<1x128xf32>, vector<1x128xf32>, vector<1x128xf32>, vector<1x128xf32>, vector<1x128xf32>, vector<1x128xf32>, vector<1x128xf32>, vector<1x128xf32>, vector<1x128xf32>, vector<1x128xf32>, vector<1x128xf32> -> vector<16x128xf32>
    %c0_57 = arith.constant 0 : index
    %c0_58 = arith.constant 0 : index
    %76 = vector.load %arg6[%c0_57, %c0_58] : memref<32x16xf32, #tpu.memory_space<vmem>>, vector<32x16xf32>
    %77 = vector.extract_strided_slice %75 {offsets = [0, 0], sizes = [16, 64], strides = [1, 1]} : vector<16x128xf32> to vector<16x64xf32>
    %cst_59 = arith.constant dense<0.000000e+00> : vector<32x64xf32>
    %78 = tpu.matmul %76, %77, %cst_59 {dimension_numbers = #tpu.dot_dimension_numbers<[1], [0], [0], [1], [0, 0, 1, 1], [], []>} : vector<32x16xf32>, vector<16x64xf32>, vector<32x64xf32> -> vector<32x64xf32>
    %c0_60 = arith.constant 0 : index
    %c0_61 = arith.constant 0 : index
    %79 = vector.load %arg7[%c0_60, %c0_61] : memref<32x16xf32, #tpu.memory_space<vmem>>, vector<32x16xf32>
    %80 = vector.extract_strided_slice %75 {offsets = [0, 64], sizes = [16, 64], strides = [1, 1]} : vector<16x128xf32> to vector<16x64xf32>
    %cst_62 = arith.constant dense<0.000000e+00> : vector<32x64xf32>
    %81 = tpu.matmul %79, %80, %cst_62 {dimension_numbers = #tpu.dot_dimension_numbers<[1], [0], [0], [1], [0, 0, 1, 1], [], []>} : vector<32x16xf32>, vector<16x64xf32>, vector<32x64xf32> -> vector<32x64xf32>
    %82 = arith.addf %78, %81 : vector<32x64xf32>
    %83 = math.tanh %82 : vector<32x64xf32>
    %c0_63 = arith.constant 0 : index
    %c0_64 = arith.constant 0 : index
    %84 = vector.load %arg8[%c0_63, %c0_64] : memref<64x128xf32, #tpu.memory_space<vmem>>, vector<64x128xf32>
    %cst_65 = arith.constant dense<0.000000e+00> : vector<32x128xf32>
    %85 = tpu.matmul %83, %84, %cst_65 {dimension_numbers = #tpu.dot_dimension_numbers<[1], [0], [0], [1], [0, 0, 1, 1], [], []>} : vector<32x64xf32>, vector<64x128xf32>, vector<32x128xf32> -> vector<32x128xf32>
    %c0_66 = arith.constant 0 : index
    %c0_67 = arith.constant 0 : index
    %86 = vector.load %arg9[%c0_66, %c0_67] : memref<1x128xf32, #tpu.memory_space<vmem>>, vector<1x128xf32>
    %87 = vector.broadcast %86 : vector<1x128xf32> to vector<32x128xf32>
    %88 = arith.addf %85, %87 : vector<32x128xf32>
    %89 = math.tanh %88 : vector<32x128xf32>
    %c0_68 = arith.constant 0 : index
    %c0_69 = arith.constant 0 : index
    %90 = vector.load %arg10[%c0_68, %c0_69] : memref<128x128xf32, #tpu.memory_space<vmem>>, vector<128x128xf32>
    %cst_70 = arith.constant dense<0.000000e+00> : vector<32x128xf32>
    %91 = tpu.matmul %89, %90, %cst_70 {dimension_numbers = #tpu.dot_dimension_numbers<[1], [0], [0], [1], [0, 0, 1, 1], [], []>} : vector<32x128xf32>, vector<128x128xf32>, vector<32x128xf32> -> vector<32x128xf32>
    %c0_71 = arith.constant 0 : index
    %c0_72 = arith.constant 0 : index
    %92 = vector.load %arg11[%c0_71, %c0_72] : memref<1x128xf32, #tpu.memory_space<vmem>>, vector<1x128xf32>
    %93 = vector.broadcast %92 : vector<1x128xf32> to vector<32x128xf32>
    %94 = arith.addf %91, %93 : vector<32x128xf32>
    %95 = math.tanh %94 : vector<32x128xf32>
    %c0_73 = arith.constant 0 : index
    %c0_74 = arith.constant 0 : index
    %96 = vector.load %arg12[%c0_73, %c0_74] : memref<128x128xf32, #tpu.memory_space<vmem>>, vector<128x128xf32>
    %cst_75 = arith.constant dense<0.000000e+00> : vector<32x128xf32>
    %97 = tpu.matmul %95, %96, %cst_75 {dimension_numbers = #tpu.dot_dimension_numbers<[1], [0], [0], [1], [0, 0, 1, 1], [], []>} : vector<32x128xf32>, vector<128x128xf32>, vector<32x128xf32> -> vector<32x128xf32>
    %c0_76 = arith.constant 0 : index
    %c0_77 = arith.constant 0 : index
    %98 = vector.load %arg13[%c0_76, %c0_77] : memref<1x128xf32, #tpu.memory_space<vmem>>, vector<1x128xf32>
    %99 = vector.broadcast %98 : vector<1x128xf32> to vector<32x128xf32>
    %100 = arith.addf %97, %99 : vector<32x128xf32>
    %101 = math.tanh %100 : vector<32x128xf32>
    %c0_78 = arith.constant 0 : index
    %c0_79 = arith.constant 0 : index
    %102 = vector.load %arg14[%c0_78, %c0_79] : memref<128x9xf32, #tpu.memory_space<vmem>>, vector<128x9xf32>
    %cst_80 = arith.constant dense<0.000000e+00> : vector<32x9xf32>
    %103 = tpu.matmul %101, %102, %cst_80 {dimension_numbers = #tpu.dot_dimension_numbers<[1], [0], [0], [1], [0, 0, 1, 1], [], []>} : vector<32x128xf32>, vector<128x9xf32>, vector<32x9xf32> -> vector<32x9xf32>
    %c0_81 = arith.constant 0 : index
    %c0_82 = arith.constant 0 : index
    %104 = vector.load %arg15[%c0_81, %c0_82] : memref<1x9xf32, #tpu.memory_space<vmem>>, vector<1x9xf32>
    %105 = vector.broadcast %104 : vector<1x9xf32> to vector<32x9xf32>
    %106 = arith.addf %103, %105 : vector<32x9xf32>
    %c0_83 = arith.constant 0 : index
    %c0_84 = arith.constant 0 : index
    %107 = vector.load %arg16[%c0_83, %c0_84] : memref<32x9xf32, #tpu.memory_space<vmem>>, vector<32x9xf32>
    tpu.vector_store %arg16[%c0_83, %c0_84], %106 {strides = array<i32>} : memref<32x9xf32, #tpu.memory_space<vmem>>, vector<32x9xf32>,
    return
  }
  func.func @transform_0(%arg0: i32) -> (i32, i32) {
    %c0_i32 = arith.constant 0 : i32
    %c0_i32_0 = arith.constant 0 : i32
    return %arg0, %c0_i32 : i32, i32
  }
  func.func @transform_1(%arg0: i32) -> (i32, i32) {
    %c0_i32 = arith.constant 0 : i32
    %c0_i32_0 = arith.constant 0 : i32
    %c0_i32_1 = arith.constant 0 : i32
    return %c0_i32, %c0_i32_0 : i32, i32
  }
  func.func @transform_2(%arg0: i32) -> (i32, i32) {
    %c0_i32 = arith.constant 0 : i32
    %c0_i32_0 = arith.constant 0 : i32
    %c0_i32_1 = arith.constant 0 : i32
    return %c0_i32, %c0_i32_0 : i32, i32
  }
  func.func @transform_3(%arg0: i32) -> (i32, i32) {
    %c0_i32 = arith.constant 0 : i32
    %c0_i32_0 = arith.constant 0 : i32
    %c0_i32_1 = arith.constant 0 : i32
    return %c0_i32, %c0_i32_0 : i32, i32
  }
  func.func @transform_4(%arg0: i32) -> (i32, i32, i32) {
    %c0_i32 = arith.constant 0 : i32
    %c0_i32_0 = arith.constant 0 : i32
    %c0_i32_1 = arith.constant 0 : i32
    %c0_i32_2 = arith.constant 0 : i32
    return %c0_i32, %c0_i32_0, %c0_i32_1 : i32, i32, i32
  }
  func.func @transform_5(%arg0: i32) -> (i32, i32) {
    %c0_i32 = arith.constant 0 : i32
    %c0_i32_0 = arith.constant 0 : i32
    %c0_i32_1 = arith.constant 0 : i32
    return %c0_i32, %c0_i32_0 : i32, i32
  }
  func.func @transform_6(%arg0: i32) -> (i32, i32) {
    %c0_i32 = arith.constant 0 : i32
    %c0_i32_0 = arith.constant 0 : i32
    %c0_i32_1 = arith.constant 0 : i32
    return %c0_i32, %c0_i32_0 : i32, i32
  }
  func.func @transform_7(%arg0: i32) -> (i32, i32) {
    %c0_i32 = arith.constant 0 : i32
    %c0_i32_0 = arith.constant 0 : i32
    %c0_i32_1 = arith.constant 0 : i32
    return %c0_i32, %c0_i32_0 : i32, i32
  }
  func.func @transform_8(%arg0: i32) -> (i32, i32) {
    %c0_i32 = arith.constant 0 : i32
    %c0_i32_0 = arith.constant 0 : i32
    %c0_i32_1 = arith.constant 0 : i32
    return %c0_i32, %c0_i32_0 : i32, i32
  }
  func.func @transform_9(%arg0: i32) -> (i32, i32) {
    %c0_i32 = arith.constant 0 : i32
    %c0_i32_0 = arith.constant 0 : i32
    %c0_i32_1 = arith.constant 0 : i32
    return %c0_i32, %c0_i32_0 : i32, i32
  }
  func.func @transform_10(%arg0: i32) -> (i32, i32) {
    %c0_i32 = arith.constant 0 : i32
    %c0_i32_0 = arith.constant 0 : i32
    %c0_i32_1 = arith.constant 0 : i32
    return %c0_i32, %c0_i32_0 : i32, i32
  }
  func.func @transform_11(%arg0: i32) -> (i32, i32) {
    %c0_i32 = arith.constant 0 : i32
    %c0_i32_0 = arith.constant 0 : i32
    %c0_i32_1 = arith.constant 0 : i32
    return %c0_i32, %c0_i32_0 : i32, i32
  }
  func.func @transform_12(%arg0: i32) -> (i32, i32) {
    %c0_i32 = arith.constant 0 : i32
    %c0_i32_0 = arith.constant 0 : i32
    %c0_i32_1 = arith.constant 0 : i32
    return %c0_i32, %c0_i32_0 : i32, i32
  }
  func.func @transform_13(%arg0: i32) -> (i32, i32) {
    %c0_i32 = arith.constant 0 : i32
    %c0_i32_0 = arith.constant 0 : i32
    %c0_i32_1 = arith.constant 0 : i32
    return %c0_i32, %c0_i32_0 : i32, i32
  }
  func.func @transform_14(%arg0: i32) -> (i32, i32) {
    %c0_i32 = arith.constant 0 : i32
    %c0_i32_0 = arith.constant 0 : i32
    %c0_i32_1 = arith.constant 0 : i32
    return %c0_i32, %c0_i32_0 : i32, i32
  }
  func.func @transform_15(%arg0: i32) -> (i32, i32) {
    %c0_i32 = arith.constant 0 : i32
    %c0_i32_0 = arith.constant 0 : i32
    return %arg0, %c0_i32 : i32, i32
  }
}

</mosaic_0001>

<llo_original>
// kernel: forward.1
$region0: #{forward.1}
  #allocation0 [shape = 'u32[]', space=smem, size = 0x4, offset = 0x4, fixed_abs, tag = 'smem constant byte address 0x4 - core index']
  #allocation1 [shape = 'u32[144,128]{1,0:T(1,128)}', space=vmem, size = 0x12000, scoped, tag = 'internal scratch']
  %s0 = inlined_call_operand.vmem [shape: f32[64,22], index: 0, kind: input, shape index: {}]
  %s1 = inlined_call_operand.hbm [shape: f32[22,64], index: 1, kind: input, shape index: {}]
  %s2 = inlined_call_operand.hbm [shape: f32[1,64], index: 2, kind: input, shape index: {}]
  %s3 = inlined_call_operand.hbm [shape: f32[32,32], index: 3, kind: input, shape index: {}]
  %s4 = inlined_call_operand.hbm [shape: f32[16,128,128], index: 4, kind: input, shape index: {}]
  %s5 = inlined_call_operand.hbm [shape: f32[32,16], index: 5, kind: input, shape index: {}]
  %s6 = inlined_call_operand.vmem [shape: f32[32,16], index: 6, kind: input, shape index: {}]
  %s7 = inlined_call_operand.hbm [shape: f32[64,128], index: 7, kind: input, shape index: {}]
  %s8 = inlined_call_operand.vmem [shape: f32[1,128], index: 8, kind: input, shape index: {}]
  %s9 = inlined_call_operand.hbm [shape: f32[128,128], index: 9, kind: input, shape index: {}]
  %s10 = inlined_call_operand.vmem [shape: f32[1,128], index: 10, kind: input, shape index: {}]
  %s11 = inlined_call_operand.hbm [shape: f32[128,128], index: 11, kind: input, shape index: {}]
  %s12 = inlined_call_operand.vmem [shape: f32[1,128], index: 12, kind: input, shape index: {}]
  %s13 = inlined_call_operand.vmem [shape: f32[128,9], index: 13, kind: input, shape index: {}]
  %s14 = inlined_call_operand.vmem [shape: f32[1,9], index: 14, kind: input, shape index: {}]
  %s15 = inlined_call_operand.vmem [shape: f32[64,9], index: 15, kind: output, shape index: {}]
  %s16 = sld [smem:[#allocation0]]
  $region125: #{forward.1} parent=0
    _
  %s18 = ssub.s32 1, %s16
  %s19 = scalar_select 0, %s18, %s16
  $region1: #{forward.1} parent=0
    #allocation2 [shape = 'u8[12288]{0}', space=vmem, size = 0x3000, scoped, tag = 'input window, operand 1, single buffered']
    #allocation3 [shape = 's32[2]{0}', space=sflag, size = 0x8, scoped, tag = 'scoped memory for forward.1']
    #allocation4 [shape = 'u8[512]{0}', space=vmem, size = 0x400, scoped, tag = 'input window, operand 2, single buffered']
    #allocation5 [shape = 's32[1]{0}', space=sflag, size = 0x4, scoped, tag = 'scoped memory for forward.1']
    #allocation6 [shape = 'u8[16384]{0}', space=vmem, size = 0x4000, scoped, tag = 'input window, operand 3, single buffered']
    #allocation7 [shape = 'u8[1048576]{0}', space=vmem, size = 0x100000, scoped, tag = 'input window, operand 4, single buffered']
    #allocation8 [shape = 's32[1]{0}', space=sflag, size = 0x4, scoped, tag = 'scoped memory for forward.1']
    #allocation9 [shape = 'u8[16384]{0}', space=vmem, size = 0x4000, scoped, tag = 'input window, operand 5, single buffered']
    #allocation10 [shape = 'u8[32768]{0}', space=vmem, size = 0x8000, scoped, tag = 'input window, operand 7, single buffered']
    #allocation11 [shape = 's32[1]{0}', space=sflag, size = 0x4, scoped, tag = 'scoped memory for forward.1']
    #allocation12 [shape = 'u8[65536]{0}', space=vmem, size = 0x10000, scoped, tag = 'input window, operand 9, single buffered']
    #allocation13 [shape = 'u8[65536]{0}', space=vmem, size = 0x10000, scoped, tag = 'input window, operand 11, single buffered']
    #allocation14 [shape = 's32[1]{0}', space=sflag, size = 0x4, scoped, tag = 'scoped memory for forward.1']
    %20 = vsyncpa [#allocation3], 0
    %21 = vsyncpa [#allocation5], 0
    %22 = vsyncpa [#allocation8], 0
    %23 = vsyncpa [#allocation11], 0
    %24 = vsyncpa [#allocation14], 0
    loop: start=0, step=1, limit=4
    $region2: #{forward.1} parent=1 // loop_pre_header
      _
    $region3: #{forward.1} parent=1 // loop_header
      %s26 = sphi 0, %s30
      %p27 = scmp.ge.s32.totalorder %s26, 4
      %s36 = sphi 0, %s38
      %s39 = sphi 0, %s36
      %s40 = sphi 0, %s39
      %s56 = sphi 0, %s40
      %s60 = sphi 0, %s60
      %s62 = sphi 0, %s60
      %s63 = sphi 0, %s62
      %s77 = sphi 0, %s63
      %s81 = sphi 0, %s81
      %s83 = sphi 0, %s81
      %s84 = sphi 0, %s83
      %s98 = sphi 0, %s84
      %s102 = sphi 0, %s102
      %s104 = sphi 0, %s102
      %s105 = sphi 0, %s104
      %s119 = sphi 0, %s105
      %s123 = sphi 0, %s123
      %s125 = sphi 0, %s123
      %s126 = sphi 0, %s125
      %s140 = sphi 0, %s126
      %s144 = sphi 0, %s144
      %s146 = sphi 0, %s144
      %s147 = sphi 0, %s146
      %s161 = sphi 0, %s147
      %s165 = sphi 0, %s165
      %s167 = sphi 0, %s165
      %s168 = sphi 0, %s167
      %s182 = sphi 0, %s168
      %s186 = sphi 0, %s186
      %s188 = sphi 0, %s186
      %s189 = sphi 0, %s188
      %s203 = sphi 0, %s189
      %s207 = sphi 0, %s207
      %s209 = sphi 0, %s207
      %s210 = sphi 0, %s209
      %s224 = sphi 0, %s210
      %s228 = sphi 0, %s228
      %s230 = sphi 0, %s228
      %s231 = sphi 0, %s230
      %s245 = sphi 0, %s231
      %s249 = sphi 0, %s249
      %s251 = sphi 0, %s249
      %s252 = sphi 0, %s251
      %s266 = sphi 0, %s252
      %s270 = sphi 0, %s270
      %s272 = sphi 0, %s270
      %s273 = sphi 0, %s272
      %s287 = sphi 0, %s273
      %s291 = sphi 0, %s291
      %s293 = sphi 0, %s291
      %s294 = sphi 0, %s293
      %s308 = sphi 0, %s294
      %s312 = sphi 0, %s312
      %s314 = sphi 0, %s312
      %s315 = sphi 0, %s314
      %s329 = sphi 0, %s315
      %s333 = sphi 0, %s333
      %s335 = sphi 0, %s333
      %s336 = sphi 0, %s335
      %s350 = sphi 0, %s336
      %s356 = sphi 0, %s358
      %s359 = sphi 0, %s356
      %s360 = sphi 0, %s359
      %s376 = sphi 0, %s360
    $region4: #{forward.1} parent=1 // loop_header_branch
      %29 = sbr.rel (%p27) target = $region8
    $region5: #{forward.1} parent=1 // loop_body
      %s31 = ssub.s32 %s26, 1
      %s32 = ssub.s32 %s26, 2
      %s33 = sadd.s32 %s26, 1
      %s34 = ssub.s32 %s26, %s33
      %p35 = scmp.eq.s32.totalorder %s34, 0
      %s37 = sadd.s32 %s36, 1
      %s38 = scalar_select %p35, %s36, %s37
      %p41 = pneg %p35
      %p42 = scmp.eq.s32.totalorder %s26, 1
      %p43 = por %p41, %p42
      %p44 = scmp.ne.s32.totalorder %s36, %s39
      %p45 = scmp.eq.s32.totalorder %s26, 0
      %p46 = por %p44, %p45
      %p47 = scmp.ne.s32.totalorder %s36, %s39
      %p48 = scmp.eq.s32.totalorder %s31, 1
      %p49 = por %p47, %p48
      %p50 = scmp.ne.s32.totalorder %s39, %s40
      %p51 = scmp.eq.s32.totalorder %s31, 0
      %p52 = por %p50, %p51
      %p53 = scmp.ne.s32.totalorder %s39, %s40
      %p54 = scmp.eq.s32.totalorder %s32, 1
      %p55 = por %p53, %p54
      %p57 = scmp.ne.s32.totalorder %s40, %s56
      %p58 = scmp.eq.s32.totalorder %s32, 0
      %p59 = por %p57, %p58
      %s61 = sadd.s32 %s60, 1
      %p64 = scmp.eq.s32.totalorder %s26, 1
      %p65 = scmp.ne.s32.totalorder %s60, %s62
      %p66 = scmp.eq.s32.totalorder %s26, 0
      %p67 = por %p65, %p66
      %p68 = scmp.ne.s32.totalorder %s60, %s62
      %p69 = scmp.eq.s32.totalorder %s31, 1
      %p70 = por %p68, %p69
      %p71 = scmp.ne.s32.totalorder %s62, %s63
      %p72 = scmp.eq.s32.totalorder %s31, 0
      %p73 = por %p71, %p72
      %p74 = scmp.ne.s32.totalorder %s62, %s63
      %p75 = scmp.eq.s32.totalorder %s32, 1
      %p76 = por %p74, %p75
      %p78 = scmp.ne.s32.totalorder %s63, %s77
      %p79 = scmp.eq.s32.totalorder %s32, 0
      %p80 = por %p78, %p79
      %s82 = sadd.s32 %s81, 1
      %p85 = scmp.eq.s32.totalorder %s26, 1
      %p86 = scmp.ne.s32.totalorder %s81, %s83
      %p87 = scmp.eq.s32.totalorder %s26, 0
      %p88 = por %p86, %p87
      %p89 = scmp.ne.s32.totalorder %s81, %s83
      %p90 = scmp.eq.s32.totalorder %s31, 1
      %p91 = por %p89, %p90
      %p92 = scmp.ne.s32.totalorder %s83, %s84
      %p93 = scmp.eq.s32.totalorder %s31, 0
      %p94 = por %p92, %p93
      %p95 = scmp.ne.s32.totalorder %s83, %s84
      %p96 = scmp.eq.s32.totalorder %s32, 1
      %p97 = por %p95, %p96
      %p99 = scmp.ne.s32.totalorder %s84, %s98
      %p100 = scmp.eq.s32.totalorder %s32, 0
      %p101 = por %p99, %p100
      %s103 = sadd.s32 %s102, 1
      %p106 = scmp.eq.s32.totalorder %s26, 1
      %p107 = scmp.ne.s32.totalorder %s102, %s104
      %p108 = scmp.eq.s32.totalorder %s26, 0
      %p109 = por %p107, %p108
      %p110 = scmp.ne.s32.totalorder %s102, %s104
      %p111 = scmp.eq.s32.totalorder %s31, 1
      %p112 = por %p110, %p111
      %p113 = scmp.ne.s32.totalorder %s104, %s105
      %p114 = scmp.eq.s32.totalorder %s31, 0
      %p115 = por %p113, %p114
      %p116 = scmp.ne.s32.totalorder %s104, %s105
      %p117 = scmp.eq.s32.totalorder %s32, 1
      %p118 = por %p116, %p117
      %p120 = scmp.ne.s32.totalorder %s105, %s119
      %p121 = scmp.eq.s32.totalorder %s32, 0
      %p122 = por %p120, %p121
      %s124 = sadd.s32 %s123, 1
      %p127 = scmp.eq.s32.totalorder %s26, 1
      %p128 = scmp.ne.s32.totalorder %s123, %s125
      %p129 = scmp.eq.s32.totalorder %s26, 0
      %p130 = por %p128, %p129
      %p131 = scmp.ne.s32.totalorder %s123, %s125
      %p132 = scmp.eq.s32.totalorder %s31, 1
      %p133 = por %p131, %p132
      %p134 = scmp.ne.s32.totalorder %s125, %s126
      %p135 = scmp.eq.s32.totalorder %s31, 0
      %p136 = por %p134, %p135
      %p137 = scmp.ne.s32.totalorder %s125, %s126
      %p138 = scmp.eq.s32.totalorder %s32, 1
      %p139 = por %p137, %p138
      %p141 = scmp.ne.s32.totalorder %s126, %s140
      %p142 = scmp.eq.s32.totalorder %s32, 0
      %p143 = por %p141, %p142
      %s145 = sadd.s32 %s144, 1
      %p148 = scmp.eq.s32.totalorder %s26, 1
      %p149 = scmp.ne.s32.totalorder %s144, %s146
      %p150 = scmp.eq.s32.totalorder %s26, 0
      %p151 = por %p149, %p150
      %p152 = scmp.ne.s32.totalorder %s144, %s146
      %p153 = scmp.eq.s32.totalorder %s31, 1
      %p154 = por %p152, %p153
      %p155 = scmp.ne.s32.totalorder %s146, %s147
      %p156 = scmp.eq.s32.totalorder %s31, 0
      %p157 = por %p155, %p156
      %p158 = scmp.ne.s32.totalorder %s146, %s147
      %p159 = scmp.eq.s32.totalorder %s32, 1
      %p160 = por %p158, %p159
      %p162 = scmp.ne.s32.totalorder %s147, %s161
      %p163 = scmp.eq.s32.totalorder %s32, 0
      %p164 = por %p162, %p163
      %s166 = sadd.s32 %s165, 1
      %p169 = scmp.eq.s32.totalorder %s26, 1
      %p170 = scmp.ne.s32.totalorder %s165, %s167
      %p171 = scmp.eq.s32.totalorder %s26, 0
      %p172 = por %p170, %p171
      %p173 = scmp.ne.s32.totalorder %s165, %s167
      %p174 = scmp.eq.s32.totalorder %s31, 1
      %p175 = por %p173, %p174
      %p176 = scmp.ne.s32.totalorder %s167, %s168
      %p177 = scmp.eq.s32.totalorder %s31, 0
      %p178 = por %p176, %p177
      %p179 = scmp.ne.s32.totalorder %s167, %s168
      %p180 = scmp.eq.s32.totalorder %s32, 1
      %p181 = por %p179, %p180
      %p183 = scmp.ne.s32.totalorder %s168, %s182
      %p184 = scmp.eq.s32.totalorder %s32, 0
      %p185 = por %p183, %p184
      %s187 = sadd.s32 %s186, 1
      %p190 = scmp.eq.s32.totalorder %s26, 1
      %p191 = scmp.ne.s32.totalorder %s186, %s188
      %p192 = scmp.eq.s32.totalorder %s26, 0
      %p193 = por %p191, %p192
      %p194 = scmp.ne.s32.totalorder %s186, %s188
      %p195 = scmp.eq.s32.totalorder %s31, 1
      %p196 = por %p194, %p195
      %p197 = scmp.ne.s32.totalorder %s188, %s189
      %p198 = scmp.eq.s32.totalorder %s31, 0
      %p199 = por %p197, %p198
      %p200 = scmp.ne.s32.totalorder %s188, %s189
      %p201 = scmp.eq.s32.totalorder %s32, 1
      %p202 = por %p200, %p201
      %p204 = scmp.ne.s32.totalorder %s189, %s203
      %p205 = scmp.eq.s32.totalorder %s32, 0
      %p206 = por %p204, %p205
      %s208 = sadd.s32 %s207, 1
      %p211 = scmp.eq.s32.totalorder %s26, 1
      %p212 = scmp.ne.s32.totalorder %s207, %s209
      %p213 = scmp.eq.s32.totalorder %s26, 0
      %p214 = por %p212, %p213
      %p215 = scmp.ne.s32.totalorder %s207, %s209
      %p216 = scmp.eq.s32.totalorder %s31, 1
      %p217 = por %p215, %p216
      %p218 = scmp.ne.s32.totalorder %s209, %s210
      %p219 = scmp.eq.s32.totalorder %s31, 0
      %p220 = por %p218, %p219
      %p221 = scmp.ne.s32.totalorder %s209, %s210
      %p222 = scmp.eq.s32.totalorder %s32, 1
      %p223 = por %p221, %p222
      %p225 = scmp.ne.s32.totalorder %s210, %s224
      %p226 = scmp.eq.s32.totalorder %s32, 0
      %p227 = por %p225, %p226
      %s229 = sadd.s32 %s228, 1
      %p232 = scmp.eq.s32.totalorder %s26, 1
      %p233 = scmp.ne.s32.totalorder %s228, %s230
      %p234 = scmp.eq.s32.totalorder %s26, 0
      %p235 = por %p233, %p234
      %p236 = scmp.ne.s32.totalorder %s228, %s230
      %p237 = scmp.eq.s32.totalorder %s31, 1
      %p238 = por %p236, %p237
      %p239 = scmp.ne.s32.totalorder %s230, %s231
      %p240 = scmp.eq.s32.totalorder %s31, 0
      %p241 = por %p239, %p240
      %p242 = scmp.ne.s32.totalorder %s230, %s231
      %p243 = scmp.eq.s32.totalorder %s32, 1
      %p244 = por %p242, %p243
      %p246 = scmp.ne.s32.totalorder %s231, %s245
      %p247 = scmp.eq.s32.totalorder %s32, 0
      %p248 = por %p246, %p247
      %s250 = sadd.s32 %s249, 1
      %p253 = scmp.eq.s32.totalorder %s26, 1
      %p254 = scmp.ne.s32.totalorder %s249, %s251
      %p255 = scmp.eq.s32.totalorder %s26, 0
      %p256 = por %p254, %p255
      %p257 = scmp.ne.s32.totalorder %s249, %s251
      %p258 = scmp.eq.s32.totalorder %s31, 1
      %p259 = por %p257, %p258
      %p260 = scmp.ne.s32.totalorder %s251, %s252
      %p261 = scmp.eq.s32.totalorder %s31, 0
      %p262 = por %p260, %p261
      %p263 = scmp.ne.s32.totalorder %s251, %s252
      %p264 = scmp.eq.s32.totalorder %s32, 1
      %p265 = por %p263, %p264
      %p267 = scmp.ne.s32.totalorder %s252, %s266
      %p268 = scmp.eq.s32.totalorder %s32, 0
      %p269 = por %p267, %p268
      %s271 = sadd.s32 %s270, 1
      %p274 = scmp.eq.s32.totalorder %s26, 1
      %p275 = scmp.ne.s32.totalorder %s270, %s272
      %p276 = scmp.eq.s32.totalorder %s26, 0
      %p277 = por %p275, %p276
      %p278 = scmp.ne.s32.totalorder %s270, %s272
      %p279 = scmp.eq.s32.totalorder %s31, 1
      %p280 = por %p278, %p279
      %p281 = scmp.ne.s32.totalorder %s272, %s273
      %p282 = scmp.eq.s32.totalorder %s31, 0
      %p283 = por %p281, %p282
      %p284 = scmp.ne.s32.totalorder %s272, %s273
      %p285 = scmp.eq.s32.totalorder %s32, 1
      %p286 = por %p284, %p285
      %p288 = scmp.ne.s32.totalorder %s273, %s287
      %p289 = scmp.eq.s32.totalorder %s32, 0
      %p290 = por %p288, %p289
      %s292 = sadd.s32 %s291, 1
      %p295 = scmp.eq.s32.totalorder %s26, 1
      %p296 = scmp.ne.s32.totalorder %s291, %s293
      %p297 = scmp.eq.s32.totalorder %s26, 0
      %p298 = por %p296, %p297
      %p299 = scmp.ne.s32.totalorder %s291, %s293
      %p300 = scmp.eq.s32.totalorder %s31, 1
      %p301 = por %p299, %p300
      %p302 = scmp.ne.s32.totalorder %s293, %s294
      %p303 = scmp.eq.s32.totalorder %s31, 0
      %p304 = por %p302, %p303
      %p305 = scmp.ne.s32.totalorder %s293, %s294
      %p306 = scmp.eq.s32.totalorder %s32, 1
      %p307 = por %p305, %p306
      %p309 = scmp.ne.s32.totalorder %s294, %s308
      %p310 = scmp.eq.s32.totalorder %s32, 0
      %p311 = por %p309, %p310
      %s313 = sadd.s32 %s312, 1
      %p316 = scmp.eq.s32.totalorder %s26, 1
      %p317 = scmp.ne.s32.totalorder %s312, %s314
      %p318 = scmp.eq.s32.totalorder %s26, 0
      %p319 = por %p317, %p318
      %p320 = scmp.ne.s32.totalorder %s312, %s314
      %p321 = scmp.eq.s32.totalorder %s31, 1
      %p322 = por %p320, %p321
      %p323 = scmp.ne.s32.totalorder %s314, %s315
      %p324 = scmp.eq.s32.totalorder %s31, 0
      %p325 = por %p323, %p324
      %p326 = scmp.ne.s32.totalorder %s314, %s315
      %p327 = scmp.eq.s32.totalorder %s32, 1
      %p328 = por %p326, %p327
      %p330 = scmp.ne.s32.totalorder %s315, %s329
      %p331 = scmp.eq.s32.totalorder %s32, 0
      %p332 = por %p330, %p331
      %s334 = sadd.s32 %s333, 1
      %p337 = scmp.eq.s32.totalorder %s26, 1
      %p338 = scmp.ne.s32.totalorder %s333, %s335
      %p339 = scmp.eq.s32.totalorder %s26, 0
      %p340 = por %p338, %p339
      %p341 = scmp.ne.s32.totalorder %s333, %s335
      %p342 = scmp.eq.s32.totalorder %s31, 1
      %p343 = por %p341, %p342
      %p344 = scmp.ne.s32.totalorder %s335, %s336
      %p345 = scmp.eq.s32.totalorder %s31, 0
      %p346 = por %p344, %p345
      %p347 = scmp.ne.s32.totalorder %s335, %s336
      %p348 = scmp.eq.s32.totalorder %s32, 1
      %p349 = por %p347, %p348
      %p351 = scmp.ne.s32.totalorder %s336, %s350
      %p352 = scmp.eq.s32.totalorder %s32, 0
      %p353 = por %p351, %p352
      %s354 = ssub.s32 %s26, %s33
      %p355 = scmp.eq.s32.totalorder %s354, 0
      %s357 = sadd.s32 %s356, 1
      %s358 = scalar_select %p355, %s356, %s357
      %p361 = pneg %p355
      %p362 = scmp.eq.s32.totalorder %s26, 1
      %p363 = por %p361, %p362
      %p364 = scmp.ne.s32.totalorder %s356, %s359
      %p365 = scmp.eq.s32.totalorder %s26, 0
      %p366 = por %p364, %p365
      %p367 = scmp.ne.s32.totalorder %s356, %s359
      %p368 = scmp.eq.s32.totalorder %s31, 1
      %p369 = por %p367, %p368
      %p370 = scmp.ne.s32.totalorder %s359, %s360
      %p371 = scmp.eq.s32.totalorder %s31, 0
      %p372 = por %p370, %p371
      %p373 = scmp.ne.s32.totalorder %s359, %s360
      %p374 = scmp.eq.s32.totalorder %s32, 1
      %p375 = por %p373, %p374
      %p377 = scmp.ne.s32.totalorder %s360, %s376
      %p378 = scmp.eq.s32.totalorder %s32, 0
      %p379 = por %p377, %p378
      %p380 = scmp.le.s32.totalorder 1, %s26
      %p381 = scmp.lt.s32.totalorder %s26, 3
      %p382 = pnand %p380, %p381
      %p383 = pneg %p382
      // Predicated region
      $region9: #{forward.1} parent=5 // pred_check
        _
      $region10: #{forward.1} parent=5 // pred_check_branch
        %385 = sbr.rel (%p382) target = $region12
      $region11: #{forward.1} parent=5 // pred_region
        %s386 = ssub.s32 %s26, 1
        // Predicated region
        $region13: #{forward.1} parent=11 // pred_check
          %p387 = pneg %p73
        $region14: #{forward.1} parent=11 // pred_check_branch
          %389 = sbr.rel (%p387) target = $region16
        $region15: #{forward.1} parent=11 // pred_region
          %s391 = ssub.s32 384, 384
          %392 = vsyncadd [#allocation3], %s391
          %s393 = sshll.u32 [#allocation2], 4
          %s394 = int_to_ptr.vmem [resolvable:$true] %s393
          %399 = dma.hbm_to_vmem [thread:$0]  %s1, 384, %s394, [#allocation3], 128, 128, 8
        $region16: #{forward.1} parent=11 // pred_fallthru
          _
        // Predicated region
        $region17: #{forward.1} parent=11 // pred_check
          %p400 = pneg %p94
        $region18: #{forward.1} parent=11 // pred_check_branch
          %402 = sbr.rel (%p400) target = $region20
        $region19: #{forward.1} parent=11 // pred_region
          %s404 = ssub.s32 16, 16
          %405 = vsyncadd [#allocation5], %s404
          %s407 = sshll.u32 [#allocation4], 4
          %s408 = int_to_ptr.vmem [resolvable:$true] %s407
          %410 = dma.hbm_to_vmem [thread:$0]  %s2, 16, %s408, [#allocation5]
        $region20: #{forward.1} parent=11 // pred_fallthru
          _
        // Predicated region
        $region21: #{forward.1} parent=11 // pred_check
          %p411 = pneg %p115
        $region22: #{forward.1} parent=11 // pred_check_branch
          %413 = sbr.rel (%p411) target = $region24
        $region23: #{forward.1} parent=11 // pred_region
          %s415 = ssub.s32 512, 512
          %416 = vsyncadd [#allocation5], %s415
          %s417 = sshll.u32 [#allocation6], 4
          %s418 = int_to_ptr.vmem [resolvable:$true] %s417
          %423 = dma.hbm_to_vmem [thread:$0]  %s3, 512, %s418, [#allocation5], 128, 128, 8
        $region24: #{forward.1} parent=11 // pred_fallthru
          _
        // Predicated region
        $region25: #{forward.1} parent=11 // pred_check
          %p424 = pneg %p136
        $region26: #{forward.1} parent=11 // pred_check_branch
          %426 = sbr.rel (%p424) target = $region28
        $region27: #{forward.1} parent=11 // pred_region
          %s428 = ssub.s32 32768, 32768
          %429 = vsyncadd [#allocation8], %s428
          %s430 = sshll.u32 [#allocation7], 4
          %s431 = int_to_ptr.vmem [resolvable:$true] %s430
          %436 = dma.hbm_to_vmem [thread:$0]  %s4, 32768, %s431, [#allocation8], 128, 128, 8
        $region28: #{forward.1} parent=11 // pred_fallthru
          _
        // Predicated region
        $region29: #{forward.1} parent=11 // pred_check
          %p437 = pneg %p157
        $region30: #{forward.1} parent=11 // pred_check_branch
          %439 = sbr.rel (%p437) target = $region32
        $region31: #{forward.1} parent=11 // pred_region
          %s441 = ssub.s32 512, 512
          %442 = vsyncadd [#allocation8], %s441
          %s443 = sshll.u32 [#allocation9], 4
          %s444 = int_to_ptr.vmem [resolvable:$true] %s443
          %449 = dma.hbm_to_vmem [thread:$0]  %s5, 512, %s444, [#allocation8], 128, 128, 8
        $region32: #{forward.1} parent=11 // pred_fallthru
          _
        // Predicated region
        $region33: #{forward.1} parent=11 // pred_check
          %p450 = pneg %p178
        $region34: #{forward.1} parent=11 // pred_check_branch
          %452 = sbr.rel (%p450) target = $region36
        $region35: #{forward.1} parent=11 // pred_region
          _
        $region36: #{forward.1} parent=11 // pred_fallthru
          _
        // Predicated region
        $region37: #{forward.1} parent=11 // pred_check
          %p453 = pneg %p199
        $region38: #{forward.1} parent=11 // pred_check_branch
          %455 = sbr.rel (%p453) target = $region40
        $region39: #{forward.1} parent=11 // pred_region
          %s457 = ssub.s32 1024, 1024
          %458 = vsyncadd [#allocation11], %s457
          %s459 = sshll.u32 [#allocation10], 4
          %s460 = int_to_ptr.vmem [resolvable:$true] %s459
          %465 = dma.hbm_to_vmem [thread:$0]  %s7, 1024, %s460, [#allocation11], 128, 128, 8
        $region40: #{forward.1} parent=11 // pred_fallthru
          _
        // Predicated region
        $region41: #{forward.1} parent=11 // pred_check
          %p466 = pneg %p220
        $region42: #{forward.1} parent=11 // pred_check_branch
          %468 = sbr.rel (%p466) target = $region44
        $region43: #{forward.1} parent=11 // pred_region
          _
        $region44: #{forward.1} parent=11 // pred_fallthru
          _
        // Predicated region
        $region45: #{forward.1} parent=11 // pred_check
          %p469 = pneg %p241
        $region46: #{forward.1} parent=11 // pred_check_branch
          %471 = sbr.rel (%p469) target = $region48
        $region47: #{forward.1} parent=11 // pred_region
          %s473 = ssub.s32 2048, 2048
          %474 = vsyncadd [#allocation11], %s473
          %s475 = sshll.u32 [#allocation12], 4
          %s476 = int_to_ptr.vmem [resolvable:$true] %s475
          %481 = dma.hbm_to_vmem [thread:$0]  %s9, 2048, %s476, [#allocation11], 128, 128, 8
        $region48: #{forward.1} parent=11 // pred_fallthru
          _
        // Predicated region
        $region49: #{forward.1} parent=11 // pred_check
          %p482 = pneg %p262
        $region50: #{forward.1} parent=11 // pred_check_branch
          %484 = sbr.rel (%p482) target = $region52
        $region51: #{forward.1} parent=11 // pred_region
          _
        $region52: #{forward.1} parent=11 // pred_fallthru
          _
        // Predicated region
        $region53: #{forward.1} parent=11 // pred_check
          %p485 = pneg %p283
        $region54: #{forward.1} parent=11 // pred_check_branch
          %487 = sbr.rel (%p485) target = $region56
        $region55: #{forward.1} parent=11 // pred_region
          %s489 = ssub.s32 2048, 2048
          %490 = vsyncadd [#allocation14], %s489
          %s491 = sshll.u32 [#allocation13], 4
          %s492 = int_to_ptr.vmem [resolvable:$true] %s491
          %497 = dma.hbm_to_vmem [thread:$0]  %s11, 2048, %s492, [#allocation14], 128, 128, 8
        $region56: #{forward.1} parent=11 // pred_fallthru
          _
        // Predicated region
        $region57: #{forward.1} parent=11 // pred_check
          %p498 = pneg %p304
        $region58: #{forward.1} parent=11 // pred_check_branch
          %500 = sbr.rel (%p498) target = $region60
        $region59: #{forward.1} parent=11 // pred_region
          _
        $region60: #{forward.1} parent=11 // pred_fallthru
          _
        // Predicated region
        $region61: #{forward.1} parent=11 // pred_check
          %p501 = pneg %p325
        $region62: #{forward.1} parent=11 // pred_check_branch
          %503 = sbr.rel (%p501) target = $region64
        $region63: #{forward.1} parent=11 // pred_region
          _
        $region64: #{forward.1} parent=11 // pred_fallthru
          _
        // Predicated region
        $region65: #{forward.1} parent=11 // pred_check
          %p504 = pneg %p346
        $region66: #{forward.1} parent=11 // pred_check_branch
          %506 = sbr.rel (%p504) target = $region68
        $region67: #{forward.1} parent=11 // pred_region
          _
        $region68: #{forward.1} parent=11 // pred_fallthru
          _
      $region12: #{forward.1} parent=5 // pred_fallthru
        _
      %p507 = scmp.lt.s32.totalorder %s26, 2
      // Predicated region
      $region69: #{forward.1} parent=5 // pred_check
        %p508 = pneg %p507
      $region70: #{forward.1} parent=5 // pred_check_branch
        %510 = sbr.rel (%p508) target = $region72
      $region71: #{forward.1} parent=5 // pred_region
        // Predicated region
        $region73: #{forward.1} parent=71 // pred_check
          %p511 = pneg %p46
        $region74: #{forward.1} parent=71 // pred_check_branch
          %513 = sbr.rel (%p511) target = $region76
        $region75: #{forward.1} parent=71 // pred_region
          %s514 = smul.u32 4, %s26
          %p515 = scmp.lt.s32.totalorder %s514, 7
          %s516 = scalar_select %p515, %s514, 7
          %s517 = smul.addr %s516, 8
          %s518 = scalar_lea.vmem %s0, %s517
          %s519 = smul.u32 4, %s26
        $region76: #{forward.1} parent=71 // pred_fallthru
          _
      $region72: #{forward.1} parent=5 // pred_fallthru
        _
      %p520 = scmp.le.s32.totalorder 1, %s26
      %p521 = scmp.lt.s32.totalorder %s26, 3
      %p522 = pnand %p520, %p521
      %p523 = pneg %p522
      // Predicated region
      $region77: #{forward.1} parent=5 // pred_check
        _
      $region78: #{forward.1} parent=5 // pred_check_branch
        %525 = sbr.rel (%p522) target = $region80
      $region79: #{forward.1} parent=5 // pred_region
        %s526 = ssub.s32 %s26, 1
        // Predicated region
        $region81: #{forward.1} parent=79 // pred_check
          %p527 = pneg %p73
        $region82: #{forward.1} parent=79 // pred_check_branch
          %529 = sbr.rel (%p527) target = $region84
        $region83: #{forward.1} parent=79 // pred_region
          %530 = dma.done [#allocation3], 384
        $region84: #{forward.1} parent=79 // pred_fallthru
          _
        // Predicated region
        $region85: #{forward.1} parent=79 // pred_check
          %p531 = pneg %p94
        $region86: #{forward.1} parent=79 // pred_check_branch
          %533 = sbr.rel (%p531) target = $region88
        $region87: #{forward.1} parent=79 // pred_region
          %534 = dma.done [#allocation5], 16
        $region88: #{forward.1} parent=79 // pred_fallthru
          _
        // Predicated region
        $region89: #{forward.1} parent=79 // pred_check
          %p535 = pneg %p115
        $region90: #{forward.1} parent=79 // pred_check_branch
          %537 = sbr.rel (%p535) target = $region92
        $region91: #{forward.1} parent=79 // pred_region
          %538 = dma.done [#allocation5], 512
        $region92: #{forward.1} parent=79 // pred_fallthru
          _
        // Predicated region
        $region93: #{forward.1} parent=79 // pred_check
          %p539 = pneg %p136
        $region94: #{forward.1} parent=79 // pred_check_branch
          %541 = sbr.rel (%p539) target = $region96
        $region95: #{forward.1} parent=79 // pred_region
          %542 = dma.done [#allocation8], 32768
        $region96: #{forward.1} parent=79 // pred_fallthru
          _
        // Predicated region
        $region97: #{forward.1} parent=79 // pred_check
          %p543 = pneg %p157
        $region98: #{forward.1} parent=79 // pred_check_branch
          %545 = sbr.rel (%p543) target = $region100
        $region99: #{forward.1} parent=79 // pred_region
          %546 = dma.done [#allocation8], 512
        $region100: #{forward.1} parent=79 // pred_fallthru
          _
        // Predicated region
        $region101: #{forward.1} parent=79 // pred_check
          %p547 = pneg %p199
        $region102: #{forward.1} parent=79 // pred_check_branch
          %549 = sbr.rel (%p547) target = $region104
        $region103: #{forward.1} parent=79 // pred_region
          %550 = dma.done [#allocation11], 1024
        $region104: #{forward.1} parent=79 // pred_fallthru
          _
        // Predicated region
        $region105: #{forward.1} parent=79 // pred_check
          %p551 = pneg %p241
        $region106: #{forward.1} parent=79 // pred_check_branch
          %553 = sbr.rel (%p551) target = $region108
        $region107: #{forward.1} parent=79 // pred_region
          %554 = dma.done [#allocation11], 2048
        $region108: #{forward.1} parent=79 // pred_fallthru
          _
        // Predicated region
        $region109: #{forward.1} parent=79 // pred_check
          %p555 = pneg %p283
        $region110: #{forward.1} parent=79 // pred_check_branch
          %557 = sbr.rel (%p555) target = $region112
        $region111: #{forward.1} parent=79 // pred_region
          %558 = dma.done [#allocation14], 2048
        $region112: #{forward.1} parent=79 // pred_fallthru
          _
        %s559 = smul.u32 4, %s31
        %p560 = scmp.lt.s32.totalorder %s559, 7
        %s561 = scalar_select %p560, %s559, 7
        %s562 = smul.addr %s561, 8
        %s563 = scalar_lea.vmem %s0, %s562
        %p564 = pneg %p52
        %p565 = pneg %p49
        %p566 = pneg %p73
        %p567 = pneg %p70
        %p568 = pneg %p94
        %p569 = pneg %p91
        %p570 = pneg %p115
        %p571 = pneg %p112
        %p572 = pneg %p136
        %p573 = pneg %p133
        %p574 = pneg %p157
        %p575 = pneg %p154
        %p576 = pneg %p178
        %p577 = pneg %p175
        %p578 = pneg %p199
        %p579 = pneg %p196
        %p580 = pneg %p220
        %p581 = pneg %p217
        %p582 = pneg %p241
        %p583 = pneg %p238
        %p584 = pneg %p262
        %p585 = pneg %p259
        %p586 = pneg %p283
        %p587 = pneg %p280
        %p588 = pneg %p304
        %p589 = pneg %p301
        %p590 = pneg %p325
        %p591 = pneg %p322
        %p592 = pneg %p346
        %p593 = pneg %p343
        %p594 = pneg %p372
        %p595 = pneg %p369
        %s596 = smul.u32 4, %s31
        %p597 = scmp.lt.s32.totalorder %s596, 7
        %s598 = scalar_select %p597, %s596, 7
        %s599 = smul.addr %s598, 8
        %s600 = scalar_lea.vmem %s15, %s599
        %s601 = smul.u32 4, %s31
        %p602 = scmp.lt.s32.totalorder %s601, 7
        %s603 = scalar_select %p602, %s601, 7
        %s604 = smul.addr %s603, 8
        %s605 = scalar_lea.vmem %s0, %s604
        %s606 = smul.u32 4, %s31
        %s607 = smul.u32 4, %s31
        %p608 = scmp.lt.s32.totalorder %s607, 7
        %s609 = scalar_select %p608, %s607, 7
        %s610 = smul.addr %s609, 8
        %s611 = scalar_lea.vmem %s15, %s610
        %s612 = smul.u32 4, %s31
        %v613 = vld [vmem:[%s605] sm:$0xff]
        %v614 = vld [vmem:[%s605 + $0x8] sm:$0xff]
        %v615 = vld [vmem:[%s605 + $0x10] sm:$0xff]
        %v616 = vld [vmem:[%s605 + $0x18] sm:$0xff]
        %v617 = vld [vmem:[#allocation2] sm:$0xff]
        %v618 = vld [vmem:[#allocation2 + $0x8] sm:$0xff]
        %v619 = vld [vmem:[#allocation2 + $0x10] sm:$0x3f]
        %v620 = vld [vmem:[#allocation4] sm:$0x1]
        %v622 = vlaneseq
        %v623 = vshrl.u32 %v622, 7
        %v624 = vsub.s32 0, %v623
        %v625 = vrot.slane %v620, %v624
        %vm627 = vcmask 179200
        %v629 = vsel %vm627, %v613, 0
        %v632 = vsel %vm627, %v614, 0
        %v635 = vsel %vm627, %v615, 0
        %v638 = vsel %vm627, %v616, 0
        %vm640 = vcmask 1045504
        %v642 = vsel %vm640, %v619, 0
        %644 = vmatprep.subr.mxu0 0.0
        %645 = vmatpush1.msra.mxu0 %v617
        %646 = vmatprep.subr.mxu0 0.0
        %647 = vmatpush1.msra.mxu0 %v618
        %648 = vmatprep.subr.mxu0 0.0
        %649 = vmatpush1.msra.mxu0 %v642
        %650 = vmatprep.subr.mxu0 0.0
        %651 = vmatpush1.msra.mxu0 0.0
        %652 = vmatprep.subr.mxu0 0.0
        %653 = vmatpush1.msra.mxu0 0.0
        %654 = vmatprep.subr.mxu0 0.0
        %655 = vmatpush1.msra.mxu0 0.0
        %656 = vmatprep.subr.mxu0 0.0
        %657 = vmatpush1.msra.mxu0 0.0
        %658 = vmatprep.subr.mxu0 0.0
        %659 = vmatpush1.msra.mxu0 0.0
        %660 = vmatprep.subr.mxu0 0.0
        %661 = vmatpush1.msra.mxu0 0.0
        %662 = vmatprep.subr.mxu0 0.0
        %663 = vmatpush1.msra.mxu0 0.0
        %664 = vmatprep.subr.mxu0 0.0
        %665 = vmatpush1.msra.mxu0 0.0
        %666 = vmatprep.subr.mxu0 0.0
        %667 = vmatpush1.msra.mxu0 0.0
        %668 = vmatprep.subr.mxu0 0.0
        %669 = vmatpush1.msra.mxu0 0.0
        %670 = vmatprep.subr.mxu0 0.0
        %671 = vmatpush1.msra.mxu0 0.0
        %672 = vmatprep.subr.mxu0 0.0
        %673 = vmatpush1.msra.mxu0 0.0
        %674 = vmatprep.subr.mxu0 0.0
        %675 = vmatpush1.msra.mxu0 0.0
        %676 = vmatprep.subr.mxu0 0.0
        %677 = vmatpush1.msra.mxu0 0.0
        %678 = vmatprep.subr.mxu0 0.0
        %679 = vmatpush1.msra.mxu0 0.0
        %680 = vmatprep.subr.mxu0 0.0
        %681 = vmatpush1.msra.mxu0 0.0
        %682 = vmatprep.subr.mxu0 0.0
        %683 = vmatpush1.msra.mxu0 0.0
        %684 = vmatprep.subr.mxu0 0.0
        %685 = vmatpush1.msra.mxu0 0.0
        %686 = vmatprep.subr.mxu0 0.0
        %687 = vmatpush1.msra.mxu0 0.0
        %688 = vmatprep.subr.mxu0 0.0
        %689 = vmatpush1.msra.mxu0 0.0
        %690 = vmatprep.subr.mxu0 0.0
        %691 = vmatpush1.msra.mxu0 0.0
        %692 = vmatprep.subr.mxu0 0.0
        %693 = vmatpush1.msra.mxu0 0.0
        %694 = vmatprep.subr.mxu0 0.0
        %695 = vmatpush1.msra.mxu0 0.0
        %696 = vmatprep.subr.mxu0 0.0
        %697 = vmatpush1.msra.mxu0 0.0
        %698 = vmatprep.subr.mxu0 0.0
        %699 = vmatpush1.msra.mxu0 0.0
        %700 = vmatprep.subr.mxu0 0.0
        %701 = vmatpush1.msra.mxu0 0.0
        %702 = vmatprep.subr.mxu0 0.0
        %703 = vmatpush1.msra.mxu0 0.0
        %704 = vmatprep.subr.mxu0 0.0
        %705 = vmatpush1.msra.mxu0 0.0
        %706 = vmatprep.subr.mxu0 0.0
        %707 = vmatpush1.msra.mxu0 0.0
        %708 = vmatprep.mubr.f32.mxu0 0.0
        %709 = vmatmul.mubr.f32.gmra.mrb[0].mxu0 %v629
        %v710 = vpop.f32.mrb[0].mxu0
        %v711 = vadd.f32 %v625, %v710
        %v712 = vpop.f32.mrb[0].mxu0
        %713 = vmatprep.mubr.f32.mxu0 0.0
        %714 = vmatmul.mubr.f32.gmra.mrb[0].mxu0 %v632
        %v715 = vpop.f32.mrb[0].mxu0
        %v716 = vadd.f32 %v625, %v715
        %v717 = vpop.f32.mrb[0].mxu0
        %718 = vmatprep.mubr.f32.mxu0 0.0
        %719 = vmatmul.mubr.f32.gmra.mrb[0].mxu0 %v635
        %v720 = vpop.f32.mrb[0].mxu0
        %v721 = vadd.f32 %v625, %v720
        %v722 = vpop.f32.mrb[0].mxu0
        %723 = vmatprep.mubr.f32.mxu0 0.0
        %724 = vmatmul.mubr.f32.gmra.mrb[0].mxu0 %v638
        %v725 = vpop.f32.mrb[0].mxu0
        %v726 = vadd.f32 %v625, %v725
        %v727 = vpop.f32.mrb[0].mxu0
        %728 = vdwg.mxu0
        %v729 = vld [vmem:[#allocation6] sm:$0xff]
        %v730 = vld [vmem:[#allocation6 + $0x8] sm:$0xff]
        %v731 = vld [vmem:[#allocation6 + $0x10] sm:$0xff]
        %v732 = vld [vmem:[#allocation6 + $0x18] sm:$0xff]
        %vm733 = vcmask 261120
        %v735 = vsel %vm733, %v729, 0
        %v738 = vsel %vm733, %v730, 0
        %v741 = vsel %vm733, %v731, 0
        %v744 = vsel %vm733, %v732, 0
        %746 = vmatprep.subr.mxu0 0.0
        %747 = vmatpush1.msra.mxu0 %v711
        %748 = vmatprep.subr.mxu0 0.0
        %749 = vmatpush1.msra.mxu0 %v716
        %750 = vmatprep.subr.mxu0 0.0
        %751 = vmatpush1.msra.mxu0 %v721
        %752 = vmatprep.subr.mxu0 0.0
        %753 = vmatpush1.msra.mxu0 %v726
        %754 = vmatprep.subr.mxu0 0.0
        %755 = vmatpush1.msra.mxu0 0.0
        %756 = vmatprep.subr.mxu0 0.0
        %757 = vmatpush1.msra.mxu0 0.0
        %758 = vmatprep.subr.mxu0 0.0
        %759 = vmatpush1.msra.mxu0 0.0
        %760 = vmatprep.subr.mxu0 0.0
        %761 = vmatpush1.msra.mxu0 0.0
        %762 = vmatprep.subr.mxu0 0.0
        %763 = vmatpush1.msra.mxu0 0.0
        %764 = vmatprep.subr.mxu0 0.0
        %765 = vmatpush1.msra.mxu0 0.0
        %766 = vmatprep.subr.mxu0 0.0
        %767 = vmatpush1.msra.mxu0 0.0
        %768 = vmatprep.subr.mxu0 0.0
        %769 = vmatpush1.msra.mxu0 0.0
        %770 = vmatprep.subr.mxu0 0.0
        %771 = vmatpush1.msra.mxu0 0.0
        %772 = vmatprep.subr.mxu0 0.0
        %773 = vmatpush1.msra.mxu0 0.0
        %774 = vmatprep.subr.mxu0 0.0
        %775 = vmatpush1.msra.mxu0 0.0
        %776 = vmatprep.subr.mxu0 0.0
        %777 = vmatpush1.msra.mxu0 0.0
        %778 = vmatprep.subr.mxu0 0.0
        %779 = vmatpush1.msra.mxu0 0.0
        %780 = vmatprep.subr.mxu0 0.0
        %781 = vmatpush1.msra.mxu0 0.0
        %782 = vmatprep.subr.mxu0 0.0
        %783 = vmatpush1.msra.mxu0 0.0
        %784 = vmatprep.subr.mxu0 0.0
        %785 = vmatpush1.msra.mxu0 0.0
        %786 = vmatprep.subr.mxu0 0.0
        %787 = vmatpush1.msra.mxu0 0.0
        %788 = vmatprep.subr.mxu0 0.0
        %789 = vmatpush1.msra.mxu0 0.0
        %790 = vmatprep.subr.mxu0 0.0
        %791 = vmatpush1.msra.mxu0 0.0
        %792 = vmatprep.subr.mxu0 0.0
        %793 = vmatpush1.msra.mxu0 0.0
        %794 = vmatprep.subr.mxu0 0.0
        %795 = vmatpush1.msra.mxu0 0.0
        %796 = vmatprep.subr.mxu0 0.0
        %797 = vmatpush1.msra.mxu0 0.0
        %798 = vmatprep.subr.mxu0 0.0
        %799 = vmatpush1.msra.mxu0 0.0
        %800 = vmatprep.subr.mxu0 0.0
        %801 = vmatpush1.msra.mxu0 0.0
        %802 = vmatprep.subr.mxu0 0.0
        %803 = vmatpush1.msra.mxu0 0.0
        %804 = vmatprep.subr.mxu0 0.0
        %805 = vmatpush1.msra.mxu0 0.0
        %806 = vmatprep.subr.mxu0 0.0
        %807 = vmatpush1.msra.mxu0 0.0
        %808 = vmatprep.subr.mxu0 0.0
        %809 = vmatpush1.msra.mxu0 0.0
        %810 = vmatprep.mubr.f32.mxu0 0.0
        %811 = vmatmul.mubr.f32.gmra.mrb[0].mxu0 %v735
        %v812 = vpop.f32.mrb[0].mxu0
        %v813 = vadd.f32 0.0, %v812
        %v814 = vpop.f32.mrb[0].mxu0
        %815 = vmatprep.mubr.f32.mxu0 0.0
        %816 = vmatmul.mubr.f32.gmra.mrb[0].mxu0 %v738
        %v817 = vpop.f32.mrb[0].mxu0
        %v818 = vadd.f32 0.0, %v817
        %v819 = vpop.f32.mrb[0].mxu0
        %820 = vmatprep.mubr.f32.mxu0 0.0
        %821 = vmatmul.mubr.f32.gmra.mrb[0].mxu0 %v741
        %v822 = vpop.f32.mrb[0].mxu0
        %v823 = vadd.f32 0.0, %v822
        %v824 = vpop.f32.mrb[0].mxu0
        %825 = vmatprep.mubr.f32.mxu0 0.0
        %826 = vmatmul.mubr.f32.gmra.mrb[0].mxu0 %v744
        %v827 = vpop.f32.mrb[0].mxu0
        %v828 = vadd.f32 0.0, %v827
        %v829 = vpop.f32.mrb[0].mxu0
        %830 = vdwg.mxu0
        %833 = vrot.lane.b32.xlu0 %v823, 64
        %v834 = vpop.permute.xlu0 %833
        %835 = vrot.lane.b32.xlu0 %v828, 64
        %v836 = vpop.permute.xlu0 %835
        %vm839 = vcmask 523264
        %v840 = vsel %vm839, %v813, %v834
        %v841 = vsel %vm839, %v818, %v836
        %v842 = vld [vmem:[#allocation7] sm:$0xff]
        %v843 = vld [vmem:[#allocation7 + $0x8] sm:$0xff]
        %v844 = vld [vmem:[#allocation7 + $0x10] sm:$0xff]
        %v845 = vld [vmem:[#allocation7 + $0x18] sm:$0xff]
        %v846 = vld [vmem:[#allocation7 + $0x20] sm:$0xff]
        %v847 = vld [vmem:[#allocation7 + $0x28] sm:$0xff]
        %v848 = vld [vmem:[#allocation7 + $0x30] sm:$0xff]
        %v849 = vld [vmem:[#allocation7 + $0x38] sm:$0xff]
        %v850 = vld [vmem:[#allocation7 + $0x40] sm:$0xff]
        %v851 = vld [vmem:[#allocation7 + $0x48] sm:$0xff]
        %v852 = vld [vmem:[#allocation7 + $0x50] sm:$0xff]
        %v853 = vld [vmem:[#allocation7 + $0x58] sm:$0xff]
        %v854 = vld [vmem:[#allocation7 + $0x60] sm:$0xff]
        %v855 = vld [vmem:[#allocation7 + $0x68] sm:$0xff]
        %v856 = vld [vmem:[#allocation7 + $0x70] sm:$0xff]
        %v857 = vld [vmem:[#allocation7 + $0x78] sm:$0xff]
        %858 = vmatprep.subr.mxu0 0.0
        %859 = vmatpush1.msra.mxu0 %v842
        %860 = vmatprep.subr.mxu0 0.0
        %861 = vmatpush1.msra.mxu0 %v843
        %862 = vmatprep.subr.mxu0 0.0
        %863 = vmatpush1.msra.mxu0 %v844
        %864 = vmatprep.subr.mxu0 0.0
        %865 = vmatpush1.msra.mxu0 %v845
        %866 = vmatprep.subr.mxu0 0.0
        %867 = vmatpush1.msra.mxu0 %v846
        %868 = vmatprep.subr.mxu0 0.0
        %869 = vmatpush1.msra.mxu0 %v847
        %870 = vmatprep.subr.mxu0 0.0
        %871 = vmatpush1.msra.mxu0 %v848
        %872 = vmatprep.subr.mxu0 0.0
        %873 = vmatpush1.msra.mxu0 %v849
        %874 = vmatprep.subr.mxu0 0.0
        %875 = vmatpush1.msra.mxu0 %v850
        %876 = vmatprep.subr.mxu0 0.0
        %877 = vmatpush1.msra.mxu0 %v851
        %878 = vmatprep.subr.mxu0 0.0
        %879 = vmatpush1.msra.mxu0 %v852
        %880 = vmatprep.subr.mxu0 0.0
        %881 = vmatpush1.msra.mxu0 %v853
        %882 = vmatprep.subr.mxu0 0.0
        %883 = vmatpush1.msra.mxu0 %v854
        %884 = vmatprep.subr.mxu0 0.0
        %885 = vmatpush1.msra.mxu0 %v855
        %886 = vmatprep.subr.mxu0 0.0
        %887 = vmatpush1.msra.mxu0 %v856
        %888 = vmatprep.subr.mxu0 0.0
        %889 = vmatpush1.msra.mxu0 %v857
        %890 = vmatprep.subr.mxu0 0.0
        %891 = vmatpush1.msra.mxu0 0.0
        %892 = vmatprep.subr.mxu0 0.0
        %893 = vmatpush1.msra.mxu0 0.0
        %894 = vmatprep.subr.mxu0 0.0
        %895 = vmatpush1.msra.mxu0 0.0
        %896 = vmatprep.subr.mxu0 0.0
        %897 = vmatpush1.msra.mxu0 0.0
        %898 = vmatprep.subr.mxu0 0.0
        %899 = vmatpush1.msra.mxu0 0.0
        %900 = vmatprep.subr.mxu0 0.0
        %901 = vmatpush1.msra.mxu0 0.0
        %902 = vmatprep.subr.mxu0 0.0
        %903 = vmatpush1.msra.mxu0 0.0
        %904 = vmatprep.subr.mxu0 0.0
        %905 = vmatpush1.msra.mxu0 0.0
        %906 = vmatprep.subr.mxu0 0.0
        %907 = vmatpush1.msra.mxu0 0.0
        %908 = vmatprep.subr.mxu0 0.0
        %909 = vmatpush1.msra.mxu0 0.0
        %910 = vmatprep.subr.mxu0 0.0
        %911 = vmatpush1.msra.mxu0 0.0
        %912 = vmatprep.subr.mxu0 0.0
        %913 = vmatpush1.msra.mxu0 0.0
        %914 = vmatprep.subr.mxu0 0.0
        %915 = vmatpush1.msra.mxu0 0.0
        %916 = vmatprep.subr.mxu0 0.0
        %917 = vmatpush1.msra.mxu0 0.0
        %918 = vmatprep.subr.mxu0 0.0
        %919 = vmatpush1.msra.mxu0 0.0
        %920 = vmatprep.subr.mxu0 0.0
        %921 = vmatpush1.msra.mxu0 0.0
        %922 = vmatprep.mubr.f32.mxu0 0.0
        %923 = vmatmul.mubr.f32.gmra.mrb[0].mxu0 %v840
        %v924 = vpop.f32.mrb[0].mxu0
        %v925 = vadd.f32 0.0, %v924
        %v926 = vpop.f32.mrb[0].mxu0
        %927 = vdwg.mxu0
        %s928 = scalar_lea.vmem [#allocation7], 128
        %v929 = vld [vmem:[%s928] sm:$0xff]
        %v930 = vld [vmem:[%s928 + $0x8] sm:$0xff]
        %v931 = vld [vmem:[%s928 + $0x10] sm:$0xff]
        %v932 = vld [vmem:[%s928 + $0x18] sm:$0xff]
        %v933 = vld [vmem:[%s928 + $0x20] sm:$0xff]
        %v934 = vld [vmem:[%s928 + $0x28] sm:$0xff]
        %v935 = vld [vmem:[%s928 + $0x30] sm:$0xff]
        %v936 = vld [vmem:[%s928 + $0x38] sm:$0xff]
        %v937 = vld [vmem:[%s928 + $0x40] sm:$0xff]
        %v938 = vld [vmem:[%s928 + $0x48] sm:$0xff]
        %v939 = vld [vmem:[%s928 + $0x50] sm:$0xff]
        %v940 = vld [vmem:[%s928 + $0x58] sm:$0xff]
        %v941 = vld [vmem:[%s928 + $0x60] sm:$0xff]
        %v942 = vld [vmem:[%s928 + $0x68] sm:$0xff]
        %v943 = vld [vmem:[%s928 + $0x70] sm:$0xff]
        %v944 = vld [vmem:[%s928 + $0x78] sm:$0xff]
        %v946 = vrot.slane %v840, 1
        %948 = vmatprep.subr.mxu0 0.0
        %949 = vmatpush1.msra.mxu0 %v929
        %950 = vmatprep.subr.mxu0 0.0
        %951 = vmatpush1.msra.mxu0 %v930
        %952 = vmatprep.subr.mxu0 0.0
        %953 = vmatpush1.msra.mxu0 %v931
        %954 = vmatprep.subr.mxu0 0.0
        %955 = vmatpush1.msra.mxu0 %v932
        %956 = vmatprep.subr.mxu0 0.0
        %957 = vmatpush1.msra.mxu0 %v933
        %958 = vmatprep.subr.mxu0 0.0
        %959 = vmatpush1.msra.mxu0 %v934
        %960 = vmatprep.subr.mxu0 0.0
        %961 = vmatpush1.msra.mxu0 %v935
        %962 = vmatprep.subr.mxu0 0.0
        %963 = vmatpush1.msra.mxu0 %v936
        %964 = vmatprep.subr.mxu0 0.0
        %965 = vmatpush1.msra.mxu0 %v937
        %966 = vmatprep.subr.mxu0 0.0
        %967 = vmatpush1.msra.mxu0 %v938
        %968 = vmatprep.subr.mxu0 0.0
        %969 = vmatpush1.msra.mxu0 %v939
        %970 = vmatprep.subr.mxu0 0.0
        %971 = vmatpush1.msra.mxu0 %v940
        %972 = vmatprep.subr.mxu0 0.0
        %973 = vmatpush1.msra.mxu0 %v941
        %974 = vmatprep.subr.mxu0 0.0
        %975 = vmatpush1.msra.mxu0 %v942
        %976 = vmatprep.subr.mxu0 0.0
        %977 = vmatpush1.msra.mxu0 %v943
        %978 = vmatprep.subr.mxu0 0.0
        %979 = vmatpush1.msra.mxu0 %v944
        %980 = vmatprep.subr.mxu0 0.0
        %981 = vmatpush1.msra.mxu0 0.0
        %982 = vmatprep.subr.mxu0 0.0
        %983 = vmatpush1.msra.mxu0 0.0
        %984 = vmatprep.subr.mxu0 0.0
        %985 = vmatpush1.msra.mxu0 0.0
        %986 = vmatprep.subr.mxu0 0.0
        %987 = vmatpush1.msra.mxu0 0.0
        %988 = vmatprep.subr.mxu0 0.0
        %989 = vmatpush1.msra.mxu0 0.0
        %990 = vmatprep.subr.mxu0 0.0
        %991 = vmatpush1.msra.mxu0 0.0
        %992 = vmatprep.subr.mxu0 0.0
        %993 = vmatpush1.msra.mxu0 0.0
        %994 = vmatprep.subr.mxu0 0.0
        %995 = vmatpush1.msra.mxu0 0.0
        %996 = vmatprep.subr.mxu0 0.0
        %997 = vmatpush1.msra.mxu0 0.0
        %998 = vmatprep.subr.mxu0 0.0
        %999 = vmatpush1.msra.mxu0 0.0
        %1000 = vmatprep.subr.mxu0 0.0
        %1001 = vmatpush1.msra.mxu0 0.0
        %1002 = vmatprep.subr.mxu0 0.0
        %1003 = vmatpush1.msra.mxu0 0.0
        %1004 = vmatprep.subr.mxu0 0.0
        %1005 = vmatpush1.msra.mxu0 0.0
        %1006 = vmatprep.subr.mxu0 0.0
        %1007 = vmatpush1.msra.mxu0 0.0
        %1008 = vmatprep.subr.mxu0 0.0
        %1009 = vmatpush1.msra.mxu0 0.0
        %1010 = vmatprep.subr.mxu0 0.0
        %1011 = vmatpush1.msra.mxu0 0.0
        %1012 = vmatprep.mubr.f32.mxu0 0.0
        %1013 = vmatmul.mubr.f32.gmra.mrb[0].mxu0 %v946
        %v1014 = vpop.f32.mrb[0].mxu0
        %v1015 = vadd.f32 0.0, %v1014
        %v1016 = vpop.f32.mrb[0].mxu0
        %1017 = vdwg.mxu0
        %s1018 = scalar_lea.vmem [#allocation7], 256
        %v1019 = vld [vmem:[%s1018] sm:$0xff]
        %v1020 = vld [vmem:[%s1018 + $0x8] sm:$0xff]
        %v1021 = vld [vmem:[%s1018 + $0x10] sm:$0xff]
        %v1022 = vld [vmem:[%s1018 + $0x18] sm:$0xff]
        %v1023 = vld [vmem:[%s1018 + $0x20] sm:$0xff]
        %v1024 = vld [vmem:[%s1018 + $0x28] sm:$0xff]
        %v1025 = vld [vmem:[%s1018 + $0x30] sm:$0xff]
        %v1026 = vld [vmem:[%s1018 + $0x38] sm:$0xff]
        %v1027 = vld [vmem:[%s1018 + $0x40] sm:$0xff]
        %v1028 = vld [vmem:[%s1018 + $0x48] sm:$0xff]
        %v1029 = vld [vmem:[%s1018 + $0x50] sm:$0xff]
        %v1030 = vld [vmem:[%s1018 + $0x58] sm:$0xff]
        %v1031 = vld [vmem:[%s1018 + $0x60] sm:$0xff]
        %v1032 = vld [vmem:[%s1018 + $0x68] sm:$0xff]
        %v1033 = vld [vmem:[%s1018 + $0x70] sm:$0xff]
        %v1034 = vld [vmem:[%s1018 + $0x78] sm:$0xff]
        %v1035 = vrot.slane %v840, 2
        %1037 = vmatprep.subr.mxu0 0.0
        %1038 = vmatpush1.msra.mxu0 %v1019
        %1039 = vmatprep.subr.mxu0 0.0
        %1040 = vmatpush1.msra.mxu0 %v1020
        %1041 = vmatprep.subr.mxu0 0.0
        %1042 = vmatpush1.msra.mxu0 %v1021
        %1043 = vmatprep.subr.mxu0 0.0
        %1044 = vmatpush1.msra.mxu0 %v1022
        %1045 = vmatprep.subr.mxu0 0.0
        %1046 = vmatpush1.msra.mxu0 %v1023
        %1047 = vmatprep.subr.mxu0 0.0
        %1048 = vmatpush1.msra.mxu0 %v1024
        %1049 = vmatprep.subr.mxu0 0.0
        %1050 = vmatpush1.msra.mxu0 %v1025
        %1051 = vmatprep.subr.mxu0 0.0
        %1052 = vmatpush1.msra.mxu0 %v1026
        %1053 = vmatprep.subr.mxu0 0.0
        %1054 = vmatpush1.msra.mxu0 %v1027
        %1055 = vmatprep.subr.mxu0 0.0
        %1056 = vmatpush1.msra.mxu0 %v1028
        %1057 = vmatprep.subr.mxu0 0.0
        %1058 = vmatpush1.msra.mxu0 %v1029
        %1059 = vmatprep.subr.mxu0 0.0
        %1060 = vmatpush1.msra.mxu0 %v1030
        %1061 = vmatprep.subr.mxu0 0.0
        %1062 = vmatpush1.msra.mxu0 %v1031
        %1063 = vmatprep.subr.mxu0 0.0
        %1064 = vmatpush1.msra.mxu0 %v1032
        %1065 = vmatprep.subr.mxu0 0.0
        %1066 = vmatpush1.msra.mxu0 %v1033
        %1067 = vmatprep.subr.mxu0 0.0
        %1068 = vmatpush1.msra.mxu0 %v1034
        %1069 = vmatprep.subr.mxu0 0.0
        %1070 = vmatpush1.msra.mxu0 0.0
        %1071 = vmatprep.subr.mxu0 0.0
        %1072 = vmatpush1.msra.mxu0 0.0
        %1073 = vmatprep.subr.mxu0 0.0
        %1074 = vmatpush1.msra.mxu0 0.0
        %1075 = vmatprep.subr.mxu0 0.0
        %1076 = vmatpush1.msra.mxu0 0.0
        %1077 = vmatprep.subr.mxu0 0.0
        %1078 = vmatpush1.msra.mxu0 0.0
        %1079 = vmatprep.subr.mxu0 0.0
        %1080 = vmatpush1.msra.mxu0 0.0
        %1081 = vmatprep.subr.mxu0 0.0
        %1082 = vmatpush1.msra.mxu0 0.0
        %1083 = vmatprep.subr.mxu0 0.0
        %1084 = vmatpush1.msra.mxu0 0.0
        %1085 = vmatprep.subr.mxu0 0.0
        %1086 = vmatpush1.msra.mxu0 0.0
        %1087 = vmatprep.subr.mxu0 0.0
        %1088 = vmatpush1.msra.mxu0 0.0
        %1089 = vmatprep.subr.mxu0 0.0
        %1090 = vmatpush1.msra.mxu0 0.0
        %1091 = vmatprep.subr.mxu0 0.0
        %1092 = vmatpush1.msra.mxu0 0.0
        %1093 = vmatprep.subr.mxu0 0.0
        %1094 = vmatpush1.msra.mxu0 0.0
        %1095 = vmatprep.subr.mxu0 0.0
        %1096 = vmatpush1.msra.mxu0 0.0
        %1097 = vmatprep.subr.mxu0 0.0
        %1098 = vmatpush1.msra.mxu0 0.0
        %1099 = vmatprep.subr.mxu0 0.0
        %1100 = vmatpush1.msra.mxu0 0.0
        %1101 = vmatprep.mubr.f32.mxu0 0.0
        %1102 = vmatmul.mubr.f32.gmra.mrb[0].mxu0 %v1035
        %v1103 = vpop.f32.mrb[0].mxu0
        %v1104 = vadd.f32 0.0, %v1103
        %v1105 = vpop.f32.mrb[0].mxu0
        %1106 = vdwg.mxu0
        %s1107 = scalar_lea.vmem [#allocation7], 384
        %v1108 = vld [vmem:[%s1107] sm:$0xff]
        %v1109 = vld [vmem:[%s1107 + $0x8] sm:$0xff]
        %v1110 = vld [vmem:[%s1107 + $0x10] sm:$0xff]
        %v1111 = vld [vmem:[%s1107 + $0x18] sm:$0xff]
        %v1112 = vld [vmem:[%s1107 + $0x20] sm:$0xff]
        %v1113 = vld [vmem:[%s1107 + $0x28] sm:$0xff]
        %v1114 = vld [vmem:[%s1107 + $0x30] sm:$0xff]
        %v1115 = vld [vmem:[%s1107 + $0x38] sm:$0xff]
        %v1116 = vld [vmem:[%s1107 + $0x40] sm:$0xff]
        %v1117 = vld [vmem:[%s1107 + $0x48] sm:$0xff]
        %v1118 = vld [vmem:[%s1107 + $0x50] sm:$0xff]
        %v1119 = vld [vmem:[%s1107 + $0x58] sm:$0xff]
        %v1120 = vld [vmem:[%s1107 + $0x60] sm:$0xff]
        %v1121 = vld [vmem:[%s1107 + $0x68] sm:$0xff]
        %v1122 = vld [vmem:[%s1107 + $0x70] sm:$0xff]
        %v1123 = vld [vmem:[%s1107 + $0x78] sm:$0xff]
        %v1124 = vrot.slane %v840, 3
        %1126 = vmatprep.subr.mxu0 0.0
        %1127 = vmatpush1.msra.mxu0 %v1108
        %1128 = vmatprep.subr.mxu0 0.0
        %1129 = vmatpush1.msra.mxu0 %v1109
        %1130 = vmatprep.subr.mxu0 0.0
        %1131 = vmatpush1.msra.mxu0 %v1110
        %1132 = vmatprep.subr.mxu0 0.0
        %1133 = vmatpush1.msra.mxu0 %v1111
        %1134 = vmatprep.subr.mxu0 0.0
        %1135 = vmatpush1.msra.mxu0 %v1112
        %1136 = vmatprep.subr.mxu0 0.0
        %1137 = vmatpush1.msra.mxu0 %v1113
        %1138 = vmatprep.subr.mxu0 0.0
        %1139 = vmatpush1.msra.mxu0 %v1114
        %1140 = vmatprep.subr.mxu0 0.0
        %1141 = vmatpush1.msra.mxu0 %v1115
        %1142 = vmatprep.subr.mxu0 0.0
        %1143 = vmatpush1.msra.mxu0 %v1116
        %1144 = vmatprep.subr.mxu0 0.0
        %1145 = vmatpush1.msra.mxu0 %v1117
        %1146 = vmatprep.subr.mxu0 0.0
        %1147 = vmatpush1.msra.mxu0 %v1118
        %1148 = vmatprep.subr.mxu0 0.0
        %1149 = vmatpush1.msra.mxu0 %v1119
        %1150 = vmatprep.subr.mxu0 0.0
        %1151 = vmatpush1.msra.mxu0 %v1120
        %1152 = vmatprep.subr.mxu0 0.0
        %1153 = vmatpush1.msra.mxu0 %v1121
        %1154 = vmatprep.subr.mxu0 0.0
        %1155 = vmatpush1.msra.mxu0 %v1122
        %1156 = vmatprep.subr.mxu0 0.0
        %1157 = vmatpush1.msra.mxu0 %v1123
        %1158 = vmatprep.subr.mxu0 0.0
        %1159 = vmatpush1.msra.mxu0 0.0
        %1160 = vmatprep.subr.mxu0 0.0
        %1161 = vmatpush1.msra.mxu0 0.0
        %1162 = vmatprep.subr.mxu0 0.0
        %1163 = vmatpush1.msra.mxu0 0.0
        %1164 = vmatprep.subr.mxu0 0.0
        %1165 = vmatpush1.msra.mxu0 0.0
        %1166 = vmatprep.subr.mxu0 0.0
        %1167 = vmatpush1.msra.mxu0 0.0
        %1168 = vmatprep.subr.mxu0 0.0
        %1169 = vmatpush1.msra.mxu0 0.0
        %1170 = vmatprep.subr.mxu0 0.0
        %1171 = vmatpush1.msra.mxu0 0.0
        %1172 = vmatprep.subr.mxu0 0.0
        %1173 = vmatpush1.msra.mxu0 0.0
        %1174 = vmatprep.subr.mxu0 0.0
        %1175 = vmatpush1.msra.mxu0 0.0
        %1176 = vmatprep.subr.mxu0 0.0
        %1177 = vmatpush1.msra.mxu0 0.0
        %1178 = vmatprep.subr.mxu0 0.0
        %1179 = vmatpush1.msra.mxu0 0.0
        %1180 = vmatprep.subr.mxu0 0.0
        %1181 = vmatpush1.msra.mxu0 0.0
        %1182 = vmatprep.subr.mxu0 0.0
        %1183 = vmatpush1.msra.mxu0 0.0
        %1184 = vmatprep.subr.mxu0 0.0
        %1185 = vmatpush1.msra.mxu0 0.0
        %1186 = vmatprep.subr.mxu0 0.0
        %1187 = vmatpush1.msra.mxu0 0.0
        %1188 = vmatprep.subr.mxu0 0.0
        %1189 = vmatpush1.msra.mxu0 0.0
        %1190 = vmatprep.mubr.f32.mxu0 0.0
        %1191 = vmatmul.mubr.f32.gmra.mrb[0].mxu0 %v1124
        %v1192 = vpop.f32.mrb[0].mxu0
        %v1193 = vadd.f32 0.0, %v1192
        %v1194 = vpop.f32.mrb[0].mxu0
        %1195 = vdwg.mxu0
        %s1196 = scalar_lea.vmem [#allocation7], 512
        %v1197 = vld [vmem:[%s1196] sm:$0xff]
        %v1198 = vld [vmem:[%s1196 + $0x8] sm:$0xff]
        %v1199 = vld [vmem:[%s1196 + $0x10] sm:$0xff]
        %v1200 = vld [vmem:[%s1196 + $0x18] sm:$0xff]
        %v1201 = vld [vmem:[%s1196 + $0x20] sm:$0xff]
        %v1202 = vld [vmem:[%s1196 + $0x28] sm:$0xff]
        %v1203 = vld [vmem:[%s1196 + $0x30] sm:$0xff]
        %v1204 = vld [vmem:[%s1196 + $0x38] sm:$0xff]
        %v1205 = vld [vmem:[%s1196 + $0x40] sm:$0xff]
        %v1206 = vld [vmem:[%s1196 + $0x48] sm:$0xff]
        %v1207 = vld [vmem:[%s1196 + $0x50] sm:$0xff]
        %v1208 = vld [vmem:[%s1196 + $0x58] sm:$0xff]
        %v1209 = vld [vmem:[%s1196 + $0x60] sm:$0xff]
        %v1210 = vld [vmem:[%s1196 + $0x68] sm:$0xff]
        %v1211 = vld [vmem:[%s1196 + $0x70] sm:$0xff]
        %v1212 = vld [vmem:[%s1196 + $0x78] sm:$0xff]
        %v1213 = vrot.slane %v840, 4
        %1215 = vmatprep.subr.mxu0 0.0
        %1216 = vmatpush1.msra.mxu0 %v1197
        %1217 = vmatprep.subr.mxu0 0.0
        %1218 = vmatpush1.msra.mxu0 %v1198
        %1219 = vmatprep.subr.mxu0 0.0
        %1220 = vmatpush1.msra.mxu0 %v1199
        %1221 = vmatprep.subr.mxu0 0.0
        %1222 = vmatpush1.msra.mxu0 %v1200
        %1223 = vmatprep.subr.mxu0 0.0
        %1224 = vmatpush1.msra.mxu0 %v1201
        %1225 = vmatprep.subr.mxu0 0.0
        %1226 = vmatpush1.msra.mxu0 %v1202
        %1227 = vmatprep.subr.mxu0 0.0
        %1228 = vmatpush1.msra.mxu0 %v1203
        %1229 = vmatprep.subr.mxu0 0.0
        %1230 = vmatpush1.msra.mxu0 %v1204
        %1231 = vmatprep.subr.mxu0 0.0
        %1232 = vmatpush1.msra.mxu0 %v1205
        %1233 = vmatprep.subr.mxu0 0.0
        %1234 = vmatpush1.msra.mxu0 %v1206
        %1235 = vmatprep.subr.mxu0 0.0
        %1236 = vmatpush1.msra.mxu0 %v1207
        %1237 = vmatprep.subr.mxu0 0.0
        %1238 = vmatpush1.msra.mxu0 %v1208
        %1239 = vmatprep.subr.mxu0 0.0
        %1240 = vmatpush1.msra.mxu0 %v1209
        %1241 = vmatprep.subr.mxu0 0.0
        %1242 = vmatpush1.msra.mxu0 %v1210
        %1243 = vmatprep.subr.mxu0 0.0
        %1244 = vmatpush1.msra.mxu0 %v1211
        %1245 = vmatprep.subr.mxu0 0.0
        %1246 = vmatpush1.msra.mxu0 %v1212
        %1247 = vmatprep.subr.mxu0 0.0
        %1248 = vmatpush1.msra.mxu0 0.0
        %1249 = vmatprep.subr.mxu0 0.0
        %1250 = vmatpush1.msra.mxu0 0.0
        %1251 = vmatprep.subr.mxu0 0.0
        %1252 = vmatpush1.msra.mxu0 0.0
        %1253 = vmatprep.subr.mxu0 0.0
        %1254 = vmatpush1.msra.mxu0 0.0
        %1255 = vmatprep.subr.mxu0 0.0
        %1256 = vmatpush1.msra.mxu0 0.0
        %1257 = vmatprep.subr.mxu0 0.0
        %1258 = vmatpush1.msra.mxu0 0.0
        %1259 = vmatprep.subr.mxu0 0.0
        %1260 = vmatpush1.msra.mxu0 0.0
        %1261 = vmatprep.subr.mxu0 0.0
        %1262 = vmatpush1.msra.mxu0 0.0
        %1263 = vmatprep.subr.mxu0 0.0
        %1264 = vmatpush1.msra.mxu0 0.0
        %1265 = vmatprep.subr.mxu0 0.0
        %1266 = vmatpush1.msra.mxu0 0.0
        %1267 = vmatprep.subr.mxu0 0.0
        %1268 = vmatpush1.msra.mxu0 0.0
        %1269 = vmatprep.subr.mxu0 0.0
        %1270 = vmatpush1.msra.mxu0 0.0
        %1271 = vmatprep.subr.mxu0 0.0
        %1272 = vmatpush1.msra.mxu0 0.0
        %1273 = vmatprep.subr.mxu0 0.0
        %1274 = vmatpush1.msra.mxu0 0.0
        %1275 = vmatprep.subr.mxu0 0.0
        %1276 = vmatpush1.msra.mxu0 0.0
        %1277 = vmatprep.subr.mxu0 0.0
        %1278 = vmatpush1.msra.mxu0 0.0
        %1279 = vmatprep.mubr.f32.mxu0 0.0
        %1280 = vmatmul.mubr.f32.gmra.mrb[0].mxu0 %v1213
        %v1281 = vpop.f32.mrb[0].mxu0
        %v1282 = vadd.f32 0.0, %v1281
        %v1283 = vpop.f32.mrb[0].mxu0
        %1284 = vdwg.mxu0
        %s1285 = scalar_lea.vmem [#allocation7], 640
        %v1286 = vld [vmem:[%s1285] sm:$0xff]
        %v1287 = vld [vmem:[%s1285 + $0x8] sm:$0xff]
        %v1288 = vld [vmem:[%s1285 + $0x10] sm:$0xff]
        %v1289 = vld [vmem:[%s1285 + $0x18] sm:$0xff]
        %v1290 = vld [vmem:[%s1285 + $0x20] sm:$0xff]
        %v1291 = vld [vmem:[%s1285 + $0x28] sm:$0xff]
        %v1292 = vld [vmem:[%s1285 + $0x30] sm:$0xff]
        %v1293 = vld [vmem:[%s1285 + $0x38] sm:$0xff]
        %v1294 = vld [vmem:[%s1285 + $0x40] sm:$0xff]
        %v1295 = vld [vmem:[%s1285 + $0x48] sm:$0xff]
        %v1296 = vld [vmem:[%s1285 + $0x50] sm:$0xff]
        %v1297 = vld [vmem:[%s1285 + $0x58] sm:$0xff]
        %v1298 = vld [vmem:[%s1285 + $0x60] sm:$0xff]
        %v1299 = vld [vmem:[%s1285 + $0x68] sm:$0xff]
        %v1300 = vld [vmem:[%s1285 + $0x70] sm:$0xff]
        %v1301 = vld [vmem:[%s1285 + $0x78] sm:$0xff]
        %v1302 = vrot.slane %v840, 5
        %1304 = vmatprep.subr.mxu0 0.0
        %1305 = vmatpush1.msra.mxu0 %v1286
        %1306 = vmatprep.subr.mxu0 0.0
        %1307 = vmatpush1.msra.mxu0 %v1287
        %1308 = vmatprep.subr.mxu0 0.0
        %1309 = vmatpush1.msra.mxu0 %v1288
        %1310 = vmatprep.subr.mxu0 0.0
        %1311 = vmatpush1.msra.mxu0 %v1289
        %1312 = vmatprep.subr.mxu0 0.0
        %1313 = vmatpush1.msra.mxu0 %v1290
        %1314 = vmatprep.subr.mxu0 0.0
        %1315 = vmatpush1.msra.mxu0 %v1291
        %1316 = vmatprep.subr.mxu0 0.0
        %1317 = vmatpush1.msra.mxu0 %v1292
        %1318 = vmatprep.subr.mxu0 0.0
        %1319 = vmatpush1.msra.mxu0 %v1293
        %1320 = vmatprep.subr.mxu0 0.0
        %1321 = vmatpush1.msra.mxu0 %v1294
        %1322 = vmatprep.subr.mxu0 0.0
        %1323 = vmatpush1.msra.mxu0 %v1295
        %1324 = vmatprep.subr.mxu0 0.0
        %1325 = vmatpush1.msra.mxu0 %v1296
        %1326 = vmatprep.subr.mxu0 0.0
        %1327 = vmatpush1.msra.mxu0 %v1297
        %1328 = vmatprep.subr.mxu0 0.0
        %1329 = vmatpush1.msra.mxu0 %v1298
        %1330 = vmatprep.subr.mxu0 0.0
        %1331 = vmatpush1.msra.mxu0 %v1299
        %1332 = vmatprep.subr.mxu0 0.0
        %1333 = vmatpush1.msra.mxu0 %v1300
        %1334 = vmatprep.subr.mxu0 0.0
        %1335 = vmatpush1.msra.mxu0 %v1301
        %1336 = vmatprep.subr.mxu0 0.0
        %1337 = vmatpush1.msra.mxu0 0.0
        %1338 = vmatprep.subr.mxu0 0.0
        %1339 = vmatpush1.msra.mxu0 0.0
        %1340 = vmatprep.subr.mxu0 0.0
        %1341 = vmatpush1.msra.mxu0 0.0
        %1342 = vmatprep.subr.mxu0 0.0
        %1343 = vmatpush1.msra.mxu0 0.0
        %1344 = vmatprep.subr.mxu0 0.0
        %1345 = vmatpush1.msra.mxu0 0.0
        %1346 = vmatprep.subr.mxu0 0.0
        %1347 = vmatpush1.msra.mxu0 0.0
        %1348 = vmatprep.subr.mxu0 0.0
        %1349 = vmatpush1.msra.mxu0 0.0
        %1350 = vmatprep.subr.mxu0 0.0
        %1351 = vmatpush1.msra.mxu0 0.0
        %1352 = vmatprep.subr.mxu0 0.0
        %1353 = vmatpush1.msra.mxu0 0.0
        %1354 = vmatprep.subr.mxu0 0.0
        %1355 = vmatpush1.msra.mxu0 0.0
        %1356 = vmatprep.subr.mxu0 0.0
        %1357 = vmatpush1.msra.mxu0 0.0
        %1358 = vmatprep.subr.mxu0 0.0
        %1359 = vmatpush1.msra.mxu0 0.0
        %1360 = vmatprep.subr.mxu0 0.0
        %1361 = vmatpush1.msra.mxu0 0.0
        %1362 = vmatprep.subr.mxu0 0.0
        %1363 = vmatpush1.msra.mxu0 0.0
        %1364 = vmatprep.subr.mxu0 0.0
        %1365 = vmatpush1.msra.mxu0 0.0
        %1366 = vmatprep.subr.mxu0 0.0
        %1367 = vmatpush1.msra.mxu0 0.0
        %1368 = vmatprep.mubr.f32.mxu0 0.0
        %1369 = vmatmul.mubr.f32.gmra.mrb[0].mxu0 %v1302
        %v1370 = vpop.f32.mrb[0].mxu0
        %v1371 = vadd.f32 0.0, %v1370
        %v1372 = vpop.f32.mrb[0].mxu0
        %1373 = vdwg.mxu0
        %s1374 = scalar_lea.vmem [#allocation7], 768
        %v1375 = vld [vmem:[%s1374] sm:$0xff]
        %v1376 = vld [vmem:[%s1374 + $0x8] sm:$0xff]
        %v1377 = vld [vmem:[%s1374 + $0x10] sm:$0xff]
        %v1378 = vld [vmem:[%s1374 + $0x18] sm:$0xff]
        %v1379 = vld [vmem:[%s1374 + $0x20] sm:$0xff]
        %v1380 = vld [vmem:[%s1374 + $0x28] sm:$0xff]
        %v1381 = vld [vmem:[%s1374 + $0x30] sm:$0xff]
        %v1382 = vld [vmem:[%s1374 + $0x38] sm:$0xff]
        %v1383 = vld [vmem:[%s1374 + $0x40] sm:$0xff]
        %v1384 = vld [vmem:[%s1374 + $0x48] sm:$0xff]
        %v1385 = vld [vmem:[%s1374 + $0x50] sm:$0xff]
        %v1386 = vld [vmem:[%s1374 + $0x58] sm:$0xff]
        %v1387 = vld [vmem:[%s1374 + $0x60] sm:$0xff]
        %v1388 = vld [vmem:[%s1374 + $0x68] sm:$0xff]
        %v1389 = vld [vmem:[%s1374 + $0x70] sm:$0xff]
        %v1390 = vld [vmem:[%s1374 + $0x78] sm:$0xff]
        %v1391 = vrot.slane %v840, 6
        %1393 = vmatprep.subr.mxu0 0.0
        %1394 = vmatpush1.msra.mxu0 %v1375
        %1395 = vmatprep.subr.mxu0 0.0
        %1396 = vmatpush1.msra.mxu0 %v1376
        %1397 = vmatprep.subr.mxu0 0.0
        %1398 = vmatpush1.msra.mxu0 %v1377
        %1399 = vmatprep.subr.mxu0 0.0
        %1400 = vmatpush1.msra.mxu0 %v1378
        %1401 = vmatprep.subr.mxu0 0.0
        %1402 = vmatpush1.msra.mxu0 %v1379
        %1403 = vmatprep.subr.mxu0 0.0
        %1404 = vmatpush1.msra.mxu0 %v1380
        %1405 = vmatprep.subr.mxu0 0.0
        %1406 = vmatpush1.msra.mxu0 %v1381
        %1407 = vmatprep.subr.mxu0 0.0
        %1408 = vmatpush1.msra.mxu0 %v1382
        %1409 = vmatprep.subr.mxu0 0.0
        %1410 = vmatpush1.msra.mxu0 %v1383
        %1411 = vmatprep.subr.mxu0 0.0
        %1412 = vmatpush1.msra.mxu0 %v1384
        %1413 = vmatprep.subr.mxu0 0.0
        %1414 = vmatpush1.msra.mxu0 %v1385
        %1415 = vmatprep.subr.mxu0 0.0
        %1416 = vmatpush1.msra.mxu0 %v1386
        %1417 = vmatprep.subr.mxu0 0.0
        %1418 = vmatpush1.msra.mxu0 %v1387
        %1419 = vmatprep.subr.mxu0 0.0
        %1420 = vmatpush1.msra.mxu0 %v1388
        %1421 = vmatprep.subr.mxu0 0.0
        %1422 = vmatpush1.msra.mxu0 %v1389
        %1423 = vmatprep.subr.mxu0 0.0
        %1424 = vmatpush1.msra.mxu0 %v1390
        %1425 = vmatprep.subr.mxu0 0.0
        %1426 = vmatpush1.msra.mxu0 0.0
        %1427 = vmatprep.subr.mxu0 0.0
        %1428 = vmatpush1.msra.mxu0 0.0
        %1429 = vmatprep.subr.mxu0 0.0
        %1430 = vmatpush1.msra.mxu0 0.0
        %1431 = vmatprep.subr.mxu0 0.0
        %1432 = vmatpush1.msra.mxu0 0.0
        %1433 = vmatprep.subr.mxu0 0.0
        %1434 = vmatpush1.msra.mxu0 0.0
        %1435 = vmatprep.subr.mxu0 0.0
        %1436 = vmatpush1.msra.mxu0 0.0
        %1437 = vmatprep.subr.mxu0 0.0
        %1438 = vmatpush1.msra.mxu0 0.0
        %1439 = vmatprep.subr.mxu0 0.0
        %1440 = vmatpush1.msra.mxu0 0.0
        %1441 = vmatprep.subr.mxu0 0.0
        %1442 = vmatpush1.msra.mxu0 0.0
        %1443 = vmatprep.subr.mxu0 0.0
        %1444 = vmatpush1.msra.mxu0 0.0
        %1445 = vmatprep.subr.mxu0 0.0
        %1446 = vmatpush1.msra.mxu0 0.0
        %1447 = vmatprep.subr.mxu0 0.0
        %1448 = vmatpush1.msra.mxu0 0.0
        %1449 = vmatprep.subr.mxu0 0.0
        %1450 = vmatpush1.msra.mxu0 0.0
        %1451 = vmatprep.subr.mxu0 0.0
        %1452 = vmatpush1.msra.mxu0 0.0
        %1453 = vmatprep.subr.mxu0 0.0
        %1454 = vmatpush1.msra.mxu0 0.0
        %1455 = vmatprep.subr.mxu0 0.0
        %1456 = vmatpush1.msra.mxu0 0.0
        %1457 = vmatprep.mubr.f32.mxu0 0.0
        %1458 = vmatmul.mubr.f32.gmra.mrb[0].mxu0 %v1391
        %v1459 = vpop.f32.mrb[0].mxu0
        %v1460 = vadd.f32 0.0, %v1459
        %v1461 = vpop.f32.mrb[0].mxu0
        %1462 = vdwg.mxu0
        %s1463 = scalar_lea.vmem [#allocation7], 896
        %v1464 = vld [vmem:[%s1463] sm:$0xff]
        %v1465 = vld [vmem:[%s1463 + $0x8] sm:$0xff]
        %v1466 = vld [vmem:[%s1463 + $0x10] sm:$0xff]
        %v1467 = vld [vmem:[%s1463 + $0x18] sm:$0xff]
        %v1468 = vld [vmem:[%s1463 + $0x20] sm:$0xff]
        %v1469 = vld [vmem:[%s1463 + $0x28] sm:$0xff]
        %v1470 = vld [vmem:[%s1463 + $0x30] sm:$0xff]
        %v1471 = vld [vmem:[%s1463 + $0x38] sm:$0xff]
        %v1472 = vld [vmem:[%s1463 + $0x40] sm:$0xff]
        %v1473 = vld [vmem:[%s1463 + $0x48] sm:$0xff]
        %v1474 = vld [vmem:[%s1463 + $0x50] sm:$0xff]
        %v1475 = vld [vmem:[%s1463 + $0x58] sm:$0xff]
        %v1476 = vld [vmem:[%s1463 + $0x60] sm:$0xff]
        %v1477 = vld [vmem:[%s1463 + $0x68] sm:$0xff]
        %v1478 = vld [vmem:[%s1463 + $0x70] sm:$0xff]
        %v1479 = vld [vmem:[%s1463 + $0x78] sm:$0xff]
        %v1480 = vrot.slane %v840, 7
        %1482 = vmatprep.subr.mxu0 0.0
        %1483 = vmatpush1.msra.mxu0 %v1464
        %1484 = vmatprep.subr.mxu0 0.0
        %1485 = vmatpush1.msra.mxu0 %v1465
        %1486 = vmatprep.subr.mxu0 0.0
        %1487 = vmatpush1.msra.mxu0 %v1466
        %1488 = vmatprep.subr.mxu0 0.0
        %1489 = vmatpush1.msra.mxu0 %v1467
        %1490 = vmatprep.subr.mxu0 0.0
        %1491 = vmatpush1.msra.mxu0 %v1468
        %1492 = vmatprep.subr.mxu0 0.0
        %1493 = vmatpush1.msra.mxu0 %v1469
        %1494 = vmatprep.subr.mxu0 0.0
        %1495 = vmatpush1.msra.mxu0 %v1470
        %1496 = vmatprep.subr.mxu0 0.0
        %1497 = vmatpush1.msra.mxu0 %v1471
        %1498 = vmatprep.subr.mxu0 0.0
        %1499 = vmatpush1.msra.mxu0 %v1472
        %1500 = vmatprep.subr.mxu0 0.0
        %1501 = vmatpush1.msra.mxu0 %v1473
        %1502 = vmatprep.subr.mxu0 0.0
        %1503 = vmatpush1.msra.mxu0 %v1474
        %1504 = vmatprep.subr.mxu0 0.0
        %1505 = vmatpush1.msra.mxu0 %v1475
        %1506 = vmatprep.subr.mxu0 0.0
        %1507 = vmatpush1.msra.mxu0 %v1476
        %1508 = vmatprep.subr.mxu0 0.0
        %1509 = vmatpush1.msra.mxu0 %v1477
        %1510 = vmatprep.subr.mxu0 0.0
        %1511 = vmatpush1.msra.mxu0 %v1478
        %1512 = vmatprep.subr.mxu0 0.0
        %1513 = vmatpush1.msra.mxu0 %v1479
        %1514 = vmatprep.subr.mxu0 0.0
        %1515 = vmatpush1.msra.mxu0 0.0
        %1516 = vmatprep.subr.mxu0 0.0
        %1517 = vmatpush1.msra.mxu0 0.0
        %1518 = vmatprep.subr.mxu0 0.0
        %1519 = vmatpush1.msra.mxu0 0.0
        %1520 = vmatprep.subr.mxu0 0.0
        %1521 = vmatpush1.msra.mxu0 0.0
        %1522 = vmatprep.subr.mxu0 0.0
        %1523 = vmatpush1.msra.mxu0 0.0
        %1524 = vmatprep.subr.mxu0 0.0
        %1525 = vmatpush1.msra.mxu0 0.0
        %1526 = vmatprep.subr.mxu0 0.0
        %1527 = vmatpush1.msra.mxu0 0.0
        %1528 = vmatprep.subr.mxu0 0.0
        %1529 = vmatpush1.msra.mxu0 0.0
        %1530 = vmatprep.subr.mxu0 0.0
        %1531 = vmatpush1.msra.mxu0 0.0
        %1532 = vmatprep.subr.mxu0 0.0
        %1533 = vmatpush1.msra.mxu0 0.0
        %1534 = vmatprep.subr.mxu0 0.0
        %1535 = vmatpush1.msra.mxu0 0.0
        %1536 = vmatprep.subr.mxu0 0.0
        %1537 = vmatpush1.msra.mxu0 0.0
        %1538 = vmatprep.subr.mxu0 0.0
        %1539 = vmatpush1.msra.mxu0 0.0
        %1540 = vmatprep.subr.mxu0 0.0
        %1541 = vmatpush1.msra.mxu0 0.0
        %1542 = vmatprep.subr.mxu0 0.0
        %1543 = vmatpush1.msra.mxu0 0.0
        %1544 = vmatprep.subr.mxu0 0.0
        %1545 = vmatpush1.msra.mxu0 0.0
        %1546 = vmatprep.mubr.f32.mxu0 0.0
        %1547 = vmatmul.mubr.f32.gmra.mrb[0].mxu0 %v1480
        %v1548 = vpop.f32.mrb[0].mxu0
        %v1549 = vadd.f32 0.0, %v1548
        %v1550 = vpop.f32.mrb[0].mxu0
        %1551 = vdwg.mxu0
        %s1552 = scalar_lea.vmem [#allocation7], 1024
        %v1553 = vld [vmem:[%s1552] sm:$0xff]
        %v1554 = vld [vmem:[%s1552 + $0x8] sm:$0xff]
        %v1555 = vld [vmem:[%s1552 + $0x10] sm:$0xff]
        %v1556 = vld [vmem:[%s1552 + $0x18] sm:$0xff]
        %v1557 = vld [vmem:[%s1552 + $0x20] sm:$0xff]
        %v1558 = vld [vmem:[%s1552 + $0x28] sm:$0xff]
        %v1559 = vld [vmem:[%s1552 + $0x30] sm:$0xff]
        %v1560 = vld [vmem:[%s1552 + $0x38] sm:$0xff]
        %v1561 = vld [vmem:[%s1552 + $0x40] sm:$0xff]
        %v1562 = vld [vmem:[%s1552 + $0x48] sm:$0xff]
        %v1563 = vld [vmem:[%s1552 + $0x50] sm:$0xff]
        %v1564 = vld [vmem:[%s1552 + $0x58] sm:$0xff]
        %v1565 = vld [vmem:[%s1552 + $0x60] sm:$0xff]
        %v1566 = vld [vmem:[%s1552 + $0x68] sm:$0xff]
        %v1567 = vld [vmem:[%s1552 + $0x70] sm:$0xff]
        %v1568 = vld [vmem:[%s1552 + $0x78] sm:$0xff]
        %1569 = vmatprep.subr.mxu0 0.0
        %1570 = vmatpush1.msra.mxu0 %v1553
        %1571 = vmatprep.subr.mxu0 0.0
        %1572 = vmatpush1.msra.mxu0 %v1554
        %1573 = vmatprep.subr.mxu0 0.0
        %1574 = vmatpush1.msra.mxu0 %v1555
        %1575 = vmatprep.subr.mxu0 0.0
        %1576 = vmatpush1.msra.mxu0 %v1556
        %1577 = vmatprep.subr.mxu0 0.0
        %1578 = vmatpush1.msra.mxu0 %v1557
        %1579 = vmatprep.subr.mxu0 0.0
        %1580 = vmatpush1.msra.mxu0 %v1558
        %1581 = vmatprep.subr.mxu0 0.0
        %1582 = vmatpush1.msra.mxu0 %v1559
        %1583 = vmatprep.subr.mxu0 0.0
        %1584 = vmatpush1.msra.mxu0 %v1560
        %1585 = vmatprep.subr.mxu0 0.0
        %1586 = vmatpush1.msra.mxu0 %v1561
        %1587 = vmatprep.subr.mxu0 0.0
        %1588 = vmatpush1.msra.mxu0 %v1562
        %1589 = vmatprep.subr.mxu0 0.0
        %1590 = vmatpush1.msra.mxu0 %v1563
        %1591 = vmatprep.subr.mxu0 0.0
        %1592 = vmatpush1.msra.mxu0 %v1564
        %1593 = vmatprep.subr.mxu0 0.0
        %1594 = vmatpush1.msra.mxu0 %v1565
        %1595 = vmatprep.subr.mxu0 0.0
        %1596 = vmatpush1.msra.mxu0 %v1566
        %1597 = vmatprep.subr.mxu0 0.0
        %1598 = vmatpush1.msra.mxu0 %v1567
        %1599 = vmatprep.subr.mxu0 0.0
        %1600 = vmatpush1.msra.mxu0 %v1568
        %1601 = vmatprep.subr.mxu0 0.0
        %1602 = vmatpush1.msra.mxu0 0.0
        %1603 = vmatprep.subr.mxu0 0.0
        %1604 = vmatpush1.msra.mxu0 0.0
        %1605 = vmatprep.subr.mxu0 0.0
        %1606 = vmatpush1.msra.mxu0 0.0
        %1607 = vmatprep.subr.mxu0 0.0
        %1608 = vmatpush1.msra.mxu0 0.0
        %1609 = vmatprep.subr.mxu0 0.0
        %1610 = vmatpush1.msra.mxu0 0.0
        %1611 = vmatprep.subr.mxu0 0.0
        %1612 = vmatpush1.msra.mxu0 0.0
        %1613 = vmatprep.subr.mxu0 0.0
        %1614 = vmatpush1.msra.mxu0 0.0
        %1615 = vmatprep.subr.mxu0 0.0
        %1616 = vmatpush1.msra.mxu0 0.0
        %1617 = vmatprep.subr.mxu0 0.0
        %1618 = vmatpush1.msra.mxu0 0.0
        %1619 = vmatprep.subr.mxu0 0.0
        %1620 = vmatpush1.msra.mxu0 0.0
        %1621 = vmatprep.subr.mxu0 0.0
        %1622 = vmatpush1.msra.mxu0 0.0
        %1623 = vmatprep.subr.mxu0 0.0
        %1624 = vmatpush1.msra.mxu0 0.0
        %1625 = vmatprep.subr.mxu0 0.0
        %1626 = vmatpush1.msra.mxu0 0.0
        %1627 = vmatprep.subr.mxu0 0.0
        %1628 = vmatpush1.msra.mxu0 0.0
        %1629 = vmatprep.subr.mxu0 0.0
        %1630 = vmatpush1.msra.mxu0 0.0
        %1631 = vmatprep.subr.mxu0 0.0
        %1632 = vmatpush1.msra.mxu0 0.0
        %1633 = vmatprep.mubr.f32.mxu0 0.0
        %1634 = vmatmul.mubr.f32.gmra.mrb[0].mxu0 %v841
        %v1635 = vpop.f32.mrb[0].mxu0
        %v1636 = vadd.f32 0.0, %v1635
        %v1637 = vpop.f32.mrb[0].mxu0
        %1638 = vdwg.mxu0
        %s1639 = scalar_lea.vmem [#allocation7], 1152
        %v1640 = vld [vmem:[%s1639] sm:$0xff]
        %v1641 = vld [vmem:[%s1639 + $0x8] sm:$0xff]
        %v1642 = vld [vmem:[%s1639 + $0x10] sm:$0xff]
        %v1643 = vld [vmem:[%s1639 + $0x18] sm:$0xff]
        %v1644 = vld [vmem:[%s1639 + $0x20] sm:$0xff]
        %v1645 = vld [vmem:[%s1639 + $0x28] sm:$0xff]
        %v1646 = vld [vmem:[%s1639 + $0x30] sm:$0xff]
        %v1647 = vld [vmem:[%s1639 + $0x38] sm:$0xff]
        %v1648 = vld [vmem:[%s1639 + $0x40] sm:$0xff]
        %v1649 = vld [vmem:[%s1639 + $0x48] sm:$0xff]
        %v1650 = vld [vmem:[%s1639 + $0x50] sm:$0xff]
        %v1651 = vld [vmem:[%s1639 + $0x58] sm:$0xff]
        %v1652 = vld [vmem:[%s1639 + $0x60] sm:$0xff]
        %v1653 = vld [vmem:[%s1639 + $0x68] sm:$0xff]
        %v1654 = vld [vmem:[%s1639 + $0x70] sm:$0xff]
        %v1655 = vld [vmem:[%s1639 + $0x78] sm:$0xff]
        %v1657 = vrot.slane %v841, 1
        %1659 = vmatprep.subr.mxu0 0.0
        %1660 = vmatpush1.msra.mxu0 %v1640
        %1661 = vmatprep.subr.mxu0 0.0
        %1662 = vmatpush1.msra.mxu0 %v1641
        %1663 = vmatprep.subr.mxu0 0.0
        %1664 = vmatpush1.msra.mxu0 %v1642
        %1665 = vmatprep.subr.mxu0 0.0
        %1666 = vmatpush1.msra.mxu0 %v1643
        %1667 = vmatprep.subr.mxu0 0.0
        %1668 = vmatpush1.msra.mxu0 %v1644
        %1669 = vmatprep.subr.mxu0 0.0
        %1670 = vmatpush1.msra.mxu0 %v1645
        %1671 = vmatprep.subr.mxu0 0.0
        %1672 = vmatpush1.msra.mxu0 %v1646
        %1673 = vmatprep.subr.mxu0 0.0
        %1674 = vmatpush1.msra.mxu0 %v1647
        %1675 = vmatprep.subr.mxu0 0.0
        %1676 = vmatpush1.msra.mxu0 %v1648
        %1677 = vmatprep.subr.mxu0 0.0
        %1678 = vmatpush1.msra.mxu0 %v1649
        %1679 = vmatprep.subr.mxu0 0.0
        %1680 = vmatpush1.msra.mxu0 %v1650
        %1681 = vmatprep.subr.mxu0 0.0
        %1682 = vmatpush1.msra.mxu0 %v1651
        %1683 = vmatprep.subr.mxu0 0.0
        %1684 = vmatpush1.msra.mxu0 %v1652
        %1685 = vmatprep.subr.mxu0 0.0
        %1686 = vmatpush1.msra.mxu0 %v1653
        %1687 = vmatprep.subr.mxu0 0.0
        %1688 = vmatpush1.msra.mxu0 %v1654
        %1689 = vmatprep.subr.mxu0 0.0
        %1690 = vmatpush1.msra.mxu0 %v1655
        %1691 = vmatprep.subr.mxu0 0.0
        %1692 = vmatpush1.msra.mxu0 0.0
        %1693 = vmatprep.subr.mxu0 0.0
        %1694 = vmatpush1.msra.mxu0 0.0
        %1695 = vmatprep.subr.mxu0 0.0
        %1696 = vmatpush1.msra.mxu0 0.0
        %1697 = vmatprep.subr.mxu0 0.0
        %1698 = vmatpush1.msra.mxu0 0.0
        %1699 = vmatprep.subr.mxu0 0.0
        %1700 = vmatpush1.msra.mxu0 0.0
        %1701 = vmatprep.subr.mxu0 0.0
        %1702 = vmatpush1.msra.mxu0 0.0
        %1703 = vmatprep.subr.mxu0 0.0
        %1704 = vmatpush1.msra.mxu0 0.0
        %1705 = vmatprep.subr.mxu0 0.0
        %1706 = vmatpush1.msra.mxu0 0.0
        %1707 = vmatprep.subr.mxu0 0.0
        %1708 = vmatpush1.msra.mxu0 0.0
        %1709 = vmatprep.subr.mxu0 0.0
        %1710 = vmatpush1.msra.mxu0 0.0
        %1711 = vmatprep.subr.mxu0 0.0
        %1712 = vmatpush1.msra.mxu0 0.0
        %1713 = vmatprep.subr.mxu0 0.0
        %1714 = vmatpush1.msra.mxu0 0.0
        %1715 = vmatprep.subr.mxu0 0.0
        %1716 = vmatpush1.msra.mxu0 0.0
        %1717 = vmatprep.subr.mxu0 0.0
        %1718 = vmatpush1.msra.mxu0 0.0
        %1719 = vmatprep.subr.mxu0 0.0
        %1720 = vmatpush1.msra.mxu0 0.0
        %1721 = vmatprep.subr.mxu0 0.0
        %1722 = vmatpush1.msra.mxu0 0.0
        %1723 = vmatprep.mubr.f32.mxu0 0.0
        %1724 = vmatmul.mubr.f32.gmra.mrb[0].mxu0 %v1657
        %v1725 = vpop.f32.mrb[0].mxu0
        %v1726 = vadd.f32 0.0, %v1725
        %v1727 = vpop.f32.mrb[0].mxu0
        %1728 = vdwg.mxu0
        %s1729 = scalar_lea.vmem [#allocation7], 1280
        %v1730 = vld [vmem:[%s1729] sm:$0xff]
        %v1731 = vld [vmem:[%s1729 + $0x8] sm:$0xff]
        %v1732 = vld [vmem:[%s1729 + $0x10] sm:$0xff]
        %v1733 = vld [vmem:[%s1729 + $0x18] sm:$0xff]
        %v1734 = vld [vmem:[%s1729 + $0x20] sm:$0xff]
        %v1735 = vld [vmem:[%s1729 + $0x28] sm:$0xff]
        %v1736 = vld [vmem:[%s1729 + $0x30] sm:$0xff]
        %v1737 = vld [vmem:[%s1729 + $0x38] sm:$0xff]
        %v1738 = vld [vmem:[%s1729 + $0x40] sm:$0xff]
        %v1739 = vld [vmem:[%s1729 + $0x48] sm:$0xff]
        %v1740 = vld [vmem:[%s1729 + $0x50] sm:$0xff]
        %v1741 = vld [vmem:[%s1729 + $0x58] sm:$0xff]
        %v1742 = vld [vmem:[%s1729 + $0x60] sm:$0xff]
        %v1743 = vld [vmem:[%s1729 + $0x68] sm:$0xff]
        %v1744 = vld [vmem:[%s1729 + $0x70] sm:$0xff]
        %v1745 = vld [vmem:[%s1729 + $0x78] sm:$0xff]
        %v1746 = vrot.slane %v841, 2
        %1748 = vmatprep.subr.mxu0 0.0
        %1749 = vmatpush1.msra.mxu0 %v1730
        %1750 = vmatprep.subr.mxu0 0.0
        %1751 = vmatpush1.msra.mxu0 %v1731
        %1752 = vmatprep.subr.mxu0 0.0
        %1753 = vmatpush1.msra.mxu0 %v1732
        %1754 = vmatprep.subr.mxu0 0.0
        %1755 = vmatpush1.msra.mxu0 %v1733
        %1756 = vmatprep.subr.mxu0 0.0
        %1757 = vmatpush1.msra.mxu0 %v1734
        %1758 = vmatprep.subr.mxu0 0.0
        %1759 = vmatpush1.msra.mxu0 %v1735
        %1760 = vmatprep.subr.mxu0 0.0
        %1761 = vmatpush1.msra.mxu0 %v1736
        %1762 = vmatprep.subr.mxu0 0.0
        %1763 = vmatpush1.msra.mxu0 %v1737
        %1764 = vmatprep.subr.mxu0 0.0
        %1765 = vmatpush1.msra.mxu0 %v1738
        %1766 = vmatprep.subr.mxu0 0.0
        %1767 = vmatpush1.msra.mxu0 %v1739
        %1768 = vmatprep.subr.mxu0 0.0
        %1769 = vmatpush1.msra.mxu0 %v1740
        %1770 = vmatprep.subr.mxu0 0.0
        %1771 = vmatpush1.msra.mxu0 %v1741
        %1772 = vmatprep.subr.mxu0 0.0
        %1773 = vmatpush1.msra.mxu0 %v1742
        %1774 = vmatprep.subr.mxu0 0.0
        %1775 = vmatpush1.msra.mxu0 %v1743
        %1776 = vmatprep.subr.mxu0 0.0
        %1777 = vmatpush1.msra.mxu0 %v1744
        %1778 = vmatprep.subr.mxu0 0.0
        %1779 = vmatpush1.msra.mxu0 %v1745
        %1780 = vmatprep.subr.mxu0 0.0
        %1781 = vmatpush1.msra.mxu0 0.0
        %1782 = vmatprep.subr.mxu0 0.0
        %1783 = vmatpush1.msra.mxu0 0.0
        %1784 = vmatprep.subr.mxu0 0.0
        %1785 = vmatpush1.msra.mxu0 0.0
        %1786 = vmatprep.subr.mxu0 0.0
        %1787 = vmatpush1.msra.mxu0 0.0
        %1788 = vmatprep.subr.mxu0 0.0
        %1789 = vmatpush1.msra.mxu0 0.0
        %1790 = vmatprep.subr.mxu0 0.0
        %1791 = vmatpush1.msra.mxu0 0.0
        %1792 = vmatprep.subr.mxu0 0.0
        %1793 = vmatpush1.msra.mxu0 0.0
        %1794 = vmatprep.subr.mxu0 0.0
        %1795 = vmatpush1.msra.mxu0 0.0
        %1796 = vmatprep.subr.mxu0 0.0
        %1797 = vmatpush1.msra.mxu0 0.0
        %1798 = vmatprep.subr.mxu0 0.0
        %1799 = vmatpush1.msra.mxu0 0.0
        %1800 = vmatprep.subr.mxu0 0.0
        %1801 = vmatpush1.msra.mxu0 0.0
        %1802 = vmatprep.subr.mxu0 0.0
        %1803 = vmatpush1.msra.mxu0 0.0
        %1804 = vmatprep.subr.mxu0 0.0
        %1805 = vmatpush1.msra.mxu0 0.0
        %1806 = vmatprep.subr.mxu0 0.0
        %1807 = vmatpush1.msra.mxu0 0.0
        %1808 = vmatprep.subr.mxu0 0.0
        %1809 = vmatpush1.msra.mxu0 0.0
        %1810 = vmatprep.subr.mxu0 0.0
        %1811 = vmatpush1.msra.mxu0 0.0
        %1812 = vmatprep.mubr.f32.mxu0 0.0
        %1813 = vmatmul.mubr.f32.gmra.mrb[0].mxu0 %v1746
        %v1814 = vpop.f32.mrb[0].mxu0
        %v1815 = vadd.f32 0.0, %v1814
        %v1816 = vpop.f32.mrb[0].mxu0
        %1817 = vdwg.mxu0
        %s1818 = scalar_lea.vmem [#allocation7], 1408
        %v1819 = vld [vmem:[%s1818] sm:$0xff]
        %v1820 = vld [vmem:[%s1818 + $0x8] sm:$0xff]
        %v1821 = vld [vmem:[%s1818 + $0x10] sm:$0xff]
        %v1822 = vld [vmem:[%s1818 + $0x18] sm:$0xff]
        %v1823 = vld [vmem:[%s1818 + $0x20] sm:$0xff]
        %v1824 = vld [vmem:[%s1818 + $0x28] sm:$0xff]
        %v1825 = vld [vmem:[%s1818 + $0x30] sm:$0xff]
        %v1826 = vld [vmem:[%s1818 + $0x38] sm:$0xff]
        %v1827 = vld [vmem:[%s1818 + $0x40] sm:$0xff]
        %v1828 = vld [vmem:[%s1818 + $0x48] sm:$0xff]
        %v1829 = vld [vmem:[%s1818 + $0x50] sm:$0xff]
        %v1830 = vld [vmem:[%s1818 + $0x58] sm:$0xff]
        %v1831 = vld [vmem:[%s1818 + $0x60] sm:$0xff]
        %v1832 = vld [vmem:[%s1818 + $0x68] sm:$0xff]
        %v1833 = vld [vmem:[%s1818 + $0x70] sm:$0xff]
        %v1834 = vld [vmem:[%s1818 + $0x78] sm:$0xff]
        %v1835 = vrot.slane %v841, 3
        %1837 = vmatprep.subr.mxu0 0.0
        %1838 = vmatpush1.msra.mxu0 %v1819
        %1839 = vmatprep.subr.mxu0 0.0
        %1840 = vmatpush1.msra.mxu0 %v1820
        %1841 = vmatprep.subr.mxu0 0.0
        %1842 = vmatpush1.msra.mxu0 %v1821
        %1843 = vmatprep.subr.mxu0 0.0
        %1844 = vmatpush1.msra.mxu0 %v1822
        %1845 = vmatprep.subr.mxu0 0.0
        %1846 = vmatpush1.msra.mxu0 %v1823
        %1847 = vmatprep.subr.mxu0 0.0
        %1848 = vmatpush1.msra.mxu0 %v1824
        %1849 = vmatprep.subr.mxu0 0.0
        %1850 = vmatpush1.msra.mxu0 %v1825
        %1851 = vmatprep.subr.mxu0 0.0
        %1852 = vmatpush1.msra.mxu0 %v1826
        %1853 = vmatprep.subr.mxu0 0.0
        %1854 = vmatpush1.msra.mxu0 %v1827
        %1855 = vmatprep.subr.mxu0 0.0
        %1856 = vmatpush1.msra.mxu0 %v1828
        %1857 = vmatprep.subr.mxu0 0.0
        %1858 = vmatpush1.msra.mxu0 %v1829
        %1859 = vmatprep.subr.mxu0 0.0
        %1860 = vmatpush1.msra.mxu0 %v1830
        %1861 = vmatprep.subr.mxu0 0.0
        %1862 = vmatpush1.msra.mxu0 %v1831
        %1863 = vmatprep.subr.mxu0 0.0
        %1864 = vmatpush1.msra.mxu0 %v1832
        %1865 = vmatprep.subr.mxu0 0.0
        %1866 = vmatpush1.msra.mxu0 %v1833
        %1867 = vmatprep.subr.mxu0 0.0
        %1868 = vmatpush1.msra.mxu0 %v1834
        %1869 = vmatprep.subr.mxu0 0.0
        %1870 = vmatpush1.msra.mxu0 0.0
        %1871 = vmatprep.subr.mxu0 0.0
        %1872 = vmatpush1.msra.mxu0 0.0
        %1873 = vmatprep.subr.mxu0 0.0
        %1874 = vmatpush1.msra.mxu0 0.0
        %1875 = vmatprep.subr.mxu0 0.0
        %1876 = vmatpush1.msra.mxu0 0.0
        %1877 = vmatprep.subr.mxu0 0.0
        %1878 = vmatpush1.msra.mxu0 0.0
        %1879 = vmatprep.subr.mxu0 0.0
        %1880 = vmatpush1.msra.mxu0 0.0
        %1881 = vmatprep.subr.mxu0 0.0
        %1882 = vmatpush1.msra.mxu0 0.0
        %1883 = vmatprep.subr.mxu0 0.0
        %1884 = vmatpush1.msra.mxu0 0.0
        %1885 = vmatprep.subr.mxu0 0.0
        %1886 = vmatpush1.msra.mxu0 0.0
        %1887 = vmatprep.subr.mxu0 0.0
        %1888 = vmatpush1.msra.mxu0 0.0
        %1889 = vmatprep.subr.mxu0 0.0
        %1890 = vmatpush1.msra.mxu0 0.0
        %1891 = vmatprep.subr.mxu0 0.0
        %1892 = vmatpush1.msra.mxu0 0.0
        %1893 = vmatprep.subr.mxu0 0.0
        %1894 = vmatpush1.msra.mxu0 0.0
        %1895 = vmatprep.subr.mxu0 0.0
        %1896 = vmatpush1.msra.mxu0 0.0
        %1897 = vmatprep.subr.mxu0 0.0
        %1898 = vmatpush1.msra.mxu0 0.0
        %1899 = vmatprep.subr.mxu0 0.0
        %1900 = vmatpush1.msra.mxu0 0.0
        %1901 = vmatprep.mubr.f32.mxu0 0.0
        %1902 = vmatmul.mubr.f32.gmra.mrb[0].mxu0 %v1835
        %v1903 = vpop.f32.mrb[0].mxu0
        %v1904 = vadd.f32 0.0, %v1903
        %v1905 = vpop.f32.mrb[0].mxu0
        %1906 = vdwg.mxu0
        %s1907 = scalar_lea.vmem [#allocation7], 1536
        %v1908 = vld [vmem:[%s1907] sm:$0xff]
        %v1909 = vld [vmem:[%s1907 + $0x8] sm:$0xff]
        %v1910 = vld [vmem:[%s1907 + $0x10] sm:$0xff]
        %v1911 = vld [vmem:[%s1907 + $0x18] sm:$0xff]
        %v1912 = vld [vmem:[%s1907 + $0x20] sm:$0xff]
        %v1913 = vld [vmem:[%s1907 + $0x28] sm:$0xff]
        %v1914 = vld [vmem:[%s1907 + $0x30] sm:$0xff]
        %v1915 = vld [vmem:[%s1907 + $0x38] sm:$0xff]
        %v1916 = vld [vmem:[%s1907 + $0x40] sm:$0xff]
        %v1917 = vld [vmem:[%s1907 + $0x48] sm:$0xff]
        %v1918 = vld [vmem:[%s1907 + $0x50] sm:$0xff]
        %v1919 = vld [vmem:[%s1907 + $0x58] sm:$0xff]
        %v1920 = vld [vmem:[%s1907 + $0x60] sm:$0xff]
        %v1921 = vld [vmem:[%s1907 + $0x68] sm:$0xff]
        %v1922 = vld [vmem:[%s1907 + $0x70] sm:$0xff]
        %v1923 = vld [vmem:[%s1907 + $0x78] sm:$0xff]
        %v1924 = vrot.slane %v841, 4
        %1926 = vmatprep.subr.mxu0 0.0
        %1927 = vmatpush1.msra.mxu0 %v1908
        %1928 = vmatprep.subr.mxu0 0.0
        %1929 = vmatpush1.msra.mxu0 %v1909
        %1930 = vmatprep.subr.mxu0 0.0
        %1931 = vmatpush1.msra.mxu0 %v1910
        %1932 = vmatprep.subr.mxu0 0.0
        %1933 = vmatpush1.msra.mxu0 %v1911
        %1934 = vmatprep.subr.mxu0 0.0
        %1935 = vmatpush1.msra.mxu0 %v1912
        %1936 = vmatprep.subr.mxu0 0.0
        %1937 = vmatpush1.msra.mxu0 %v1913
        %1938 = vmatprep.subr.mxu0 0.0
        %1939 = vmatpush1.msra.mxu0 %v1914
        %1940 = vmatprep.subr.mxu0 0.0
        %1941 = vmatpush1.msra.mxu0 %v1915
        %1942 = vmatprep.subr.mxu0 0.0
        %1943 = vmatpush1.msra.mxu0 %v1916
        %1944 = vmatprep.subr.mxu0 0.0
        %1945 = vmatpush1.msra.mxu0 %v1917
        %1946 = vmatprep.subr.mxu0 0.0
        %1947 = vmatpush1.msra.mxu0 %v1918
        %1948 = vmatprep.subr.mxu0 0.0
        %1949 = vmatpush1.msra.mxu0 %v1919
        %1950 = vmatprep.subr.mxu0 0.0
        %1951 = vmatpush1.msra.mxu0 %v1920
        %1952 = vmatprep.subr.mxu0 0.0
        %1953 = vmatpush1.msra.mxu0 %v1921
        %1954 = vmatprep.subr.mxu0 0.0
        %1955 = vmatpush1.msra.mxu0 %v1922
        %1956 = vmatprep.subr.mxu0 0.0
        %1957 = vmatpush1.msra.mxu0 %v1923
        %1958 = vmatprep.subr.mxu0 0.0
        %1959 = vmatpush1.msra.mxu0 0.0
        %1960 = vmatprep.subr.mxu0 0.0
        %1961 = vmatpush1.msra.mxu0 0.0
        %1962 = vmatprep.subr.mxu0 0.0
        %1963 = vmatpush1.msra.mxu0 0.0
        %1964 = vmatprep.subr.mxu0 0.0
        %1965 = vmatpush1.msra.mxu0 0.0
        %1966 = vmatprep.subr.mxu0 0.0
        %1967 = vmatpush1.msra.mxu0 0.0
        %1968 = vmatprep.subr.mxu0 0.0
        %1969 = vmatpush1.msra.mxu0 0.0
        %1970 = vmatprep.subr.mxu0 0.0
        %1971 = vmatpush1.msra.mxu0 0.0
        %1972 = vmatprep.subr.mxu0 0.0
        %1973 = vmatpush1.msra.mxu0 0.0
        %1974 = vmatprep.subr.mxu0 0.0
        %1975 = vmatpush1.msra.mxu0 0.0
        %1976 = vmatprep.subr.mxu0 0.0
        %1977 = vmatpush1.msra.mxu0 0.0
        %1978 = vmatprep.subr.mxu0 0.0
        %1979 = vmatpush1.msra.mxu0 0.0
        %1980 = vmatprep.subr.mxu0 0.0
        %1981 = vmatpush1.msra.mxu0 0.0
        %1982 = vmatprep.subr.mxu0 0.0
        %1983 = vmatpush1.msra.mxu0 0.0
        %1984 = vmatprep.subr.mxu0 0.0
        %1985 = vmatpush1.msra.mxu0 0.0
        %1986 = vmatprep.subr.mxu0 0.0
        %1987 = vmatpush1.msra.mxu0 0.0
        %1988 = vmatprep.subr.mxu0 0.0
        %1989 = vmatpush1.msra.mxu0 0.0
        %1990 = vmatprep.mubr.f32.mxu0 0.0
        %1991 = vmatmul.mubr.f32.gmra.mrb[0].mxu0 %v1924
        %v1992 = vpop.f32.mrb[0].mxu0
        %v1993 = vadd.f32 0.0, %v1992
        %v1994 = vpop.f32.mrb[0].mxu0
        %1995 = vdwg.mxu0
        %s1996 = scalar_lea.vmem [#allocation7], 1664
        %v1997 = vld [vmem:[%s1996] sm:$0xff]
        %v1998 = vld [vmem:[%s1996 + $0x8] sm:$0xff]
        %v1999 = vld [vmem:[%s1996 + $0x10] sm:$0xff]
        %v2000 = vld [vmem:[%s1996 + $0x18] sm:$0xff]
        %v2001 = vld [vmem:[%s1996 + $0x20] sm:$0xff]
        %v2002 = vld [vmem:[%s1996 + $0x28] sm:$0xff]
        %v2003 = vld [vmem:[%s1996 + $0x30] sm:$0xff]
        %v2004 = vld [vmem:[%s1996 + $0x38] sm:$0xff]
        %v2005 = vld [vmem:[%s1996 + $0x40] sm:$0xff]
        %v2006 = vld [vmem:[%s1996 + $0x48] sm:$0xff]
        %v2007 = vld [vmem:[%s1996 + $0x50] sm:$0xff]
        %v2008 = vld [vmem:[%s1996 + $0x58] sm:$0xff]
        %v2009 = vld [vmem:[%s1996 + $0x60] sm:$0xff]
        %v2010 = vld [vmem:[%s1996 + $0x68] sm:$0xff]
        %v2011 = vld [vmem:[%s1996 + $0x70] sm:$0xff]
        %v2012 = vld [vmem:[%s1996 + $0x78] sm:$0xff]
        %v2013 = vrot.slane %v841, 5
        %2015 = vmatprep.subr.mxu0 0.0
        %2016 = vmatpush1.msra.mxu0 %v1997
        %2017 = vmatprep.subr.mxu0 0.0
        %2018 = vmatpush1.msra.mxu0 %v1998
        %2019 = vmatprep.subr.mxu0 0.0
        %2020 = vmatpush1.msra.mxu0 %v1999
        %2021 = vmatprep.subr.mxu0 0.0
        %2022 = vmatpush1.msra.mxu0 %v2000
        %2023 = vmatprep.subr.mxu0 0.0
        %2024 = vmatpush1.msra.mxu0 %v2001
        %2025 = vmatprep.subr.mxu0 0.0
        %2026 = vmatpush1.msra.mxu0 %v2002
        %2027 = vmatprep.subr.mxu0 0.0
        %2028 = vmatpush1.msra.mxu0 %v2003
        %2029 = vmatprep.subr.mxu0 0.0
        %2030 = vmatpush1.msra.mxu0 %v2004
        %2031 = vmatprep.subr.mxu0 0.0
        %2032 = vmatpush1.msra.mxu0 %v2005
        %2033 = vmatprep.subr.mxu0 0.0
        %2034 = vmatpush1.msra.mxu0 %v2006
        %2035 = vmatprep.subr.mxu0 0.0
        %2036 = vmatpush1.msra.mxu0 %v2007
        %2037 = vmatprep.subr.mxu0 0.0
        %2038 = vmatpush1.msra.mxu0 %v2008
        %2039 = vmatprep.subr.mxu0 0.0
        %2040 = vmatpush1.msra.mxu0 %v2009
        %2041 = vmatprep.subr.mxu0 0.0
        %2042 = vmatpush1.msra.mxu0 %v2010
        %2043 = vmatprep.subr.mxu0 0.0
        %2044 = vmatpush1.msra.mxu0 %v2011
        %2045 = vmatprep.subr.mxu0 0.0
        %2046 = vmatpush1.msra.mxu0 %v2012
        %2047 = vmatprep.subr.mxu0 0.0
        %2048 = vmatpush1.msra.mxu0 0.0
        %2049 = vmatprep.subr.mxu0 0.0
        %2050 = vmatpush1.msra.mxu0 0.0
        %2051 = vmatprep.subr.mxu0 0.0
        %2052 = vmatpush1.msra.mxu0 0.0
        %2053 = vmatprep.subr.mxu0 0.0
        %2054 = vmatpush1.msra.mxu0 0.0
        %2055 = vmatprep.subr.mxu0 0.0
        %2056 = vmatpush1.msra.mxu0 0.0
        %2057 = vmatprep.subr.mxu0 0.0
        %2058 = vmatpush1.msra.mxu0 0.0
        %2059 = vmatprep.subr.mxu0 0.0
        %2060 = vmatpush1.msra.mxu0 0.0
        %2061 = vmatprep.subr.mxu0 0.0
        %2062 = vmatpush1.msra.mxu0 0.0
        %2063 = vmatprep.subr.mxu0 0.0
        %2064 = vmatpush1.msra.mxu0 0.0
        %2065 = vmatprep.subr.mxu0 0.0
        %2066 = vmatpush1.msra.mxu0 0.0
        %2067 = vmatprep.subr.mxu0 0.0
        %2068 = vmatpush1.msra.mxu0 0.0
        %2069 = vmatprep.subr.mxu0 0.0
        %2070 = vmatpush1.msra.mxu0 0.0
        %2071 = vmatprep.subr.mxu0 0.0
        %2072 = vmatpush1.msra.mxu0 0.0
        %2073 = vmatprep.subr.mxu0 0.0
        %2074 = vmatpush1.msra.mxu0 0.0
        %2075 = vmatprep.subr.mxu0 0.0
        %2076 = vmatpush1.msra.mxu0 0.0
        %2077 = vmatprep.subr.mxu0 0.0
        %2078 = vmatpush1.msra.mxu0 0.0
        %2079 = vmatprep.mubr.f32.mxu0 0.0
        %2080 = vmatmul.mubr.f32.gmra.mrb[0].mxu0 %v2013
        %v2081 = vpop.f32.mrb[0].mxu0
        %v2082 = vadd.f32 0.0, %v2081
        %v2083 = vpop.f32.mrb[0].mxu0
        %2084 = vdwg.mxu0
        %s2085 = scalar_lea.vmem [#allocation7], 1792
        %v2086 = vld [vmem:[%s2085] sm:$0xff]
        %v2087 = vld [vmem:[%s2085 + $0x8] sm:$0xff]
        %v2088 = vld [vmem:[%s2085 + $0x10] sm:$0xff]
        %v2089 = vld [vmem:[%s2085 + $0x18] sm:$0xff]
        %v2090 = vld [vmem:[%s2085 + $0x20] sm:$0xff]
        %v2091 = vld [vmem:[%s2085 + $0x28] sm:$0xff]
        %v2092 = vld [vmem:[%s2085 + $0x30] sm:$0xff]
        %v2093 = vld [vmem:[%s2085 + $0x38] sm:$0xff]
        %v2094 = vld [vmem:[%s2085 + $0x40] sm:$0xff]
        %v2095 = vld [vmem:[%s2085 + $0x48] sm:$0xff]
        %v2096 = vld [vmem:[%s2085 + $0x50] sm:$0xff]
        %v2097 = vld [vmem:[%s2085 + $0x58] sm:$0xff]
        %v2098 = vld [vmem:[%s2085 + $0x60] sm:$0xff]
        %v2099 = vld [vmem:[%s2085 + $0x68] sm:$0xff]
        %v2100 = vld [vmem:[%s2085 + $0x70] sm:$0xff]
        %v2101 = vld [vmem:[%s2085 + $0x78] sm:$0xff]
        %v2102 = vrot.slane %v841, 6
        %2104 = vmatprep.subr.mxu0 0.0
        %2105 = vmatpush1.msra.mxu0 %v2086
        %2106 = vmatprep.subr.mxu0 0.0
        %2107 = vmatpush1.msra.mxu0 %v2087
        %2108 = vmatprep.subr.mxu0 0.0
        %2109 = vmatpush1.msra.mxu0 %v2088
        %2110 = vmatprep.subr.mxu0 0.0
        %2111 = vmatpush1.msra.mxu0 %v2089
        %2112 = vmatprep.subr.mxu0 0.0
        %2113 = vmatpush1.msra.mxu0 %v2090
        %2114 = vmatprep.subr.mxu0 0.0
        %2115 = vmatpush1.msra.mxu0 %v2091
        %2116 = vmatprep.subr.mxu0 0.0
        %2117 = vmatpush1.msra.mxu0 %v2092
        %2118 = vmatprep.subr.mxu0 0.0
        %2119 = vmatpush1.msra.mxu0 %v2093
        %2120 = vmatprep.subr.mxu0 0.0
        %2121 = vmatpush1.msra.mxu0 %v2094
        %2122 = vmatprep.subr.mxu0 0.0
        %2123 = vmatpush1.msra.mxu0 %v2095
        %2124 = vmatprep.subr.mxu0 0.0
        %2125 = vmatpush1.msra.mxu0 %v2096
        %2126 = vmatprep.subr.mxu0 0.0
        %2127 = vmatpush1.msra.mxu0 %v2097
        %2128 = vmatprep.subr.mxu0 0.0
        %2129 = vmatpush1.msra.mxu0 %v2098
        %2130 = vmatprep.subr.mxu0 0.0
        %2131 = vmatpush1.msra.mxu0 %v2099
        %2132 = vmatprep.subr.mxu0 0.0
        %2133 = vmatpush1.msra.mxu0 %v2100
        %2134 = vmatprep.subr.mxu0 0.0
        %2135 = vmatpush1.msra.mxu0 %v2101
        %2136 = vmatprep.subr.mxu0 0.0
        %2137 = vmatpush1.msra.mxu0 0.0
        %2138 = vmatprep.subr.mxu0 0.0
        %2139 = vmatpush1.msra.mxu0 0.0
        %2140 = vmatprep.subr.mxu0 0.0
        %2141 = vmatpush1.msra.mxu0 0.0
        %2142 = vmatprep.subr.mxu0 0.0
        %2143 = vmatpush1.msra.mxu0 0.0
        %2144 = vmatprep.subr.mxu0 0.0
        %2145 = vmatpush1.msra.mxu0 0.0
        %2146 = vmatprep.subr.mxu0 0.0
        %2147 = vmatpush1.msra.mxu0 0.0
        %2148 = vmatprep.subr.mxu0 0.0
        %2149 = vmatpush1.msra.mxu0 0.0
        %2150 = vmatprep.subr.mxu0 0.0
        %2151 = vmatpush1.msra.mxu0 0.0
        %2152 = vmatprep.subr.mxu0 0.0
        %2153 = vmatpush1.msra.mxu0 0.0
        %2154 = vmatprep.subr.mxu0 0.0
        %2155 = vmatpush1.msra.mxu0 0.0
        %2156 = vmatprep.subr.mxu0 0.0
        %2157 = vmatpush1.msra.mxu0 0.0
        %2158 = vmatprep.subr.mxu0 0.0
        %2159 = vmatpush1.msra.mxu0 0.0
        %2160 = vmatprep.subr.mxu0 0.0
        %2161 = vmatpush1.msra.mxu0 0.0
        %2162 = vmatprep.subr.mxu0 0.0
        %2163 = vmatpush1.msra.mxu0 0.0
        %2164 = vmatprep.subr.mxu0 0.0
        %2165 = vmatpush1.msra.mxu0 0.0
        %2166 = vmatprep.subr.mxu0 0.0
        %2167 = vmatpush1.msra.mxu0 0.0
        %2168 = vmatprep.mubr.f32.mxu0 0.0
        %2169 = vmatmul.mubr.f32.gmra.mrb[0].mxu0 %v2102
        %v2170 = vpop.f32.mrb[0].mxu0
        %v2171 = vadd.f32 0.0, %v2170
        %v2172 = vpop.f32.mrb[0].mxu0
        %2173 = vdwg.mxu0
        %s2174 = scalar_lea.vmem [#allocation7], 1920
        %v2175 = vld [vmem:[%s2174] sm:$0xff]
        %v2176 = vld [vmem:[%s2174 + $0x8] sm:$0xff]
        %v2177 = vld [vmem:[%s2174 + $0x10] sm:$0xff]
        %v2178 = vld [vmem:[%s2174 + $0x18] sm:$0xff]
        %v2179 = vld [vmem:[%s2174 + $0x20] sm:$0xff]
        %v2180 = vld [vmem:[%s2174 + $0x28] sm:$0xff]
        %v2181 = vld [vmem:[%s2174 + $0x30] sm:$0xff]
        %v2182 = vld [vmem:[%s2174 + $0x38] sm:$0xff]
        %v2183 = vld [vmem:[%s2174 + $0x40] sm:$0xff]
        %v2184 = vld [vmem:[%s2174 + $0x48] sm:$0xff]
        %v2185 = vld [vmem:[%s2174 + $0x50] sm:$0xff]
        %v2186 = vld [vmem:[%s2174 + $0x58] sm:$0xff]
        %v2187 = vld [vmem:[%s2174 + $0x60] sm:$0xff]
        %v2188 = vld [vmem:[%s2174 + $0x68] sm:$0xff]
        %v2189 = vld [vmem:[%s2174 + $0x70] sm:$0xff]
        %v2190 = vld [vmem:[%s2174 + $0x78] sm:$0xff]
        %v2191 = vrot.slane %v841, 7
        %2193 = vmatprep.subr.mxu0 0.0
        %2194 = vmatpush1.msra.mxu0 %v2175
        %2195 = vmatprep.subr.mxu0 0.0
        %2196 = vmatpush1.msra.mxu0 %v2176
        %2197 = vmatprep.subr.mxu0 0.0
        %2198 = vmatpush1.msra.mxu0 %v2177
        %2199 = vmatprep.subr.mxu0 0.0
        %2200 = vmatpush1.msra.mxu0 %v2178
        %2201 = vmatprep.subr.mxu0 0.0
        %2202 = vmatpush1.msra.mxu0 %v2179
        %2203 = vmatprep.subr.mxu0 0.0
        %2204 = vmatpush1.msra.mxu0 %v2180
        %2205 = vmatprep.subr.mxu0 0.0
        %2206 = vmatpush1.msra.mxu0 %v2181
        %2207 = vmatprep.subr.mxu0 0.0
        %2208 = vmatpush1.msra.mxu0 %v2182
        %2209 = vmatprep.subr.mxu0 0.0
        %2210 = vmatpush1.msra.mxu0 %v2183
        %2211 = vmatprep.subr.mxu0 0.0
        %2212 = vmatpush1.msra.mxu0 %v2184
        %2213 = vmatprep.subr.mxu0 0.0
        %2214 = vmatpush1.msra.mxu0 %v2185
        %2215 = vmatprep.subr.mxu0 0.0
        %2216 = vmatpush1.msra.mxu0 %v2186
        %2217 = vmatprep.subr.mxu0 0.0
        %2218 = vmatpush1.msra.mxu0 %v2187
        %2219 = vmatprep.subr.mxu0 0.0
        %2220 = vmatpush1.msra.mxu0 %v2188
        %2221 = vmatprep.subr.mxu0 0.0
        %2222 = vmatpush1.msra.mxu0 %v2189
        %2223 = vmatprep.subr.mxu0 0.0
        %2224 = vmatpush1.msra.mxu0 %v2190
        %2225 = vmatprep.subr.mxu0 0.0
        %2226 = vmatpush1.msra.mxu0 0.0
        %2227 = vmatprep.subr.mxu0 0.0
        %2228 = vmatpush1.msra.mxu0 0.0
        %2229 = vmatprep.subr.mxu0 0.0
        %2230 = vmatpush1.msra.mxu0 0.0
        %2231 = vmatprep.subr.mxu0 0.0
        %2232 = vmatpush1.msra.mxu0 0.0
        %2233 = vmatprep.subr.mxu0 0.0
        %2234 = vmatpush1.msra.mxu0 0.0
        %2235 = vmatprep.subr.mxu0 0.0
        %2236 = vmatpush1.msra.mxu0 0.0
        %2237 = vmatprep.subr.mxu0 0.0
        %2238 = vmatpush1.msra.mxu0 0.0
        %2239 = vmatprep.subr.mxu0 0.0
        %2240 = vmatpush1.msra.mxu0 0.0
        %2241 = vmatprep.subr.mxu0 0.0
        %2242 = vmatpush1.msra.mxu0 0.0
        %2243 = vmatprep.subr.mxu0 0.0
        %2244 = vmatpush1.msra.mxu0 0.0
        %2245 = vmatprep.subr.mxu0 0.0
        %2246 = vmatpush1.msra.mxu0 0.0
        %2247 = vmatprep.subr.mxu0 0.0
        %2248 = vmatpush1.msra.mxu0 0.0
        %2249 = vmatprep.subr.mxu0 0.0
        %2250 = vmatpush1.msra.mxu0 0.0
        %2251 = vmatprep.subr.mxu0 0.0
        %2252 = vmatpush1.msra.mxu0 0.0
        %2253 = vmatprep.subr.mxu0 0.0
        %2254 = vmatpush1.msra.mxu0 0.0
        %2255 = vmatprep.subr.mxu0 0.0
        %2256 = vmatpush1.msra.mxu0 0.0
        %2257 = vmatprep.mubr.f32.mxu0 0.0
        %2258 = vmatmul.mubr.f32.gmra.mrb[0].mxu0 %v2191
        %v2259 = vpop.f32.mrb[0].mxu0
        %v2260 = vadd.f32 0.0, %v2259
        %v2261 = vpop.f32.mrb[0].mxu0
        %2262 = vdwg.mxu0
        %v2264 = vrot.slane %v1015, 7
        %v2267 = vrot.slane %v1104, 6
        %v2270 = vrot.slane %v1193, 5
        %v2273 = vrot.slane %v1282, 4
        %v2276 = vrot.slane %v1371, 3
        %v2279 = vrot.slane %v1460, 2
        %v2282 = vrot.slane %v1549, 1
        %v2285 = vrot.slane %v1726, 7
        %v2288 = vrot.slane %v1815, 6
        %v2291 = vrot.slane %v1904, 5
        %v2294 = vrot.slane %v1993, 4
        %v2297 = vrot.slane %v2082, 3
        %v2300 = vrot.slane %v2171, 2
        %v2303 = vrot.slane %v2260, 1
        %vm2305 = vcmask 1040384
        %v2306 = vsel %vm2305, %v925, %v2264
        %vm2307 = vcmask 1041408
        %v2308 = vsel %vm2307, %v2306, %v2267
        %vm2309 = vcmask 1042432
        %v2310 = vsel %vm2309, %v2308, %v2270
        %vm2311 = vcmask 1043456
        %v2312 = vsel %vm2311, %v2310, %v2273
        %vm2313 = vcmask 1044480
        %v2314 = vsel %vm2313, %v2312, %v2276
        %v2315 = vsel %vm640, %v2314, %v2279
        %vm2316 = vcmask 1046528
        %v2317 = vsel %vm2316, %v2315, %v2282
        %v2318 = vsel %vm2305, %v1636, %v2285
        %v2319 = vsel %vm2307, %v2318, %v2288
        %v2320 = vsel %vm2309, %v2319, %v2291
        %v2321 = vsel %vm2311, %v2320, %v2294
        %v2322 = vsel %vm2313, %v2321, %v2297
        %v2323 = vsel %vm640, %v2322, %v2300
        %v2324 = vsel %vm2316, %v2323, %v2303
        %v2325 = vld [vmem:[#allocation9] sm:$0xff]
        %v2326 = vld [vmem:[#allocation9 + $0x8] sm:$0xff]
        %v2327 = vld [vmem:[#allocation9 + $0x10] sm:$0xff]
        %v2328 = vld [vmem:[#allocation9 + $0x18] sm:$0xff]
        %v2329 = vld [vmem:[%s6] sm:$0xff]
        %v2330 = vld [vmem:[%s6 + $0x8] sm:$0xff]
        %v2331 = vld [vmem:[%s6 + $0x10] sm:$0xff]
        %v2332 = vld [vmem:[%s6 + $0x18] sm:$0xff]
        %2335 = vrot.lane.b32.xlu0 %v2317, 64
        %v2336 = vpop.permute.xlu0 %2335
        %2337 = vrot.lane.b32.xlu0 %v2324, 64
        %v2338 = vpop.permute.xlu0 %2337
        %vm2341 = vcmask 130048
        %v2343 = vsel %vm2341, %v2329, 0
        %v2346 = vsel %vm2341, %v2330, 0
        %v2349 = vsel %vm2341, %v2331, 0
        %v2352 = vsel %vm2341, %v2332, 0
        %2354 = vmatprep.subr.mxu0 0.0
        %2355 = vmatpush1.msra.mxu0 %v2336
        %2356 = vmatprep.subr.mxu0 0.0
        %2357 = vmatpush1.msra.mxu0 %v2338
        %2358 = vmatprep.subr.mxu0 0.0
        %2359 = vmatpush1.msra.mxu0 0.0
        %2360 = vmatprep.subr.mxu0 0.0
        %2361 = vmatpush1.msra.mxu0 0.0
        %2362 = vmatprep.subr.mxu0 0.0
        %2363 = vmatpush1.msra.mxu0 0.0
        %2364 = vmatprep.subr.mxu0 0.0
        %2365 = vmatpush1.msra.mxu0 0.0
        %2366 = vmatprep.subr.mxu0 0.0
        %2367 = vmatpush1.msra.mxu0 0.0
        %2368 = vmatprep.subr.mxu0 0.0
        %2369 = vmatpush1.msra.mxu0 0.0
        %2370 = vmatprep.subr.mxu0 0.0
        %2371 = vmatpush1.msra.mxu0 0.0
        %2372 = vmatprep.subr.mxu0 0.0
        %2373 = vmatpush1.msra.mxu0 0.0
        %2374 = vmatprep.subr.mxu0 0.0
        %2375 = vmatpush1.msra.mxu0 0.0
        %2376 = vmatprep.subr.mxu0 0.0
        %2377 = vmatpush1.msra.mxu0 0.0
        %2378 = vmatprep.subr.mxu0 0.0
        %2379 = vmatpush1.msra.mxu0 0.0
        %2380 = vmatprep.subr.mxu0 0.0
        %2381 = vmatpush1.msra.mxu0 0.0
        %2382 = vmatprep.subr.mxu0 0.0
        %2383 = vmatpush1.msra.mxu0 0.0
        %2384 = vmatprep.subr.mxu0 0.0
        %2385 = vmatpush1.msra.mxu0 0.0
        %2386 = vmatprep.subr.mxu0 0.0
        %2387 = vmatpush1.msra.mxu0 0.0
        %2388 = vmatprep.subr.mxu0 0.0
        %2389 = vmatpush1.msra.mxu0 0.0
        %2390 = vmatprep.subr.mxu0 0.0
        %2391 = vmatpush1.msra.mxu0 0.0
        %2392 = vmatprep.subr.mxu0 0.0
        %2393 = vmatpush1.msra.mxu0 0.0
        %2394 = vmatprep.subr.mxu0 0.0
        %2395 = vmatpush1.msra.mxu0 0.0
        %2396 = vmatprep.subr.mxu0 0.0
        %2397 = vmatpush1.msra.mxu0 0.0
        %2398 = vmatprep.subr.mxu0 0.0
        %2399 = vmatpush1.msra.mxu0 0.0
        %2400 = vmatprep.subr.mxu0 0.0
        %2401 = vmatpush1.msra.mxu0 0.0
        %2402 = vmatprep.subr.mxu0 0.0
        %2403 = vmatpush1.msra.mxu0 0.0
        %2404 = vmatprep.subr.mxu0 0.0
        %2405 = vmatpush1.msra.mxu0 0.0
        %2406 = vmatprep.subr.mxu0 0.0
        %2407 = vmatpush1.msra.mxu0 0.0
        %2408 = vmatprep.subr.mxu0 0.0
        %2409 = vmatpush1.msra.mxu0 0.0
        %2410 = vmatprep.subr.mxu0 0.0
        %2411 = vmatpush1.msra.mxu0 0.0
        %2412 = vmatprep.subr.mxu0 0.0
        %2413 = vmatpush1.msra.mxu0 0.0
        %2414 = vmatprep.subr.mxu0 0.0
        %2415 = vmatpush1.msra.mxu0 0.0
        %2416 = vmatprep.subr.mxu0 0.0
        %2417 = vmatpush1.msra.mxu0 0.0
        %2418 = vmatprep.mubr.f32.mxu0 0.0
        %2419 = vmatmul.mubr.f32.gmra.mrb[0].mxu0 %v2343
        %v2420 = vpop.f32.mrb[0].mxu0
        %v2421 = vadd.f32 0.0, %v2420
        %v2422 = vpop.f32.mrb[0].mxu0
        %2423 = vmatprep.mubr.f32.mxu0 0.0
        %2424 = vmatmul.mubr.f32.gmra.mrb[0].mxu0 %v2346
        %v2425 = vpop.f32.mrb[0].mxu0
        %v2426 = vadd.f32 0.0, %v2425
        %v2427 = vpop.f32.mrb[0].mxu0
        %2428 = vmatprep.mubr.f32.mxu0 0.0
        %2429 = vmatmul.mubr.f32.gmra.mrb[0].mxu0 %v2349
        %v2430 = vpop.f32.mrb[0].mxu0
        %v2431 = vadd.f32 0.0, %v2430
        %v2432 = vpop.f32.mrb[0].mxu0
        %2433 = vmatprep.mubr.f32.mxu0 0.0
        %2434 = vmatmul.mubr.f32.gmra.mrb[0].mxu0 %v2352
        %v2435 = vpop.f32.mrb[0].mxu0
        %v2436 = vadd.f32 0.0, %v2435
        %v2437 = vpop.f32.mrb[0].mxu0
        %2438 = vdwg.mxu0
        %v2440 = vsel %vm2341, %v2325, 0
        %v2443 = vsel %vm2341, %v2326, 0
        %v2446 = vsel %vm2341, %v2327, 0
        %v2449 = vsel %vm2341, %v2328, 0
        %2451 = vmatprep.subr.mxu0 0.0
        %2452 = vmatpush1.msra.mxu0 %v2317
        %2453 = vmatprep.subr.mxu0 0.0
        %2454 = vmatpush1.msra.mxu0 %v2324
        %2455 = vmatprep.subr.mxu0 0.0
        %2456 = vmatpush1.msra.mxu0 0.0
        %2457 = vmatprep.subr.mxu0 0.0
        %2458 = vmatpush1.msra.mxu0 0.0
        %2459 = vmatprep.subr.mxu0 0.0
        %2460 = vmatpush1.msra.mxu0 0.0
        %2461 = vmatprep.subr.mxu0 0.0
        %2462 = vmatpush1.msra.mxu0 0.0
        %2463 = vmatprep.subr.mxu0 0.0
        %2464 = vmatpush1.msra.mxu0 0.0
        %2465 = vmatprep.subr.mxu0 0.0
        %2466 = vmatpush1.msra.mxu0 0.0
        %2467 = vmatprep.subr.mxu0 0.0
        %2468 = vmatpush1.msra.mxu0 0.0
        %2469 = vmatprep.subr.mxu0 0.0
        %2470 = vmatpush1.msra.mxu0 0.0
        %2471 = vmatprep.subr.mxu0 0.0
        %2472 = vmatpush1.msra.mxu0 0.0
        %2473 = vmatprep.subr.mxu0 0.0
        %2474 = vmatpush1.msra.mxu0 0.0
        %2475 = vmatprep.subr.mxu0 0.0
        %2476 = vmatpush1.msra.mxu0 0.0
        %2477 = vmatprep.subr.mxu0 0.0
        %2478 = vmatpush1.msra.mxu0 0.0
        %2479 = vmatprep.subr.mxu0 0.0
        %2480 = vmatpush1.msra.mxu0 0.0
        %2481 = vmatprep.subr.mxu0 0.0
        %2482 = vmatpush1.msra.mxu0 0.0
        %2483 = vmatprep.subr.mxu0 0.0
        %2484 = vmatpush1.msra.mxu0 0.0
        %2485 = vmatprep.subr.mxu0 0.0
        %2486 = vmatpush1.msra.mxu0 0.0
        %2487 = vmatprep.subr.mxu0 0.0
        %2488 = vmatpush1.msra.mxu0 0.0
        %2489 = vmatprep.subr.mxu0 0.0
        %2490 = vmatpush1.msra.mxu0 0.0
        %2491 = vmatprep.subr.mxu0 0.0
        %2492 = vmatpush1.msra.mxu0 0.0
        %2493 = vmatprep.subr.mxu0 0.0
        %2494 = vmatpush1.msra.mxu0 0.0
        %2495 = vmatprep.subr.mxu0 0.0
        %2496 = vmatpush1.msra.mxu0 0.0
        %2497 = vmatprep.subr.mxu0 0.0
        %2498 = vmatpush1.msra.mxu0 0.0
        %2499 = vmatprep.subr.mxu0 0.0
        %2500 = vmatpush1.msra.mxu0 0.0
        %2501 = vmatprep.subr.mxu0 0.0
        %2502 = vmatpush1.msra.mxu0 0.0
        %2503 = vmatprep.subr.mxu0 0.0
        %2504 = vmatpush1.msra.mxu0 0.0
        %2505 = vmatprep.subr.mxu0 0.0
        %2506 = vmatpush1.msra.mxu0 0.0
        %2507 = vmatprep.subr.mxu0 0.0
        %2508 = vmatpush1.msra.mxu0 0.0
        %2509 = vmatprep.subr.mxu0 0.0
        %2510 = vmatpush1.msra.mxu0 0.0
        %2511 = vmatprep.subr.mxu0 0.0
        %2512 = vmatpush1.msra.mxu0 0.0
        %2513 = vmatprep.subr.mxu0 0.0
        %2514 = vmatpush1.msra.mxu0 0.0
        %2515 = vmatprep.mubr.f32.mxu0 0.0
        %2516 = vmatmul.mubr.f32.gmra.mrb[0].mxu0 %v2440
        %v2517 = vpop.f32.mrb[0].mxu0
        %v2518 = vadd.f32 %v2421, %v2517
        %v2519 = vpop.f32.mrb[0].mxu0
        %2520 = vmatprep.mubr.f32.mxu0 0.0
        %2521 = vmatmul.mubr.f32.gmra.mrb[0].mxu0 %v2443
        %v2522 = vpop.f32.mrb[0].mxu0
        %v2523 = vadd.f32 %v2426, %v2522
        %v2524 = vpop.f32.mrb[0].mxu0
        %2525 = vmatprep.mubr.f32.mxu0 0.0
        %2526 = vmatmul.mubr.f32.gmra.mrb[0].mxu0 %v2446
        %v2527 = vpop.f32.mrb[0].mxu0
        %v2528 = vadd.f32 %v2431, %v2527
        %v2529 = vpop.f32.mrb[0].mxu0
        %2530 = vmatprep.mubr.f32.mxu0 0.0
        %2531 = vmatmul.mubr.f32.gmra.mrb[0].mxu0 %v2449
        %v2532 = vpop.f32.mrb[0].mxu0
        %v2533 = vadd.f32 %v2436, %v2532
        %v2534 = vpop.f32.mrb[0].mxu0
        %2535 = vdwg.mxu0
        %v2536 = vtanh.pop %v2518
        %v2537 = vtanh.pop %v2523
        %v2538 = vtanh.pop %v2528
        %v2539 = vtanh.pop %v2533
        %v2540 = vld [vmem:[#allocation10] sm:$0xff]
        %v2541 = vld [vmem:[#allocation10 + $0x8] sm:$0xff]
        %v2542 = vld [vmem:[#allocation10 + $0x10] sm:$0xff]
        %v2543 = vld [vmem:[#allocation10 + $0x18] sm:$0xff]
        %v2544 = vld [vmem:[#allocation10 + $0x20] sm:$0xff]
        %v2545 = vld [vmem:[#allocation10 + $0x28] sm:$0xff]
        %v2546 = vld [vmem:[#allocation10 + $0x30] sm:$0xff]
        %v2547 = vld [vmem:[#allocation10 + $0x38] sm:$0xff]
        %v2548 = vld [vmem:[%s8] sm:$0x1]
        %v2550 = vlaneseq
        %v2551 = vshrl.u32 %v2550, 7
        %v2552 = vsub.s32 0, %v2551
        %v2553 = vrot.slane %v2548, %v2552
        %v2556 = vsel %vm839, %v2536, 0
        %v2559 = vsel %vm839, %v2537, 0
        %v2562 = vsel %vm839, %v2538, 0
        %v2565 = vsel %vm839, %v2539, 0
        %2567 = vmatprep.subr.mxu0 0.0
        %2568 = vmatpush1.msra.mxu0 %v2540
        %2569 = vmatprep.subr.mxu0 0.0
        %2570 = vmatpush1.msra.mxu0 %v2541
        %2571 = vmatprep.subr.mxu0 0.0
        %2572 = vmatpush1.msra.mxu0 %v2542
        %2573 = vmatprep.subr.mxu0 0.0
        %2574 = vmatpush1.msra.mxu0 %v2543
        %2575 = vmatprep.subr.mxu0 0.0
        %2576 = vmatpush1.msra.mxu0 %v2544
        %2577 = vmatprep.subr.mxu0 0.0
        %2578 = vmatpush1.msra.mxu0 %v2545
        %2579 = vmatprep.subr.mxu0 0.0
        %2580 = vmatpush1.msra.mxu0 %v2546
        %2581 = vmatprep.subr.mxu0 0.0
        %2582 = vmatpush1.msra.mxu0 %v2547
        %2583 = vmatprep.subr.mxu0 0.0
        %2584 = vmatpush1.msra.mxu0 0.0
        %2585 = vmatprep.subr.mxu0 0.0
        %2586 = vmatpush1.msra.mxu0 0.0
        %2587 = vmatprep.subr.mxu0 0.0
        %2588 = vmatpush1.msra.mxu0 0.0
        %2589 = vmatprep.subr.mxu0 0.0
        %2590 = vmatpush1.msra.mxu0 0.0
        %2591 = vmatprep.subr.mxu0 0.0
        %2592 = vmatpush1.msra.mxu0 0.0
        %2593 = vmatprep.subr.mxu0 0.0
        %2594 = vmatpush1.msra.mxu0 0.0
        %2595 = vmatprep.subr.mxu0 0.0
        %2596 = vmatpush1.msra.mxu0 0.0
        %2597 = vmatprep.subr.mxu0 0.0
        %2598 = vmatpush1.msra.mxu0 0.0
        %2599 = vmatprep.subr.mxu0 0.0
        %2600 = vmatpush1.msra.mxu0 0.0
        %2601 = vmatprep.subr.mxu0 0.0
        %2602 = vmatpush1.msra.mxu0 0.0
        %2603 = vmatprep.subr.mxu0 0.0
        %2604 = vmatpush1.msra.mxu0 0.0
        %2605 = vmatprep.subr.mxu0 0.0
        %2606 = vmatpush1.msra.mxu0 0.0
        %2607 = vmatprep.subr.mxu0 0.0
        %2608 = vmatpush1.msra.mxu0 0.0
        %2609 = vmatprep.subr.mxu0 0.0
        %2610 = vmatpush1.msra.mxu0 0.0
        %2611 = vmatprep.subr.mxu0 0.0
        %2612 = vmatpush1.msra.mxu0 0.0
        %2613 = vmatprep.subr.mxu0 0.0
        %2614 = vmatpush1.msra.mxu0 0.0
        %2615 = vmatprep.subr.mxu0 0.0
        %2616 = vmatpush1.msra.mxu0 0.0
        %2617 = vmatprep.subr.mxu0 0.0
        %2618 = vmatpush1.msra.mxu0 0.0
        %2619 = vmatprep.subr.mxu0 0.0
        %2620 = vmatpush1.msra.mxu0 0.0
        %2621 = vmatprep.subr.mxu0 0.0
        %2622 = vmatpush1.msra.mxu0 0.0
        %2623 = vmatprep.subr.mxu0 0.0
        %2624 = vmatpush1.msra.mxu0 0.0
        %2625 = vmatprep.subr.mxu0 0.0
        %2626 = vmatpush1.msra.mxu0 0.0
        %2627 = vmatprep.subr.mxu0 0.0
        %2628 = vmatpush1.msra.mxu0 0.0
        %2629 = vmatprep.subr.mxu0 0.0
        %2630 = vmatpush1.msra.mxu0 0.0
        %2631 = vmatprep.mubr.f32.mxu0 0.0
        %2632 = vmatmul.mubr.f32.gmra.mrb[0].mxu0 %v2556
        %v2633 = vpop.f32.mrb[0].mxu0
        %v2634 = vadd.f32 %v2553, %v2633
        %v2635 = vpop.f32.mrb[0].mxu0
        %2636 = vmatprep.mubr.f32.mxu0 0.0
        %2637 = vmatmul.mubr.f32.gmra.mrb[0].mxu0 %v2559
        %v2638 = vpop.f32.mrb[0].mxu0
        %v2639 = vadd.f32 %v2553, %v2638
        %v2640 = vpop.f32.mrb[0].mxu0
        %2641 = vmatprep.mubr.f32.mxu0 0.0
        %2642 = vmatmul.mubr.f32.gmra.mrb[0].mxu0 %v2562
        %v2643 = vpop.f32.mrb[0].mxu0
        %v2644 = vadd.f32 %v2553, %v2643
        %v2645 = vpop.f32.mrb[0].mxu0
        %2646 = vmatprep.mubr.f32.mxu0 0.0
        %2647 = vmatmul.mubr.f32.gmra.mrb[0].mxu0 %v2565
        %v2648 = vpop.f32.mrb[0].mxu0
        %v2649 = vadd.f32 %v2553, %v2648
        %v2650 = vpop.f32.mrb[0].mxu0
        %2651 = vdwg.mxu0
        %v2652 = vtanh.pop %v2634
        %v2653 = vtanh.pop %v2639
        %v2654 = vtanh.pop %v2644
        %v2655 = vtanh.pop %v2649
        %v2656 = vld [vmem:[#allocation12] sm:$0xff]
        %v2657 = vld [vmem:[#allocation12 + $0x8] sm:$0xff]
        %v2658 = vld [vmem:[#allocation12 + $0x10] sm:$0xff]
        %v2659 = vld [vmem:[#allocation12 + $0x18] sm:$0xff]
        %v2660 = vld [vmem:[#allocation12 + $0x20] sm:$0xff]
        %v2661 = vld [vmem:[#allocation12 + $0x28] sm:$0xff]
        %v2662 = vld [vmem:[#allocation12 + $0x30] sm:$0xff]
        %v2663 = vld [vmem:[#allocation12 + $0x38] sm:$0xff]
        %v2664 = vld [vmem:[#allocation12 + $0x40] sm:$0xff]
        %v2665 = vld [vmem:[#allocation12 + $0x48] sm:$0xff]
        %v2666 = vld [vmem:[#allocation12 + $0x50] sm:$0xff]
        %v2667 = vld [vmem:[#allocation12 + $0x58] sm:$0xff]
        %v2668 = vld [vmem:[#allocation12 + $0x60] sm:$0xff]
        %v2669 = vld [vmem:[#allocation12 + $0x68] sm:$0xff]
        %v2670 = vld [vmem:[#allocation12 + $0x70] sm:$0xff]
        %v2671 = vld [vmem:[#allocation12 + $0x78] sm:$0xff]
        %v2672 = vld [vmem:[%s10] sm:$0x1]
        %v2674 = vlaneseq
        %v2675 = vshrl.u32 %v2674, 7
        %v2676 = vsub.s32 0, %v2675
        %v2677 = vrot.slane %v2672, %v2676
        %2679 = vmatprep.subr.mxu0 0.0
        %2680 = vmatpush1.msra.mxu0 %v2656
        %2681 = vmatprep.subr.mxu0 0.0
        %2682 = vmatpush1.msra.mxu0 %v2657
        %2683 = vmatprep.subr.mxu0 0.0
        %2684 = vmatpush1.msra.mxu0 %v2658
        %2685 = vmatprep.subr.mxu0 0.0
        %2686 = vmatpush1.msra.mxu0 %v2659
        %2687 = vmatprep.subr.mxu0 0.0
        %2688 = vmatpush1.msra.mxu0 %v2660
        %2689 = vmatprep.subr.mxu0 0.0
        %2690 = vmatpush1.msra.mxu0 %v2661
        %2691 = vmatprep.subr.mxu0 0.0
        %2692 = vmatpush1.msra.mxu0 %v2662
        %2693 = vmatprep.subr.mxu0 0.0
        %2694 = vmatpush1.msra.mxu0 %v2663
        %2695 = vmatprep.subr.mxu0 0.0
        %2696 = vmatpush1.msra.mxu0 %v2664
        %2697 = vmatprep.subr.mxu0 0.0
        %2698 = vmatpush1.msra.mxu0 %v2665
        %2699 = vmatprep.subr.mxu0 0.0
        %2700 = vmatpush1.msra.mxu0 %v2666
        %2701 = vmatprep.subr.mxu0 0.0
        %2702 = vmatpush1.msra.mxu0 %v2667
        %2703 = vmatprep.subr.mxu0 0.0
        %2704 = vmatpush1.msra.mxu0 %v2668
        %2705 = vmatprep.subr.mxu0 0.0
        %2706 = vmatpush1.msra.mxu0 %v2669
        %2707 = vmatprep.subr.mxu0 0.0
        %2708 = vmatpush1.msra.mxu0 %v2670
        %2709 = vmatprep.subr.mxu0 0.0
        %2710 = vmatpush1.msra.mxu0 %v2671
        %2711 = vmatprep.subr.mxu0 0.0
        %2712 = vmatpush1.msra.mxu0 0.0
        %2713 = vmatprep.subr.mxu0 0.0
        %2714 = vmatpush1.msra.mxu0 0.0
        %2715 = vmatprep.subr.mxu0 0.0
        %2716 = vmatpush1.msra.mxu0 0.0
        %2717 = vmatprep.subr.mxu0 0.0
        %2718 = vmatpush1.msra.mxu0 0.0
        %2719 = vmatprep.subr.mxu0 0.0
        %2720 = vmatpush1.msra.mxu0 0.0
        %2721 = vmatprep.subr.mxu0 0.0
        %2722 = vmatpush1.msra.mxu0 0.0
        %2723 = vmatprep.subr.mxu0 0.0
        %2724 = vmatpush1.msra.mxu0 0.0
        %2725 = vmatprep.subr.mxu0 0.0
        %2726 = vmatpush1.msra.mxu0 0.0
        %2727 = vmatprep.subr.mxu0 0.0
        %2728 = vmatpush1.msra.mxu0 0.0
        %2729 = vmatprep.subr.mxu0 0.0
        %2730 = vmatpush1.msra.mxu0 0.0
        %2731 = vmatprep.subr.mxu0 0.0
        %2732 = vmatpush1.msra.mxu0 0.0
        %2733 = vmatprep.subr.mxu0 0.0
        %2734 = vmatpush1.msra.mxu0 0.0
        %2735 = vmatprep.subr.mxu0 0.0
        %2736 = vmatpush1.msra.mxu0 0.0
        %2737 = vmatprep.subr.mxu0 0.0
        %2738 = vmatpush1.msra.mxu0 0.0
        %2739 = vmatprep.subr.mxu0 0.0
        %2740 = vmatpush1.msra.mxu0 0.0
        %2741 = vmatprep.subr.mxu0 0.0
        %2742 = vmatpush1.msra.mxu0 0.0
        %2743 = vmatprep.mubr.f32.mxu0 0.0
        %2744 = vmatmul.mubr.f32.gmra.mrb[0].mxu0 %v2652
        %v2745 = vpop.f32.mrb[0].mxu0
        %v2746 = vadd.f32 %v2677, %v2745
        %v2747 = vpop.f32.mrb[0].mxu0
        %2748 = vmatprep.mubr.f32.mxu0 0.0
        %2749 = vmatmul.mubr.f32.gmra.mrb[0].mxu0 %v2653
        %v2750 = vpop.f32.mrb[0].mxu0
        %v2751 = vadd.f32 %v2677, %v2750
        %v2752 = vpop.f32.mrb[0].mxu0
        %2753 = vmatprep.mubr.f32.mxu0 0.0
        %2754 = vmatmul.mubr.f32.gmra.mrb[0].mxu0 %v2654
        %v2755 = vpop.f32.mrb[0].mxu0
        %v2756 = vadd.f32 %v2677, %v2755
        %v2757 = vpop.f32.mrb[0].mxu0
        %2758 = vmatprep.mubr.f32.mxu0 0.0
        %2759 = vmatmul.mubr.f32.gmra.mrb[0].mxu0 %v2655
        %v2760 = vpop.f32.mrb[0].mxu0
        %v2761 = vadd.f32 %v2677, %v2760
        %v2762 = vpop.f32.mrb[0].mxu0
        %2763 = vdwg.mxu0
        %v2764 = vtanh.pop %v2746
        %v2765 = vtanh.pop %v2751
        %v2766 = vtanh.pop %v2756
        %v2767 = vtanh.pop %v2761
        %v2768 = vld [vmem:[#allocation13] sm:$0xff]
        %v2769 = vld [vmem:[#allocation13 + $0x8] sm:$0xff]
        %v2770 = vld [vmem:[#allocation13 + $0x10] sm:$0xff]
        %v2771 = vld [vmem:[#allocation13 + $0x18] sm:$0xff]
        %v2772 = vld [vmem:[#allocation13 + $0x20] sm:$0xff]
        %v2773 = vld [vmem:[#allocation13 + $0x28] sm:$0xff]
        %v2774 = vld [vmem:[#allocation13 + $0x30] sm:$0xff]
        %v2775 = vld [vmem:[#allocation13 + $0x38] sm:$0xff]
        %v2776 = vld [vmem:[#allocation13 + $0x40] sm:$0xff]
        %v2777 = vld [vmem:[#allocation13 + $0x48] sm:$0xff]
        %v2778 = vld [vmem:[#allocation13 + $0x50] sm:$0xff]
        %v2779 = vld [vmem:[#allocation13 + $0x58] sm:$0xff]
        %v2780 = vld [vmem:[#allocation13 + $0x60] sm:$0xff]
        %v2781 = vld [vmem:[#allocation13 + $0x68] sm:$0xff]
        %v2782 = vld [vmem:[#allocation13 + $0x70] sm:$0xff]
        %v2783 = vld [vmem:[#allocation13 + $0x78] sm:$0xff]
        %v2784 = vld [vmem:[%s12] sm:$0x1]
        %v2786 = vlaneseq
        %v2787 = vshrl.u32 %v2786, 7
        %v2788 = vsub.s32 0, %v2787
        %v2789 = vrot.slane %v2784, %v2788
        %2791 = vmatprep.subr.mxu0 0.0
        %2792 = vmatpush1.msra.mxu0 %v2768
        %2793 = vmatprep.subr.mxu0 0.0
        %2794 = vmatpush1.msra.mxu0 %v2769
        %2795 = vmatprep.subr.mxu0 0.0
        %2796 = vmatpush1.msra.mxu0 %v2770
        %2797 = vmatprep.subr.mxu0 0.0
        %2798 = vmatpush1.msra.mxu0 %v2771
        %2799 = vmatprep.subr.mxu0 0.0
        %2800 = vmatpush1.msra.mxu0 %v2772
        %2801 = vmatprep.subr.mxu0 0.0
        %2802 = vmatpush1.msra.mxu0 %v2773
        %2803 = vmatprep.subr.mxu0 0.0
        %2804 = vmatpush1.msra.mxu0 %v2774
        %2805 = vmatprep.subr.mxu0 0.0
        %2806 = vmatpush1.msra.mxu0 %v2775
        %2807 = vmatprep.subr.mxu0 0.0
        %2808 = vmatpush1.msra.mxu0 %v2776
        %2809 = vmatprep.subr.mxu0 0.0
        %2810 = vmatpush1.msra.mxu0 %v2777
        %2811 = vmatprep.subr.mxu0 0.0
        %2812 = vmatpush1.msra.mxu0 %v2778
        %2813 = vmatprep.subr.mxu0 0.0
        %2814 = vmatpush1.msra.mxu0 %v2779
        %2815 = vmatprep.subr.mxu0 0.0
        %2816 = vmatpush1.msra.mxu0 %v2780
        %2817 = vmatprep.subr.mxu0 0.0
        %2818 = vmatpush1.msra.mxu0 %v2781
        %2819 = vmatprep.subr.mxu0 0.0
        %2820 = vmatpush1.msra.mxu0 %v2782
        %2821 = vmatprep.subr.mxu0 0.0
        %2822 = vmatpush1.msra.mxu0 %v2783
        %2823 = vmatprep.subr.mxu0 0.0
        %2824 = vmatpush1.msra.mxu0 0.0
        %2825 = vmatprep.subr.mxu0 0.0
        %2826 = vmatpush1.msra.mxu0 0.0
        %2827 = vmatprep.subr.mxu0 0.0
        %2828 = vmatpush1.msra.mxu0 0.0
        %2829 = vmatprep.subr.mxu0 0.0
        %2830 = vmatpush1.msra.mxu0 0.0
        %2831 = vmatprep.subr.mxu0 0.0
        %2832 = vmatpush1.msra.mxu0 0.0
        %2833 = vmatprep.subr.mxu0 0.0
        %2834 = vmatpush1.msra.mxu0 0.0
        %2835 = vmatprep.subr.mxu0 0.0
        %2836 = vmatpush1.msra.mxu0 0.0
        %2837 = vmatprep.subr.mxu0 0.0
        %2838 = vmatpush1.msra.mxu0 0.0
        %2839 = vmatprep.subr.mxu0 0.0
        %2840 = vmatpush1.msra.mxu0 0.0
        %2841 = vmatprep.subr.mxu0 0.0
        %2842 = vmatpush1.msra.mxu0 0.0
        %2843 = vmatprep.subr.mxu0 0.0
        %2844 = vmatpush1.msra.mxu0 0.0
        %2845 = vmatprep.subr.mxu0 0.0
        %2846 = vmatpush1.msra.mxu0 0.0
        %2847 = vmatprep.subr.mxu0 0.0
        %2848 = vmatpush1.msra.mxu0 0.0
        %2849 = vmatprep.subr.mxu0 0.0
        %2850 = vmatpush1.msra.mxu0 0.0
        %2851 = vmatprep.subr.mxu0 0.0
        %2852 = vmatpush1.msra.mxu0 0.0
        %2853 = vmatprep.subr.mxu0 0.0
        %2854 = vmatpush1.msra.mxu0 0.0
        %2855 = vmatprep.mubr.f32.mxu0 0.0
        %2856 = vmatmul.mubr.f32.gmra.mrb[0].mxu0 %v2764
        %v2857 = vpop.f32.mrb[0].mxu0
        %v2858 = vadd.f32 %v2789, %v2857
        %v2859 = vpop.f32.mrb[0].mxu0
        %2860 = vmatprep.mubr.f32.mxu0 0.0
        %2861 = vmatmul.mubr.f32.gmra.mrb[0].mxu0 %v2765
        %v2862 = vpop.f32.mrb[0].mxu0
        %v2863 = vadd.f32 %v2789, %v2862
        %v2864 = vpop.f32.mrb[0].mxu0
        %2865 = vmatprep.mubr.f32.mxu0 0.0
        %2866 = vmatmul.mubr.f32.gmra.mrb[0].mxu0 %v2766
        %v2867 = vpop.f32.mrb[0].mxu0
        %v2868 = vadd.f32 %v2789, %v2867
        %v2869 = vpop.f32.mrb[0].mxu0
        %2870 = vmatprep.mubr.f32.mxu0 0.0
        %2871 = vmatmul.mubr.f32.gmra.mrb[0].mxu0 %v2767
        %v2872 = vpop.f32.mrb[0].mxu0
        %v2873 = vadd.f32 %v2789, %v2872
        %v2874 = vpop.f32.mrb[0].mxu0
        %2875 = vdwg.mxu0
        %v2876 = vtanh.pop %v2858
        %v2877 = vtanh.pop %v2863
        %v2878 = vtanh.pop %v2868
        %v2879 = vtanh.pop %v2873
        %v2880 = vld [vmem:[%s13] sm:$0xff]
        %v2881 = vld [vmem:[%s13 + $0x8] sm:$0xff]
        %v2882 = vld [vmem:[%s13 + $0x10] sm:$0xff]
        %v2883 = vld [vmem:[%s13 + $0x18] sm:$0xff]
        %v2884 = vld [vmem:[%s13 + $0x20] sm:$0xff]
        %v2885 = vld [vmem:[%s13 + $0x28] sm:$0xff]
        %v2886 = vld [vmem:[%s13 + $0x30] sm:$0xff]
        %v2887 = vld [vmem:[%s13 + $0x38] sm:$0xff]
        %v2888 = vld [vmem:[%s13 + $0x40] sm:$0xff]
        %v2889 = vld [vmem:[%s13 + $0x48] sm:$0xff]
        %v2890 = vld [vmem:[%s13 + $0x50] sm:$0xff]
        %v2891 = vld [vmem:[%s13 + $0x58] sm:$0xff]
        %v2892 = vld [vmem:[%s13 + $0x60] sm:$0xff]
        %v2893 = vld [vmem:[%s13 + $0x68] sm:$0xff]
        %v2894 = vld [vmem:[%s13 + $0x70] sm:$0xff]
        %v2895 = vld [vmem:[%s13 + $0x78] sm:$0xff]
        %v2896 = vld [vmem:[%s14] sm:$0x1]
        %v2898 = vlaneseq
        %v2899 = vshrl.u32 %v2898, 7
        %v2900 = vsub.s32 0, %v2899
        %v2901 = vrot.slane %v2896, %v2900
        %2903 = vmatprep.subr.mxu0 0.0
        %2904 = vmatpush1.msra.mxu0 %v2880
        %2905 = vmatprep.subr.mxu0 0.0
        %2906 = vmatpush1.msra.mxu0 %v2881
        %2907 = vmatprep.subr.mxu0 0.0
        %2908 = vmatpush1.msra.mxu0 %v2882
        %2909 = vmatprep.subr.mxu0 0.0
        %2910 = vmatpush1.msra.mxu0 %v2883
        %2911 = vmatprep.subr.mxu0 0.0
        %2912 = vmatpush1.msra.mxu0 %v2884
        %2913 = vmatprep.subr.mxu0 0.0
        %2914 = vmatpush1.msra.mxu0 %v2885
        %2915 = vmatprep.subr.mxu0 0.0
        %2916 = vmatpush1.msra.mxu0 %v2886
        %2917 = vmatprep.subr.mxu0 0.0
        %2918 = vmatpush1.msra.mxu0 %v2887
        %2919 = vmatprep.subr.mxu0 0.0
        %2920 = vmatpush1.msra.mxu0 %v2888
        %2921 = vmatprep.subr.mxu0 0.0
        %2922 = vmatpush1.msra.mxu0 %v2889
        %2923 = vmatprep.subr.mxu0 0.0
        %2924 = vmatpush1.msra.mxu0 %v2890
        %2925 = vmatprep.subr.mxu0 0.0
        %2926 = vmatpush1.msra.mxu0 %v2891
        %2927 = vmatprep.subr.mxu0 0.0
        %2928 = vmatpush1.msra.mxu0 %v2892
        %2929 = vmatprep.subr.mxu0 0.0
        %2930 = vmatpush1.msra.mxu0 %v2893
        %2931 = vmatprep.subr.mxu0 0.0
        %2932 = vmatpush1.msra.mxu0 %v2894
        %2933 = vmatprep.subr.mxu0 0.0
        %2934 = vmatpush1.msra.mxu0 %v2895
        %2935 = vmatprep.subr.mxu0 0.0
        %2936 = vmatpush1.msra.mxu0 0.0
        %2937 = vmatprep.subr.mxu0 0.0
        %2938 = vmatpush1.msra.mxu0 0.0
        %2939 = vmatprep.subr.mxu0 0.0
        %2940 = vmatpush1.msra.mxu0 0.0
        %2941 = vmatprep.subr.mxu0 0.0
        %2942 = vmatpush1.msra.mxu0 0.0
        %2943 = vmatprep.subr.mxu0 0.0
        %2944 = vmatpush1.msra.mxu0 0.0
        %2945 = vmatprep.subr.mxu0 0.0
        %2946 = vmatpush1.msra.mxu0 0.0
        %2947 = vmatprep.subr.mxu0 0.0
        %2948 = vmatpush1.msra.mxu0 0.0
        %2949 = vmatprep.subr.mxu0 0.0
        %2950 = vmatpush1.msra.mxu0 0.0
        %2951 = vmatprep.subr.mxu0 0.0
        %2952 = vmatpush1.msra.mxu0 0.0
        %2953 = vmatprep.subr.mxu0 0.0
        %2954 = vmatpush1.msra.mxu0 0.0
        %2955 = vmatprep.subr.mxu0 0.0
        %2956 = vmatpush1.msra.mxu0 0.0
        %2957 = vmatprep.subr.mxu0 0.0
        %2958 = vmatpush1.msra.mxu0 0.0
        %2959 = vmatprep.subr.mxu0 0.0
        %2960 = vmatpush1.msra.mxu0 0.0
        %2961 = vmatprep.subr.mxu0 0.0
        %2962 = vmatpush1.msra.mxu0 0.0
        %2963 = vmatprep.subr.mxu0 0.0
        %2964 = vmatpush1.msra.mxu0 0.0
        %2965 = vmatprep.subr.mxu0 0.0
        %2966 = vmatpush1.msra.mxu0 0.0
        %2967 = vmatprep.mubr.f32.mxu0 0.0
        %2968 = vmatmul.mubr.f32.gmra.mrb[0].mxu0 %v2876
        %v2969 = vpop.f32.mrb[0].mxu0
        %v2970 = vadd.f32 %v2901, %v2969
        %v2971 = vpop.f32.mrb[0].mxu0
        %2972 = vmatprep.mubr.f32.mxu0 0.0
        %2973 = vmatmul.mubr.f32.gmra.mrb[0].mxu0 %v2877
        %v2974 = vpop.f32.mrb[0].mxu0
        %v2975 = vadd.f32 %v2901, %v2974
        %v2976 = vpop.f32.mrb[0].mxu0
        %2977 = vmatprep.mubr.f32.mxu0 0.0
        %2978 = vmatmul.mubr.f32.gmra.mrb[0].mxu0 %v2878
        %v2979 = vpop.f32.mrb[0].mxu0
        %v2980 = vadd.f32 %v2901, %v2979
        %v2981 = vpop.f32.mrb[0].mxu0
        %2982 = vmatprep.mubr.f32.mxu0 0.0
        %2983 = vmatmul.mubr.f32.gmra.mrb[0].mxu0 %v2879
        %v2984 = vpop.f32.mrb[0].mxu0
        %v2985 = vadd.f32 %v2901, %v2984
        %v2986 = vpop.f32.mrb[0].mxu0
        %2987 = vdwg.mxu0
        %vm2988 = vcmask 72704
        %2989 = vst.msk [vmem:[%s611] sm:$0xff] %vm2988, %v2970
        %2990 = vst.msk [vmem:[%s611 + $0x8] sm:$0xff] %vm2988, %v2975
        %2991 = vst.msk [vmem:[%s611 + $0x10] sm:$0xff] %vm2988, %v2980
        %2992 = vst.msk [vmem:[%s611 + $0x18] sm:$0xff] %vm2988, %v2985
        %s2993 = smul.u32 4, %s31
        %p2994 = scmp.lt.s32.totalorder %s2993, 7
        %s2995 = scalar_select %p2994, %s2993, 7
        %s2996 = smul.addr %s2995, 8
        %s2997 = scalar_lea.vmem %s15, %s2996
        // Predicated region
        $region113: #{forward.1} parent=79 // pred_check
          %p2998 = pneg %p369
        $region114: #{forward.1} parent=79 // pred_check_branch
          %3000 = sbr.rel (%p2998) target = $region116
        $region115: #{forward.1} parent=79 // pred_region
          %s3001 = smul.u32 4, %s31
        $region116: #{forward.1} parent=79 // pred_fallthru
          _
      $region80: #{forward.1} parent=5 // pred_fallthru
        _
      %p3002 = scmp.le.s32.totalorder 2, %s26
      // Predicated region
      $region117: #{forward.1} parent=5 // pred_check
        %p3003 = pneg %p3002
      $region118: #{forward.1} parent=5 // pred_check_branch
        %3005 = sbr.rel (%p3003) target = $region120
      $region119: #{forward.1} parent=5 // pred_region
        %s3006 = ssub.s32 %s26, 2
        // Predicated region
        $region121: #{forward.1} parent=119 // pred_check
          %p3007 = pneg %p375
        $region122: #{forward.1} parent=119 // pred_check_branch
          %3009 = sbr.rel (%p3007) target = $region124
        $region123: #{forward.1} parent=119 // pred_region
          %s3010 = smul.u32 4, %s32
          %p3011 = scmp.lt.s32.totalorder %s3010, 7
          %s3012 = scalar_select %p3011, %s3010, 7
          %s3013 = smul.addr %s3012, 8
          %s3014 = scalar_lea.vmem %s15, %s3013
        $region124: #{forward.1} parent=119 // pred_fallthru
          _
      $region120: #{forward.1} parent=5 // pred_fallthru
        _
    $region6: #{forward.1} parent=1 // loop_footer
      %s30 = sadd.s32 1, %s26
    $region7: #{forward.1} parent=1 // loop_footer_branch
      %25 = sbr.rel target = $region3
    $region8: #{forward.1} parent=1 // loop_exit
      _
    %3015 = vsyncpa [#allocation3], 1
    %s3016 = scalar_lea.sflag [#allocation3], 1
    %3017 = vsyncpa %s3016, 1
    %3018 = vsyncpa [#allocation5], 1
    %3019 = vsyncpa [#allocation8], 1
    %3020 = vsyncpa [#allocation11], 1
    %3021 = vsyncpa [#allocation14], 1

</llo_original>
